<compile_context>
chip_gen: v7x
topology: tpu7x:2x2x1
jax: 0.10.0
libtpu: 0.0.40
codegen_flags: <defaults>
</compile_context>

<pallas_src>
import functools

import jax
import jax.numpy as jnp
from jax.experimental import pallas as pl
from jax.experimental.pallas import tpu as pltpu


# ---------------------------------------------------------------------------
# Math shared by the kernel body and the pure-JAX reference (so the reference
# performs the exact same bf16 rounding / f32 accumulation as the kernel).
# ---------------------------------------------------------------------------
def _gelu(x, approx):
    if approx:
        # tanh GELU -> EUP slot (near-free alongside MXU/VALU work).
        return jax.nn.gelu(x, approximate=True)
    xf = x.astype(jnp.float32)
    inv_sqrt2 = jnp.float32(0.7071067811865476)
    return 0.5 * xf * (1.0 + jax.lax.erf(xf * inv_sqrt2))


def _layernorm(x, gamma, beta, eps=1e-5):
    # Two-pass (centered) biased variance, eps=1e-5: matches nn.LayerNorm.
    mu = jnp.mean(x, axis=-1, keepdims=True)
    xc = x - mu
    var = jnp.mean(xc * xc, axis=-1, keepdims=True)
    return xc * jax.lax.rsqrt(var + eps) * gamma + beta


def _ln_gelu(x, gamma, beta, approx, act_dtype, eps=1e-5):
    # LN statistics in f32; affine + GELU in act_dtype (bf16 on v6e/v7x halves
    # VALU passes and removes the explicit cast before the following matmul).
    mu = jnp.mean(x, axis=-1, keepdims=True)
    xc = x - mu
    var = jnp.mean(xc * xc, axis=-1, keepdims=True)
    y = (xc * jax.lax.rsqrt(var + eps)).astype(act_dtype)
    y = y * gamma.astype(act_dtype) + beta.astype(act_dtype)
    return _gelu(y, approx)


def _mm(a, w_bf16):
    # bf16 MXU operands, f32 accumulation.
    return jnp.dot(a.astype(jnp.bfloat16), w_bf16,
                   preferred_element_type=jnp.float32)


def _forward(x, w_in, b_in,
             g1, be1, w1, bb1,
             g2, be2, w2, bb2,
             g3, be3, w3, bb3,
             g4, be4, w4, bb4,
             gf, bef, *, approx_gelu, act_dtype):
    h = _mm(x, w_in) + b_in                                     # fc_in (f32 acc)
    t = _ln_gelu(h, g1, be1, approx_gelu, act_dtype)            # block1 (Dropout=id)
    h = h + _mm(t, w1) + bb1
    t = _ln_gelu(h, g2, be2, approx_gelu, act_dtype)            # block2
    h = h + _mm(t, w2) + bb2
    t = _ln_gelu(h, g3, be3, approx_gelu, act_dtype)            # block3 (no residual)
    z = _mm(t, w3) + bb3
    t = _ln_gelu(z, g4, be4, approx_gelu, act_dtype)            # block4
    z = z + _mm(t, w4) + bb4
    return _layernorm(z, gf, bef)                               # final_norm (f32)


# ---------------------------------------------------------------------------
# Fused kernel: one grid step = one tile of rows through the whole adapter.
# ---------------------------------------------------------------------------
def histo_adapter_kernel(
    x_ref,
    w_in_ref, b_in_ref,
    g1_ref, be1_ref, w1_ref, bb1_ref,
    g2_ref, be2_ref, w2_ref, bb2_ref,
    g3_ref, be3_ref, w3_ref, bb3_ref,
    g4_ref, be4_ref, w4_ref, bb4_ref,
    gf_ref, bef_ref,
    o_ref,
    *, approx_gelu, act_dtype,
):
    out = _forward(
        x_ref[...],
        w_in_ref[...], b_in_ref[...],
        g1_ref[...], be1_ref[...], w1_ref[...], bb1_ref[...],
        g2_ref[...], be2_ref[...], w2_ref[...], bb2_ref[...],
        g3_ref[...], be3_ref[...], w3_ref[...], bb3_ref[...],
        g4_ref[...], be4_ref[...], w4_ref[...], bb4_ref[...],
        gf_ref[...], bef_ref[...],
        approx_gelu=approx_gelu, act_dtype=act_dtype,
    )
    o_ref[...] = out.astype(o_ref.dtype)


# ---------------------------------------------------------------------------
# Wrapper
# ---------------------------------------------------------------------------
_PARAM_ORDER = ("w_in", "b_in",
                "g1", "be1", "w1", "bb1",
                "g2", "be2", "w2", "bb2",
                "g3", "be3", "w3", "bb3",
                "g4", "be4", "w4", "bb4",
                "gf", "bef")
_WEIGHT_KEYS = frozenset(("w_in", "w1", "w2", "w3", "w4"))

_SUB = 16          # row-tile granularity: valid sublane multiple for f32 & bf16
_MIB = 1024 * 1024


def _prep_params(params):
    """Order params for the kernel; matmul weights in bf16, the rest in f32."""
    out = []
    for k in _PARAM_ORDER:
        v = params[k]
        v = v.astype(jnp.bfloat16) if k in _WEIGHT_KEYS else v.astype(jnp.float32)
        out.append(v)
    return tuple(out)


def _round_up(n, m):
    return ((n + m - 1) // m) * m


def _param_spec(shape, single_buffer):
    # Grid-invariant block (constant index_map): single-buffer it so the
    # pipeline does not reserve 2x its VMEM footprint.
    if single_buffer and hasattr(pl, "Buffered"):
        return pl.BlockSpec(shape, lambda i: (0, 0), pipeline_mode=pl.Buffered(1))
    return pl.BlockSpec(shape, lambda i: (0, 0))


def _vmem_ceiling():
    try:
        cap = pltpu.get_tpu_info().vmem_capacity_bytes
    except Exception:
        cap = 64 * _MIB          # conservative (v7x) if the query is unavailable
    # ~75% of physical VMEM: ~96 MiB on 128-MiB parts (v5e/v6e), ~48 MiB on v7x.
    return max(32 * _MIB, int(cap * 0.75))


def histo_adapter(x, params, *, tile_rows=512, approx_gelu=True,
                  act_dtype=jnp.bfloat16, out_dtype=jnp.float32):
    """Fused HistoAdapter forward.  x: (..., input_dim)."""
    lead = x.shape[:-1]
    input_dim = x.shape[-1]
    # Stream rows as bf16: halves input DMA bytes; first matmul is bf16 anyway.
    x2d = x.reshape(-1, input_dim).astype(jnp.bfloat16)
    M = x2d.shape[0]

    args = _prep_params(params)
    inter_dim = params["w_in"].shape[1]
    token_dim = params["w3"].shape[1]

    # Row tile: as large as allowed (default 512), multiple of 16.  When there
    # are enough rows, cap the tile so the grid has >= 2 steps and the
    # "parallel" axis can shard across v7x's two TensorCores.
    Mr = _round_up(M, _SUB)
    tr = min(_round_up(tile_rows, _SUB), Mr)
    if Mr >= 2 * _SUB:
        tr = min(tr, _round_up(pl.cdiv(Mr, 2), _SUB))
    tr = max(tr, _SUB)
    Mp = _round_up(M, tr)
    if Mp != M:
        # Padded rows stay finite through LN (centered variance of zeros) and
        # are sliced off after the call.
        x2d = jnp.pad(x2d, ((0, Mp - M), (0, 0)))
    grid = (Mp // tr,)

    out_itemsize = jnp.dtype(out_dtype).itemsize

    # VMEM budget: resident params (budgeted double-buffered in case the
    # Buffered(1) hint is unavailable), double-buffered x/out tiles, and live
    # f32 intermediates; capped at ~75% of this generation's physical VMEM.
    param_bytes = sum(a.size * a.dtype.itemsize for a in args)
    est = (2 * param_bytes
           + 2 * 2 * tr * input_dim                      # bf16 x, double-buffered
           + 2 * out_itemsize * tr * token_dim           # out tile, double-buffered
           + 4 * tr * (4 * inter_dim + 3 * token_dim))   # f32 intermediates
    vmem_limit = int(min(max(2 * est, 32 * _MIB), _vmem_ceiling()))

    flops = 2 * Mp * (input_dim * inter_dim + 2 * inter_dim * inter_dim
                      + inter_dim * token_dim + token_dim * token_dim)
    if approx_gelu:
        transcendentals = Mp * (3 * inter_dim + token_dim + 6)
    else:
        transcendentals = Mp * 6
    bytes_accessed = (2 * Mp * input_dim + out_itemsize * Mp * token_dim
                      + param_bytes)
    cost = pl.CostEstimate(flops=flops, transcendentals=transcendentals,
                           bytes_accessed=bytes_accessed)

    def _run(single_buffer_params):
        in_specs = [pl.BlockSpec((tr, input_dim), lambda i: (i, 0))]   # streamed rows
        in_specs += [_param_spec(a.shape, single_buffer_params) for a in args]
        out_spec = pl.BlockSpec((tr, token_dim), lambda i: (i, 0))
        fn = pl.pallas_call(
            functools.partial(histo_adapter_kernel,
                              approx_gelu=approx_gelu, act_dtype=act_dtype),
            out_shape=jax.ShapeDtypeStruct((Mp, token_dim), out_dtype),
            grid_spec=pltpu.PrefetchScalarGridSpec(
                num_scalar_prefetch=0,
                grid=grid,
                in_specs=in_specs,
                out_specs=out_spec,
            ),
            compiler_params=pltpu.CompilerParams(
                dimension_semantics=("parallel",),
                vmem_limit_bytes=vmem_limit,
            ),
            cost_estimate=cost,
        )
        return fn(x2d, *args)

    try:
        out2d = _run(True)
    except Exception:
        # Fallback if Buffered(1) single-buffering is unsupported by this JAX.
        out2d = _run(False)

    out2d = out2d[:M]
    return out2d.reshape(*lead, token_dim)


# ---------------------------------------------------------------------------
# Deterministic synthetic parameters (not a checkpoint) + pure-JAX reference.
# ---------------------------------------------------------------------------
def make_params(key, input_dim, inter_dim, token_dim):
    ks = jax.random.split(key, 5)
    scale = 0.02

    def lin(k, din, dout):
        kw, kb = jax.random.split(k)
        w = jax.random.normal(kw, (din, dout), jnp.float32) * scale
        b = jax.random.normal(kb, (1, dout), jnp.float32) * scale
        return w, b

    w_in, b_in = lin(ks[0], input_dim, inter_dim)
    w1, bb1 = lin(ks[1], inter_dim, inter_dim)
    w2, bb2 = lin(ks[2], inter_dim, inter_dim)
    w3, bb3 = lin(ks[3], inter_dim, token_dim)
    w4, bb4 = lin(ks[4], token_dim, token_dim)

    def ln(dim):
        return jnp.ones((1, dim), jnp.float32), jnp.zeros((1, dim), jnp.float32)

    g1, be1 = ln(inter_dim)
    g2, be2 = ln(inter_dim)
    g3, be3 = ln(inter_dim)
    g4, be4 = ln(token_dim)
    gf, bef = ln(token_dim)

    return dict(
        w_in=w_in, b_in=b_in,
        g1=g1, be1=be1, w1=w1, bb1=bb1,
        g2=g2, be2=be2, w2=w2, bb2=bb2,
        g3=g3, be3=be3, w3=w3, bb3=bb3,
        g4=g4, be4=be4, w4=w4, bb4=bb4,
        gf=gf, bef=bef,
    )


def histo_adapter_ref(x, params, *, approx_gelu=True, act_dtype=jnp.bfloat16):
    args = _prep_params(params)
    x2d = x.reshape(-1, x.shape[-1]).astype(jnp.bfloat16)
    out = _forward(x2d, *args, approx_gelu=approx_gelu, act_dtype=act_dtype)
    return out.reshape(*x.shape[:-1], out.shape[-1])


if __name__ == "__main__":
    # Small shapes consistent with the module (x: (batch, seq, input_dim)).
    # Feature dims are 128-lane-aligned.
    batch, seq = 2, 8
    input_dim, inter_dim, token_dim = 128, 256, 128

    key = jax.random.PRNGKey(0)
    kx, kp = jax.random.split(key)
    x = jax.random.normal(kx, (batch, seq, input_dim), jnp.float32)
    params = make_params(kp, input_dim, inter_dim, token_dim)

    out = histo_adapter(x, params)        # tile_rows auto-caps to the 16 rows here
    jax.block_until_ready(out)

    ref = histo_adapter_ref(x, params)
    assert out.shape == (batch, seq, token_dim)
    max_err = float(jnp.max(jnp.abs(out - ref.astype(out.dtype))))
    assert jnp.allclose(out, ref.astype(out.dtype), atol=1e-2, rtol=1e-2), \
        f"mismatch vs reference (max abs err {max_err})"

    print("KERNEL_OK")
</pallas_src>

<mosaic_0001>
module attributes {stable_mosaic.version = 11 : i64} {
  func.func @histo_adapter_kernel(%arg0: i32, %arg1: memref<16x128xbf16, #tpu.memory_space<vmem>>, %arg2: memref<128x256xbf16, #tpu.memory_space<vmem>>, %arg3: memref<1x256xf32, #tpu.memory_space<vmem>>, %arg4: memref<1x256xf32, #tpu.memory_space<vmem>>, %arg5: memref<1x256xf32, #tpu.memory_space<vmem>>, %arg6: memref<256x256xbf16, #tpu.memory_space<vmem>>, %arg7: memref<1x256xf32, #tpu.memory_space<vmem>>, %arg8: memref<1x256xf32, #tpu.memory_space<vmem>>, %arg9: memref<1x256xf32, #tpu.memory_space<vmem>>, %arg10: memref<256x256xbf16, #tpu.memory_space<vmem>>, %arg11: memref<1x256xf32, #tpu.memory_space<vmem>>, %arg12: memref<1x256xf32, #tpu.memory_space<vmem>>, %arg13: memref<1x256xf32, #tpu.memory_space<vmem>>, %arg14: memref<256x128xbf16, #tpu.memory_space<vmem>>, %arg15: memref<1x128xf32, #tpu.memory_space<vmem>>, %arg16: memref<1x128xf32, #tpu.memory_space<vmem>>, %arg17: memref<1x128xf32, #tpu.memory_space<vmem>>, %arg18: memref<128x128xbf16, #tpu.memory_space<vmem>>, %arg19: memref<1x128xf32, #tpu.memory_space<vmem>>, %arg20: memref<1x128xf32, #tpu.memory_space<vmem>>, %arg21: memref<1x128xf32, #tpu.memory_space<vmem>>, %arg22: memref<16x128xf32, #tpu.memory_space<vmem>>) attributes {dimension_semantics = [#tpu.dimension_semantics<parallel>], iteration_bounds = array<i64: 1>, scalar_prefetch = 0 : i64, scratch_operands = 0 : i64, tpu.core_type = #tpu.core_type<tc>, window_params = [{transform_indices = @transform_0, window_bounds = array<i64: 16, 128>}, {pipeline_mode = #tpu.pipeline_mode<synchronous>, transform_indices = @transform_1, window_bounds = array<i64: 128, 256>}, {pipeline_mode = #tpu.pipeline_mode<synchronous>, transform_indices = @transform_2, window_bounds = array<i64: 1, 256>}, {pipeline_mode = #tpu.pipeline_mode<synchronous>, transform_indices = @transform_3, window_bounds = array<i64: 1, 256>}, {pipeline_mode = #tpu.pipeline_mode<synchronous>, transform_indices = @transform_4, window_bounds = array<i64: 1, 256>}, {pipeline_mode = #tpu.pipeline_mode<synchronous>, transform_indices = @transform_5, window_bounds = array<i64: 256, 256>}, {pipeline_mode = #tpu.pipeline_mode<synchronous>, transform_indices = @transform_6, window_bounds = array<i64: 1, 256>}, {pipeline_mode = #tpu.pipeline_mode<synchronous>, transform_indices = @transform_7, window_bounds = array<i64: 1, 256>}, {pipeline_mode = #tpu.pipeline_mode<synchronous>, transform_indices = @transform_8, window_bounds = array<i64: 1, 256>}, {pipeline_mode = #tpu.pipeline_mode<synchronous>, transform_indices = @transform_9, window_bounds = array<i64: 256, 256>}, {pipeline_mode = #tpu.pipeline_mode<synchronous>, transform_indices = @transform_10, window_bounds = array<i64: 1, 256>}, {pipeline_mode = #tpu.pipeline_mode<synchronous>, transform_indices = @transform_11, window_bounds = array<i64: 1, 256>}, {pipeline_mode = #tpu.pipeline_mode<synchronous>, transform_indices = @transform_12, window_bounds = array<i64: 1, 256>}, {pipeline_mode = #tpu.pipeline_mode<synchronous>, transform_indices = @transform_13, window_bounds = array<i64: 256, 128>}, {pipeline_mode = #tpu.pipeline_mode<synchronous>, transform_indices = @transform_14, window_bounds = array<i64: 1, 128>}, {pipeline_mode = #tpu.pipeline_mode<synchronous>, transform_indices = @transform_15, window_bounds = array<i64: 1, 128>}, {pipeline_mode = #tpu.pipeline_mode<synchronous>, transform_indices = @transform_16, window_bounds = array<i64: 1, 128>}, {pipeline_mode = #tpu.pipeline_mode<synchronous>, transform_indices = @transform_17, window_bounds = array<i64: 128, 128>}, {pipeline_mode = #tpu.pipeline_mode<synchronous>, transform_indices = @transform_18, window_bounds = array<i64: 1, 128>}, {pipeline_mode = #tpu.pipeline_mode<synchronous>, transform_indices = @transform_19, window_bounds = array<i64: 1, 128>}, {pipeline_mode = #tpu.pipeline_mode<synchronous>, transform_indices = @transform_20, window_bounds = array<i64: 1, 128>}, {transform_indices = @transform_21, window_bounds = array<i64: 16, 128>}]} {
    %c0 = arith.constant 0 : index
    %c0_0 = arith.constant 0 : index
    %0 = vector.load %arg1[%c0, %c0_0] : memref<16x128xbf16, #tpu.memory_space<vmem>>, vector<16x128xbf16>
    %c0_1 = arith.constant 0 : index
    %c0_2 = arith.constant 0 : index
    %1 = vector.load %arg2[%c0_1, %c0_2] : memref<128x256xbf16, #tpu.memory_space<vmem>>, vector<128x256xbf16>
    %c0_3 = arith.constant 0 : index
    %c0_4 = arith.constant 0 : index
    %2 = vector.load %arg3[%c0_3, %c0_4] : memref<1x256xf32, #tpu.memory_space<vmem>>, vector<1x256xf32>
    %c0_5 = arith.constant 0 : index
    %c0_6 = arith.constant 0 : index
    %3 = vector.load %arg4[%c0_5, %c0_6] : memref<1x256xf32, #tpu.memory_space<vmem>>, vector<1x256xf32>
    %c0_7 = arith.constant 0 : index
    %c0_8 = arith.constant 0 : index
    %4 = vector.load %arg5[%c0_7, %c0_8] : memref<1x256xf32, #tpu.memory_space<vmem>>, vector<1x256xf32>
    %c0_9 = arith.constant 0 : index
    %c0_10 = arith.constant 0 : index
    %5 = vector.load %arg6[%c0_9, %c0_10] : memref<256x256xbf16, #tpu.memory_space<vmem>>, vector<256x256xbf16>
    %c0_11 = arith.constant 0 : index
    %c0_12 = arith.constant 0 : index
    %6 = vector.load %arg7[%c0_11, %c0_12] : memref<1x256xf32, #tpu.memory_space<vmem>>, vector<1x256xf32>
    %c0_13 = arith.constant 0 : index
    %c0_14 = arith.constant 0 : index
    %7 = vector.load %arg8[%c0_13, %c0_14] : memref<1x256xf32, #tpu.memory_space<vmem>>, vector<1x256xf32>
    %c0_15 = arith.constant 0 : index
    %c0_16 = arith.constant 0 : index
    %8 = vector.load %arg9[%c0_15, %c0_16] : memref<1x256xf32, #tpu.memory_space<vmem>>, vector<1x256xf32>
    %c0_17 = arith.constant 0 : index
    %c0_18 = arith.constant 0 : index
    %9 = vector.load %arg10[%c0_17, %c0_18] : memref<256x256xbf16, #tpu.memory_space<vmem>>, vector<256x256xbf16>
    %c0_19 = arith.constant 0 : index
    %c0_20 = arith.constant 0 : index
    %10 = vector.load %arg11[%c0_19, %c0_20] : memref<1x256xf32, #tpu.memory_space<vmem>>, vector<1x256xf32>
    %c0_21 = arith.constant 0 : index
    %c0_22 = arith.constant 0 : index
    %11 = vector.load %arg12[%c0_21, %c0_22] : memref<1x256xf32, #tpu.memory_space<vmem>>, vector<1x256xf32>
    %c0_23 = arith.constant 0 : index
    %c0_24 = arith.constant 0 : index
    %12 = vector.load %arg13[%c0_23, %c0_24] : memref<1x256xf32, #tpu.memory_space<vmem>>, vector<1x256xf32>
    %c0_25 = arith.constant 0 : index
    %c0_26 = arith.constant 0 : index
    %13 = vector.load %arg14[%c0_25, %c0_26] : memref<256x128xbf16, #tpu.memory_space<vmem>>, vector<256x128xbf16>
    %c0_27 = arith.constant 0 : index
    %c0_28 = arith.constant 0 : index
    %14 = vector.load %arg15[%c0_27, %c0_28] : memref<1x128xf32, #tpu.memory_space<vmem>>, vector<1x128xf32>
    %c0_29 = arith.constant 0 : index
    %c0_30 = arith.constant 0 : index
    %15 = vector.load %arg16[%c0_29, %c0_30] : memref<1x128xf32, #tpu.memory_space<vmem>>, vector<1x128xf32>
    %c0_31 = arith.constant 0 : index
    %c0_32 = arith.constant 0 : index
    %16 = vector.load %arg17[%c0_31, %c0_32] : memref<1x128xf32, #tpu.memory_space<vmem>>, vector<1x128xf32>
    %c0_33 = arith.constant 0 : index
    %c0_34 = arith.constant 0 : index
    %17 = vector.load %arg18[%c0_33, %c0_34] : memref<128x128xbf16, #tpu.memory_space<vmem>>, vector<128x128xbf16>
    %c0_35 = arith.constant 0 : index
    %c0_36 = arith.constant 0 : index
    %18 = vector.load %arg19[%c0_35, %c0_36] : memref<1x128xf32, #tpu.memory_space<vmem>>, vector<1x128xf32>
    %c0_37 = arith.constant 0 : index
    %c0_38 = arith.constant 0 : index
    %19 = vector.load %arg20[%c0_37, %c0_38] : memref<1x128xf32, #tpu.memory_space<vmem>>, vector<1x128xf32>
    %c0_39 = arith.constant 0 : index
    %c0_40 = arith.constant 0 : index
    %20 = vector.load %arg21[%c0_39, %c0_40] : memref<1x128xf32, #tpu.memory_space<vmem>>, vector<1x128xf32>
    %cst = arith.constant dense<0.000000e+00> : vector<16x256xf32>
    %21 = tpu.matmul %0, %1, %cst {dimension_numbers = #tpu.dot_dimension_numbers<[1], [0], [0], [1], [0, 0, 1, 1], [], []>} : vector<16x128xbf16>, vector<128x256xbf16>, vector<16x256xf32> -> vector<16x256xf32>
    %22 = vector.broadcast %2 : vector<1x256xf32> to vector<16x256xf32>
    %23 = arith.addf %21, %22 : vector<16x256xf32>
    %cst_41 = arith.constant dense<0.000000e+00> : vector<16xf32>
    %24 = vector.multi_reduction <add>, %23, %cst_41 [1] : vector<16x256xf32> to vector<16xf32>
    %25 = vector.shape_cast %24 : vector<16xf32> to vector<16x1xf32>
    %cst_42 = arith.constant 2.560000e+02 : f32
    %26 = vector.broadcast %cst_42 : f32 to vector<16x1xf32>
    %27 = arith.divf %25, %26 : vector<16x1xf32>
    %28 = vector.broadcast %27 : vector<16x1xf32> to vector<16x256xf32>
    %29 = arith.subf %23, %28 : vector<16x256xf32>
    %30 = arith.mulf %29, %29 : vector<16x256xf32>
    %cst_43 = arith.constant dense<0.000000e+00> : vector<16xf32>
    %31 = vector.multi_reduction <add>, %30, %cst_43 [1] : vector<16x256xf32> to vector<16xf32>
    %32 = vector.shape_cast %31 : vector<16xf32> to vector<16x1xf32>
    %cst_44 = arith.constant 2.560000e+02 : f32
    %33 = vector.broadcast %cst_44 : f32 to vector<16x1xf32>
    %34 = arith.divf %32, %33 : vector<16x1xf32>
    %cst_45 = arith.constant 9.99999974E-6 : f32
    %35 = vector.broadcast %cst_45 : f32 to vector<16x1xf32>
    %36 = arith.addf %34, %35 : vector<16x1xf32>
    %37 = math.rsqrt %36 : vector<16x1xf32>
    %38 = vector.broadcast %37 : vector<16x1xf32> to vector<16x256xf32>
    %39 = arith.mulf %29, %38 : vector<16x256xf32>
    %40 = arith.truncf %39 : vector<16x256xf32> to vector<16x256xbf16>
    %41 = arith.truncf %3 : vector<1x256xf32> to vector<1x256xbf16>
    %42 = vector.broadcast %41 : vector<1x256xbf16> to vector<16x256xbf16>
    %43 = arith.mulf %40, %42 : vector<16x256xbf16>
    %44 = arith.truncf %4 : vector<1x256xf32> to vector<1x256xbf16>
    %45 = vector.broadcast %44 : vector<1x256xbf16> to vector<16x256xbf16>
    %46 = arith.addf %43, %45 : vector<16x256xbf16>
    %47 = arith.mulf %46, %46 : vector<16x256xbf16>
    %48 = arith.mulf %46, %47 : vector<16x256xbf16>
    %cst_46 = arith.constant 4.467770e-02 : bf16
    %49 = vector.broadcast %cst_46 : bf16 to vector<16x256xbf16>
    %50 = arith.mulf %49, %48 : vector<16x256xbf16>
    %51 = arith.addf %46, %50 : vector<16x256xbf16>
    %cst_47 = arith.constant 7.968750e-01 : bf16
    %52 = vector.broadcast %cst_47 : bf16 to vector<16x256xbf16>
    %53 = arith.mulf %52, %51 : vector<16x256xbf16>
    %54 = math.tanh %53 : vector<16x256xbf16>
    %cst_48 = arith.constant 1.000000e+00 : bf16
    %55 = vector.broadcast %cst_48 : bf16 to vector<16x256xbf16>
    %56 = arith.addf %55, %54 : vector<16x256xbf16>
    %cst_49 = arith.constant 5.000000e-01 : bf16
    %57 = vector.broadcast %cst_49 : bf16 to vector<16x256xbf16>
    %58 = arith.mulf %57, %56 : vector<16x256xbf16>
    %59 = arith.mulf %46, %58 : vector<16x256xbf16>
    %cst_50 = arith.constant dense<0.000000e+00> : vector<16x256xf32>
    %60 = tpu.matmul %59, %5, %cst_50 {dimension_numbers = #tpu.dot_dimension_numbers<[1], [0], [0], [1], [0, 0, 1, 1], [], []>} : vector<16x256xbf16>, vector<256x256xbf16>, vector<16x256xf32> -> vector<16x256xf32>
    %61 = arith.addf %23, %60 : vector<16x256xf32>
    %62 = vector.broadcast %6 : vector<1x256xf32> to vector<16x256xf32>
    %63 = arith.addf %61, %62 : vector<16x256xf32>
    %cst_51 = arith.constant dense<0.000000e+00> : vector<16xf32>
    %64 = vector.multi_reduction <add>, %63, %cst_51 [1] : vector<16x256xf32> to vector<16xf32>
    %65 = vector.shape_cast %64 : vector<16xf32> to vector<16x1xf32>
    %cst_52 = arith.constant 2.560000e+02 : f32
    %66 = vector.broadcast %cst_52 : f32 to vector<16x1xf32>
    %67 = arith.divf %65, %66 : vector<16x1xf32>
    %68 = vector.broadcast %67 : vector<16x1xf32> to vector<16x256xf32>
    %69 = arith.subf %63, %68 : vector<16x256xf32>
    %70 = arith.mulf %69, %69 : vector<16x256xf32>
    %cst_53 = arith.constant dense<0.000000e+00> : vector<16xf32>
    %71 = vector.multi_reduction <add>, %70, %cst_53 [1] : vector<16x256xf32> to vector<16xf32>
    %72 = vector.shape_cast %71 : vector<16xf32> to vector<16x1xf32>
    %cst_54 = arith.constant 2.560000e+02 : f32
    %73 = vector.broadcast %cst_54 : f32 to vector<16x1xf32>
    %74 = arith.divf %72, %73 : vector<16x1xf32>
    %cst_55 = arith.constant 9.99999974E-6 : f32
    %75 = vector.broadcast %cst_55 : f32 to vector<16x1xf32>
    %76 = arith.addf %74, %75 : vector<16x1xf32>
    %77 = math.rsqrt %76 : vector<16x1xf32>
    %78 = vector.broadcast %77 : vector<16x1xf32> to vector<16x256xf32>
    %79 = arith.mulf %69, %78 : vector<16x256xf32>
    %80 = arith.truncf %79 : vector<16x256xf32> to vector<16x256xbf16>
    %81 = arith.truncf %7 : vector<1x256xf32> to vector<1x256xbf16>
    %82 = vector.broadcast %81 : vector<1x256xbf16> to vector<16x256xbf16>
    %83 = arith.mulf %80, %82 : vector<16x256xbf16>
    %84 = arith.truncf %8 : vector<1x256xf32> to vector<1x256xbf16>
    %85 = vector.broadcast %84 : vector<1x256xbf16> to vector<16x256xbf16>
    %86 = arith.addf %83, %85 : vector<16x256xbf16>
    %87 = arith.mulf %86, %86 : vector<16x256xbf16>
    %88 = arith.mulf %86, %87 : vector<16x256xbf16>
    %cst_56 = arith.constant 4.467770e-02 : bf16
    %89 = vector.broadcast %cst_56 : bf16 to vector<16x256xbf16>
    %90 = arith.mulf %89, %88 : vector<16x256xbf16>
    %91 = arith.addf %86, %90 : vector<16x256xbf16>
    %cst_57 = arith.constant 7.968750e-01 : bf16
    %92 = vector.broadcast %cst_57 : bf16 to vector<16x256xbf16>
    %93 = arith.mulf %92, %91 : vector<16x256xbf16>
    %94 = math.tanh %93 : vector<16x256xbf16>
    %cst_58 = arith.constant 1.000000e+00 : bf16
    %95 = vector.broadcast %cst_58 : bf16 to vector<16x256xbf16>
    %96 = arith.addf %95, %94 : vector<16x256xbf16>
    %cst_59 = arith.constant 5.000000e-01 : bf16
    %97 = vector.broadcast %cst_59 : bf16 to vector<16x256xbf16>
    %98 = arith.mulf %97, %96 : vector<16x256xbf16>
    %99 = arith.mulf %86, %98 : vector<16x256xbf16>
    %cst_60 = arith.constant dense<0.000000e+00> : vector<16x256xf32>
    %100 = tpu.matmul %99, %9, %cst_60 {dimension_numbers = #tpu.dot_dimension_numbers<[1], [0], [0], [1], [0, 0, 1, 1], [], []>} : vector<16x256xbf16>, vector<256x256xbf16>, vector<16x256xf32> -> vector<16x256xf32>
    %101 = arith.addf %63, %100 : vector<16x256xf32>
    %102 = vector.broadcast %10 : vector<1x256xf32> to vector<16x256xf32>
    %103 = arith.addf %101, %102 : vector<16x256xf32>
    %cst_61 = arith.constant dense<0.000000e+00> : vector<16xf32>
    %104 = vector.multi_reduction <add>, %103, %cst_61 [1] : vector<16x256xf32> to vector<16xf32>
    %105 = vector.shape_cast %104 : vector<16xf32> to vector<16x1xf32>
    %cst_62 = arith.constant 2.560000e+02 : f32
    %106 = vector.broadcast %cst_62 : f32 to vector<16x1xf32>
    %107 = arith.divf %105, %106 : vector<16x1xf32>
    %108 = vector.broadcast %107 : vector<16x1xf32> to vector<16x256xf32>
    %109 = arith.subf %103, %108 : vector<16x256xf32>
    %110 = arith.mulf %109, %109 : vector<16x256xf32>
    %cst_63 = arith.constant dense<0.000000e+00> : vector<16xf32>
    %111 = vector.multi_reduction <add>, %110, %cst_63 [1] : vector<16x256xf32> to vector<16xf32>
    %112 = vector.shape_cast %111 : vector<16xf32> to vector<16x1xf32>
    %cst_64 = arith.constant 2.560000e+02 : f32
    %113 = vector.broadcast %cst_64 : f32 to vector<16x1xf32>
    %114 = arith.divf %112, %113 : vector<16x1xf32>
    %cst_65 = arith.constant 9.99999974E-6 : f32
    %115 = vector.broadcast %cst_65 : f32 to vector<16x1xf32>
    %116 = arith.addf %114, %115 : vector<16x1xf32>
    %117 = math.rsqrt %116 : vector<16x1xf32>
    %118 = vector.broadcast %117 : vector<16x1xf32> to vector<16x256xf32>
    %119 = arith.mulf %109, %118 : vector<16x256xf32>
    %120 = arith.truncf %119 : vector<16x256xf32> to vector<16x256xbf16>
    %121 = arith.truncf %11 : vector<1x256xf32> to vector<1x256xbf16>
    %122 = vector.broadcast %121 : vector<1x256xbf16> to vector<16x256xbf16>
    %123 = arith.mulf %120, %122 : vector<16x256xbf16>
    %124 = arith.truncf %12 : vector<1x256xf32> to vector<1x256xbf16>
    %125 = vector.broadcast %124 : vector<1x256xbf16> to vector<16x256xbf16>
    %126 = arith.addf %123, %125 : vector<16x256xbf16>
    %127 = arith.mulf %126, %126 : vector<16x256xbf16>
    %128 = arith.mulf %126, %127 : vector<16x256xbf16>
    %cst_66 = arith.constant 4.467770e-02 : bf16
    %129 = vector.broadcast %cst_66 : bf16 to vector<16x256xbf16>
    %130 = arith.mulf %129, %128 : vector<16x256xbf16>
    %131 = arith.addf %126, %130 : vector<16x256xbf16>
    %cst_67 = arith.constant 7.968750e-01 : bf16
    %132 = vector.broadcast %cst_67 : bf16 to vector<16x256xbf16>
    %133 = arith.mulf %132, %131 : vector<16x256xbf16>
    %134 = math.tanh %133 : vector<16x256xbf16>
    %cst_68 = arith.constant 1.000000e+00 : bf16
    %135 = vector.broadcast %cst_68 : bf16 to vector<16x256xbf16>
    %136 = arith.addf %135, %134 : vector<16x256xbf16>
    %cst_69 = arith.constant 5.000000e-01 : bf16
    %137 = vector.broadcast %cst_69 : bf16 to vector<16x256xbf16>
    %138 = arith.mulf %137, %136 : vector<16x256xbf16>
    %139 = arith.mulf %126, %138 : vector<16x256xbf16>
    %cst_70 = arith.constant dense<0.000000e+00> : vector<16x128xf32>
    %140 = tpu.matmul %139, %13, %cst_70 {dimension_numbers = #tpu.dot_dimension_numbers<[1], [0], [0], [1], [0, 0, 1, 1], [], []>} : vector<16x256xbf16>, vector<256x128xbf16>, vector<16x128xf32> -> vector<16x128xf32>
    %141 = vector.broadcast %14 : vector<1x128xf32> to vector<16x128xf32>
    %142 = arith.addf %140, %141 : vector<16x128xf32>
    %cst_71 = arith.constant dense<0.000000e+00> : vector<16xf32>
    %143 = vector.multi_reduction <add>, %142, %cst_71 [1] : vector<16x128xf32> to vector<16xf32>
    %144 = vector.shape_cast %143 : vector<16xf32> to vector<16x1xf32>
    %cst_72 = arith.constant 1.280000e+02 : f32
    %145 = vector.broadcast %cst_72 : f32 to vector<16x1xf32>
    %146 = arith.divf %144, %145 : vector<16x1xf32>
    %147 = vector.broadcast %146 : vector<16x1xf32> to vector<16x128xf32>
    %148 = arith.subf %142, %147 : vector<16x128xf32>
    %149 = arith.mulf %148, %148 : vector<16x128xf32>
    %cst_73 = arith.constant dense<0.000000e+00> : vector<16xf32>
    %150 = vector.multi_reduction <add>, %149, %cst_73 [1] : vector<16x128xf32> to vector<16xf32>
    %151 = vector.shape_cast %150 : vector<16xf32> to vector<16x1xf32>
    %cst_74 = arith.constant 1.280000e+02 : f32
    %152 = vector.broadcast %cst_74 : f32 to vector<16x1xf32>
    %153 = arith.divf %151, %152 : vector<16x1xf32>
    %cst_75 = arith.constant 9.99999974E-6 : f32
    %154 = vector.broadcast %cst_75 : f32 to vector<16x1xf32>
    %155 = arith.addf %153, %154 : vector<16x1xf32>
    %156 = math.rsqrt %155 : vector<16x1xf32>
    %157 = vector.broadcast %156 : vector<16x1xf32> to vector<16x128xf32>
    %158 = arith.mulf %148, %157 : vector<16x128xf32>
    %159 = arith.truncf %158 : vector<16x128xf32> to vector<16x128xbf16>
    %160 = arith.truncf %15 : vector<1x128xf32> to vector<1x128xbf16>
    %161 = vector.broadcast %160 : vector<1x128xbf16> to vector<16x128xbf16>
    %162 = arith.mulf %159, %161 : vector<16x128xbf16>
    %163 = arith.truncf %16 : vector<1x128xf32> to vector<1x128xbf16>
    %164 = vector.broadcast %163 : vector<1x128xbf16> to vector<16x128xbf16>
    %165 = arith.addf %162, %164 : vector<16x128xbf16>
    %166 = arith.mulf %165, %165 : vector<16x128xbf16>
    %167 = arith.mulf %165, %166 : vector<16x128xbf16>
    %cst_76 = arith.constant 4.467770e-02 : bf16
    %168 = vector.broadcast %cst_76 : bf16 to vector<16x128xbf16>
    %169 = arith.mulf %168, %167 : vector<16x128xbf16>
    %170 = arith.addf %165, %169 : vector<16x128xbf16>
    %cst_77 = arith.constant 7.968750e-01 : bf16
    %171 = vector.broadcast %cst_77 : bf16 to vector<16x128xbf16>
    %172 = arith.mulf %171, %170 : vector<16x128xbf16>
    %173 = math.tanh %172 : vector<16x128xbf16>
    %cst_78 = arith.constant 1.000000e+00 : bf16
    %174 = vector.broadcast %cst_78 : bf16 to vector<16x128xbf16>
    %175 = arith.addf %174, %173 : vector<16x128xbf16>
    %cst_79 = arith.constant 5.000000e-01 : bf16
    %176 = vector.broadcast %cst_79 : bf16 to vector<16x128xbf16>
    %177 = arith.mulf %176, %175 : vector<16x128xbf16>
    %178 = arith.mulf %165, %177 : vector<16x128xbf16>
    %cst_80 = arith.constant dense<0.000000e+00> : vector<16x128xf32>
    %179 = tpu.matmul %178, %17, %cst_80 {dimension_numbers = #tpu.dot_dimension_numbers<[1], [0], [0], [1], [0, 0, 1, 1], [], []>} : vector<16x128xbf16>, vector<128x128xbf16>, vector<16x128xf32> -> vector<16x128xf32>
    %180 = arith.addf %142, %179 : vector<16x128xf32>
    %181 = vector.broadcast %18 : vector<1x128xf32> to vector<16x128xf32>
    %182 = arith.addf %180, %181 : vector<16x128xf32>
    %cst_81 = arith.constant dense<0.000000e+00> : vector<16xf32>
    %183 = vector.multi_reduction <add>, %182, %cst_81 [1] : vector<16x128xf32> to vector<16xf32>
    %184 = vector.shape_cast %183 : vector<16xf32> to vector<16x1xf32>
    %cst_82 = arith.constant 1.280000e+02 : f32
    %185 = vector.broadcast %cst_82 : f32 to vector<16x1xf32>
    %186 = arith.divf %184, %185 : vector<16x1xf32>
    %187 = vector.broadcast %186 : vector<16x1xf32> to vector<16x128xf32>
    %188 = arith.subf %182, %187 : vector<16x128xf32>
    %189 = arith.mulf %188, %188 : vector<16x128xf32>
    %cst_83 = arith.constant dense<0.000000e+00> : vector<16xf32>
    %190 = vector.multi_reduction <add>, %189, %cst_83 [1] : vector<16x128xf32> to vector<16xf32>
    %191 = vector.shape_cast %190 : vector<16xf32> to vector<16x1xf32>
    %cst_84 = arith.constant 1.280000e+02 : f32
    %192 = vector.broadcast %cst_84 : f32 to vector<16x1xf32>
    %193 = arith.divf %191, %192 : vector<16x1xf32>
    %cst_85 = arith.constant 9.99999974E-6 : f32
    %194 = vector.broadcast %cst_85 : f32 to vector<16x1xf32>
    %195 = arith.addf %193, %194 : vector<16x1xf32>
    %196 = math.rsqrt %195 : vector<16x1xf32>
    %197 = vector.broadcast %196 : vector<16x1xf32> to vector<16x128xf32>
    %198 = arith.mulf %188, %197 : vector<16x128xf32>
    %199 = vector.broadcast %19 : vector<1x128xf32> to vector<16x128xf32>
    %200 = arith.mulf %198, %199 : vector<16x128xf32>
    %201 = vector.broadcast %20 : vector<1x128xf32> to vector<16x128xf32>
    %202 = arith.addf %200, %201 : vector<16x128xf32>
    %c0_86 = arith.constant 0 : index
    %c0_87 = arith.constant 0 : index
    %203 = vector.load %arg22[%c0_86, %c0_87] : memref<16x128xf32, #tpu.memory_space<vmem>>, vector<16x128xf32>
    tpu.vector_store %arg22[%c0_86, %c0_87], %202 {strides = array<i32>} : memref<16x128xf32, #tpu.memory_space<vmem>>, vector<16x128xf32>,
    return
  }
  func.func @transform_0(%arg0: i32) -> (i32, i32) {
    %c0_i32 = arith.constant 0 : i32
    %c0_i32_0 = arith.constant 0 : i32
    return %arg0, %c0_i32 : i32, i32
  }
  func.func @transform_1(%arg0: i32) -> (i32, i32) {
    %c0_i32 = arith.constant 0 : i32
    %c0_i32_0 = arith.constant 0 : i32
    %c0_i32_1 = arith.constant 0 : i32
    return %c0_i32, %c0_i32_0 : i32, i32
  }
  func.func @transform_2(%arg0: i32) -> (i32, i32) {
    %c0_i32 = arith.constant 0 : i32
    %c0_i32_0 = arith.constant 0 : i32
    %c0_i32_1 = arith.constant 0 : i32
    return %c0_i32, %c0_i32_0 : i32, i32
  }
  func.func @transform_3(%arg0: i32) -> (i32, i32) {
    %c0_i32 = arith.constant 0 : i32
    %c0_i32_0 = arith.constant 0 : i32
    %c0_i32_1 = arith.constant 0 : i32
    return %c0_i32, %c0_i32_0 : i32, i32
  }
  func.func @transform_4(%arg0: i32) -> (i32, i32) {
    %c0_i32 = arith.constant 0 : i32
    %c0_i32_0 = arith.constant 0 : i32
    %c0_i32_1 = arith.constant 0 : i32
    return %c0_i32, %c0_i32_0 : i32, i32
  }
  func.func @transform_5(%arg0: i32) -> (i32, i32) {
    %c0_i32 = arith.constant 0 : i32
    %c0_i32_0 = arith.constant 0 : i32
    %c0_i32_1 = arith.constant 0 : i32
    return %c0_i32, %c0_i32_0 : i32, i32
  }
  func.func @transform_6(%arg0: i32) -> (i32, i32) {
    %c0_i32 = arith.constant 0 : i32
    %c0_i32_0 = arith.constant 0 : i32
    %c0_i32_1 = arith.constant 0 : i32
    return %c0_i32, %c0_i32_0 : i32, i32
  }
  func.func @transform_7(%arg0: i32) -> (i32, i32) {
    %c0_i32 = arith.constant 0 : i32
    %c0_i32_0 = arith.constant 0 : i32
    %c0_i32_1 = arith.constant 0 : i32
    return %c0_i32, %c0_i32_0 : i32, i32
  }
  func.func @transform_8(%arg0: i32) -> (i32, i32) {
    %c0_i32 = arith.constant 0 : i32
    %c0_i32_0 = arith.constant 0 : i32
    %c0_i32_1 = arith.constant 0 : i32
    return %c0_i32, %c0_i32_0 : i32, i32
  }
  func.func @transform_9(%arg0: i32) -> (i32, i32) {
    %c0_i32 = arith.constant 0 : i32
    %c0_i32_0 = arith.constant 0 : i32
    %c0_i32_1 = arith.constant 0 : i32
    return %c0_i32, %c0_i32_0 : i32, i32
  }
  func.func @transform_10(%arg0: i32) -> (i32, i32) {
    %c0_i32 = arith.constant 0 : i32
    %c0_i32_0 = arith.constant 0 : i32
    %c0_i32_1 = arith.constant 0 : i32
    return %c0_i32, %c0_i32_0 : i32, i32
  }
  func.func @transform_11(%arg0: i32) -> (i32, i32) {
    %c0_i32 = arith.constant 0 : i32
    %c0_i32_0 = arith.constant 0 : i32
    %c0_i32_1 = arith.constant 0 : i32
    return %c0_i32, %c0_i32_0 : i32, i32
  }
  func.func @transform_12(%arg0: i32) -> (i32, i32) {
    %c0_i32 = arith.constant 0 : i32
    %c0_i32_0 = arith.constant 0 : i32
    %c0_i32_1 = arith.constant 0 : i32
    return %c0_i32, %c0_i32_0 : i32, i32
  }
  func.func @transform_13(%arg0: i32) -> (i32, i32) {
    %c0_i32 = arith.constant 0 : i32
    %c0_i32_0 = arith.constant 0 : i32
    %c0_i32_1 = arith.constant 0 : i32
    return %c0_i32, %c0_i32_0 : i32, i32
  }
  func.func @transform_14(%arg0: i32) -> (i32, i32) {
    %c0_i32 = arith.constant 0 : i32
    %c0_i32_0 = arith.constant 0 : i32
    %c0_i32_1 = arith.constant 0 : i32
    return %c0_i32, %c0_i32_0 : i32, i32
  }
  func.func @transform_15(%arg0: i32) -> (i32, i32) {
    %c0_i32 = arith.constant 0 : i32
    %c0_i32_0 = arith.constant 0 : i32
    %c0_i32_1 = arith.constant 0 : i32
    return %c0_i32, %c0_i32_0 : i32, i32
  }
  func.func @transform_16(%arg0: i32) -> (i32, i32) {
    %c0_i32 = arith.constant 0 : i32
    %c0_i32_0 = arith.constant 0 : i32
    %c0_i32_1 = arith.constant 0 : i32
    return %c0_i32, %c0_i32_0 : i32, i32
  }
  func.func @transform_17(%arg0: i32) -> (i32, i32) {
    %c0_i32 = arith.constant 0 : i32
    %c0_i32_0 = arith.constant 0 : i32
    %c0_i32_1 = arith.constant 0 : i32
    return %c0_i32, %c0_i32_0 : i32, i32
  }
  func.func @transform_18(%arg0: i32) -> (i32, i32) {
    %c0_i32 = arith.constant 0 : i32
    %c0_i32_0 = arith.constant 0 : i32
    %c0_i32_1 = arith.constant 0 : i32
    return %c0_i32, %c0_i32_0 : i32, i32
  }
  func.func @transform_19(%arg0: i32) -> (i32, i32) {
    %c0_i32 = arith.constant 0 : i32
    %c0_i32_0 = arith.constant 0 : i32
    %c0_i32_1 = arith.constant 0 : i32
    return %c0_i32, %c0_i32_0 : i32, i32
  }
  func.func @transform_20(%arg0: i32) -> (i32, i32) {
    %c0_i32 = arith.constant 0 : i32
    %c0_i32_0 = arith.constant 0 : i32
    %c0_i32_1 = arith.constant 0 : i32
    return %c0_i32, %c0_i32_0 : i32, i32
  }
  func.func @transform_21(%arg0: i32) -> (i32, i32) {
    %c0_i32 = arith.constant 0 : i32
    %c0_i32_0 = arith.constant 0 : i32
    return %arg0, %c0_i32 : i32, i32
  }
}

module attributes {stable_mosaic.version = 11 : i64} {
  func.func @histo_adapter_kernel(%arg0: i32, %arg1: memref<16x128xbf16, #tpu.memory_space<vmem>>, %arg2: memref<128x256xbf16, #tpu.memory_space<vmem>>, %arg3: memref<1x256xf32, #tpu.memory_space<vmem>>, %arg4: memref<1x256xf32, #tpu.memory_space<vmem>>, %arg5: memref<1x256xf32, #tpu.memory_space<vmem>>, %arg6: memref<256x256xbf16, #tpu.memory_space<vmem>>, %arg7: memref<1x256xf32, #tpu.memory_space<vmem>>, %arg8: memref<1x256xf32, #tpu.memory_space<vmem>>, %arg9: memref<1x256xf32, #tpu.memory_space<vmem>>, %arg10: memref<256x256xbf16, #tpu.memory_space<vmem>>, %arg11: memref<1x256xf32, #tpu.memory_space<vmem>>, %arg12: memref<1x256xf32, #tpu.memory_space<vmem>>, %arg13: memref<1x256xf32, #tpu.memory_space<vmem>>, %arg14: memref<256x128xbf16, #tpu.memory_space<vmem>>, %arg15: memref<1x128xf32, #tpu.memory_space<vmem>>, %arg16: memref<1x128xf32, #tpu.memory_space<vmem>>, %arg17: memref<1x128xf32, #tpu.memory_space<vmem>>, %arg18: memref<128x128xbf16, #tpu.memory_space<vmem>>, %arg19: memref<1x128xf32, #tpu.memory_space<vmem>>, %arg20: memref<1x128xf32, #tpu.memory_space<vmem>>, %arg21: memref<1x128xf32, #tpu.memory_space<vmem>>, %arg22: memref<16x128xf32, #tpu.memory_space<vmem>>) attributes {dimension_semantics = [#tpu.dimension_semantics<parallel>], iteration_bounds = array<i64: 1>, scalar_prefetch = 0 : i64, scratch_operands = 0 : i64, tpu.core_type = #tpu.core_type<tc>, window_params = [{transform_indices = @transform_0, window_bounds = array<i64: 16, 128>}, {pipeline_mode = #tpu.pipeline_mode<synchronous>, transform_indices = @transform_1, window_bounds = array<i64: 128, 256>}, {pipeline_mode = #tpu.pipeline_mode<synchronous>, transform_indices = @transform_2, window_bounds = array<i64: 1, 256>}, {pipeline_mode = #tpu.pipeline_mode<synchronous>, transform_indices = @transform_3, window_bounds = array<i64: 1, 256>}, {pipeline_mode = #tpu.pipeline_mode<synchronous>, transform_indices = @transform_4, window_bounds = array<i64: 1, 256>}, {pipeline_mode = #tpu.pipeline_mode<synchronous>, transform_indices = @transform_5, window_bounds = array<i64: 256, 256>}, {pipeline_mode = #tpu.pipeline_mode<synchronous>, transform_indices = @transform_6, window_bounds = array<i64: 1, 256>}, {pipeline_mode = #tpu.pipeline_mode<synchronous>, transform_indices = @transform_7, window_bounds = array<i64: 1, 256>}, {pipeline_mode = #tpu.pipeline_mode<synchronous>, transform_indices = @transform_8, window_bounds = array<i64: 1, 256>}, {pipeline_mode = #tpu.pipeline_mode<synchronous>, transform_indices = @transform_9, window_bounds = array<i64: 256, 256>}, {pipeline_mode = #tpu.pipeline_mode<synchronous>, transform_indices = @transform_10, window_bounds = array<i64: 1, 256>}, {pipeline_mode = #tpu.pipeline_mode<synchronous>, transform_indices = @transform_11, window_bounds = array<i64: 1, 256>}, {pipeline_mode = #tpu.pipeline_mode<synchronous>, transform_indices = @transform_12, window_bounds = array<i64: 1, 256>}, {pipeline_mode = #tpu.pipeline_mode<synchronous>, transform_indices = @transform_13, window_bounds = array<i64: 256, 128>}, {pipeline_mode = #tpu.pipeline_mode<synchronous>, transform_indices = @transform_14, window_bounds = array<i64: 1, 128>}, {pipeline_mode = #tpu.pipeline_mode<synchronous>, transform_indices = @transform_15, window_bounds = array<i64: 1, 128>}, {pipeline_mode = #tpu.pipeline_mode<synchronous>, transform_indices = @transform_16, window_bounds = array<i64: 1, 128>}, {pipeline_mode = #tpu.pipeline_mode<synchronous>, transform_indices = @transform_17, window_bounds = array<i64: 128, 128>}, {pipeline_mode = #tpu.pipeline_mode<synchronous>, transform_indices = @transform_18, window_bounds = array<i64: 1, 128>}, {pipeline_mode = #tpu.pipeline_mode<synchronous>, transform_indices = @transform_19, window_bounds = array<i64: 1, 128>}, {pipeline_mode = #tpu.pipeline_mode<synchronous>, transform_indices = @transform_20, window_bounds = array<i64: 1, 128>}, {transform_indices = @transform_21, window_bounds = array<i64: 16, 128>}]} {
    %c0 = arith.constant 0 : index
    %c0_0 = arith.constant 0 : index
    %0 = vector.load %arg1[%c0, %c0_0] : memref<16x128xbf16, #tpu.memory_space<vmem>>, vector<16x128xbf16>
    %c0_1 = arith.constant 0 : index
    %c0_2 = arith.constant 0 : index
    %1 = vector.load %arg2[%c0_1, %c0_2] : memref<128x256xbf16, #tpu.memory_space<vmem>>, vector<128x256xbf16>
    %c0_3 = arith.constant 0 : index
    %c0_4 = arith.constant 0 : index
    %2 = vector.load %arg3[%c0_3, %c0_4] : memref<1x256xf32, #tpu.memory_space<vmem>>, vector<1x256xf32>
    %c0_5 = arith.constant 0 : index
    %c0_6 = arith.constant 0 : index
    %3 = vector.load %arg4[%c0_5, %c0_6] : memref<1x256xf32, #tpu.memory_space<vmem>>, vector<1x256xf32>
    %c0_7 = arith.constant 0 : index
    %c0_8 = arith.constant 0 : index
    %4 = vector.load %arg5[%c0_7, %c0_8] : memref<1x256xf32, #tpu.memory_space<vmem>>, vector<1x256xf32>
    %c0_9 = arith.constant 0 : index
    %c0_10 = arith.constant 0 : index
    %5 = vector.load %arg6[%c0_9, %c0_10] : memref<256x256xbf16, #tpu.memory_space<vmem>>, vector<256x256xbf16>
    %c0_11 = arith.constant 0 : index
    %c0_12 = arith.constant 0 : index
    %6 = vector.load %arg7[%c0_11, %c0_12] : memref<1x256xf32, #tpu.memory_space<vmem>>, vector<1x256xf32>
    %c0_13 = arith.constant 0 : index
    %c0_14 = arith.constant 0 : index
    %7 = vector.load %arg8[%c0_13, %c0_14] : memref<1x256xf32, #tpu.memory_space<vmem>>, vector<1x256xf32>
    %c0_15 = arith.constant 0 : index
    %c0_16 = arith.constant 0 : index
    %8 = vector.load %arg9[%c0_15, %c0_16] : memref<1x256xf32, #tpu.memory_space<vmem>>, vector<1x256xf32>
    %c0_17 = arith.constant 0 : index
    %c0_18 = arith.constant 0 : index
    %9 = vector.load %arg10[%c0_17, %c0_18] : memref<256x256xbf16, #tpu.memory_space<vmem>>, vector<256x256xbf16>
    %c0_19 = arith.constant 0 : index
    %c0_20 = arith.constant 0 : index
    %10 = vector.load %arg11[%c0_19, %c0_20] : memref<1x256xf32, #tpu.memory_space<vmem>>, vector<1x256xf32>
    %c0_21 = arith.constant 0 : index
    %c0_22 = arith.constant 0 : index
    %11 = vector.load %arg12[%c0_21, %c0_22] : memref<1x256xf32, #tpu.memory_space<vmem>>, vector<1x256xf32>
    %c0_23 = arith.constant 0 : index
    %c0_24 = arith.constant 0 : index
    %12 = vector.load %arg13[%c0_23, %c0_24] : memref<1x256xf32, #tpu.memory_space<vmem>>, vector<1x256xf32>
    %c0_25 = arith.constant 0 : index
    %c0_26 = arith.constant 0 : index
    %13 = vector.load %arg14[%c0_25, %c0_26] : memref<256x128xbf16, #tpu.memory_space<vmem>>, vector<256x128xbf16>
    %c0_27 = arith.constant 0 : index
    %c0_28 = arith.constant 0 : index
    %14 = vector.load %arg15[%c0_27, %c0_28] : memref<1x128xf32, #tpu.memory_space<vmem>>, vector<1x128xf32>
    %c0_29 = arith.constant 0 : index
    %c0_30 = arith.constant 0 : index
    %15 = vector.load %arg16[%c0_29, %c0_30] : memref<1x128xf32, #tpu.memory_space<vmem>>, vector<1x128xf32>
    %c0_31 = arith.constant 0 : index
    %c0_32 = arith.constant 0 : index
    %16 = vector.load %arg17[%c0_31, %c0_32] : memref<1x128xf32, #tpu.memory_space<vmem>>, vector<1x128xf32>
    %c0_33 = arith.constant 0 : index
    %c0_34 = arith.constant 0 : index
    %17 = vector.load %arg18[%c0_33, %c0_34] : memref<128x128xbf16, #tpu.memory_space<vmem>>, vector<128x128xbf16>
    %c0_35 = arith.constant 0 : index
    %c0_36 = arith.constant 0 : index
    %18 = vector.load %arg19[%c0_35, %c0_36] : memref<1x128xf32, #tpu.memory_space<vmem>>, vector<1x128xf32>
    %c0_37 = arith.constant 0 : index
    %c0_38 = arith.constant 0 : index
    %19 = vector.load %arg20[%c0_37, %c0_38] : memref<1x128xf32, #tpu.memory_space<vmem>>, vector<1x128xf32>
    %c0_39 = arith.constant 0 : index
    %c0_40 = arith.constant 0 : index
    %20 = vector.load %arg21[%c0_39, %c0_40] : memref<1x128xf32, #tpu.memory_space<vmem>>, vector<1x128xf32>
    %cst = arith.constant dense<0.000000e+00> : vector<16x256xf32>
    %21 = tpu.matmul %0, %1, %cst {dimension_numbers = #tpu.dot_dimension_numbers<[1], [0], [0], [1], [0, 0, 1, 1], [], []>} : vector<16x128xbf16>, vector<128x256xbf16>, vector<16x256xf32> -> vector<16x256xf32>
    %22 = vector.broadcast %2 : vector<1x256xf32> to vector<16x256xf32>
    %23 = arith.addf %21, %22 : vector<16x256xf32>
    %cst_41 = arith.constant dense<0.000000e+00> : vector<16xf32>
    %24 = vector.multi_reduction <add>, %23, %cst_41 [1] : vector<16x256xf32> to vector<16xf32>
    %25 = vector.shape_cast %24 : vector<16xf32> to vector<16x1xf32>
    %cst_42 = arith.constant 2.560000e+02 : f32
    %26 = vector.broadcast %cst_42 : f32 to vector<16x1xf32>
    %27 = arith.divf %25, %26 : vector<16x1xf32>
    %28 = vector.broadcast %27 : vector<16x1xf32> to vector<16x256xf32>
    %29 = arith.subf %23, %28 : vector<16x256xf32>
    %30 = arith.mulf %29, %29 : vector<16x256xf32>
    %cst_43 = arith.constant dense<0.000000e+00> : vector<16xf32>
    %31 = vector.multi_reduction <add>, %30, %cst_43 [1] : vector<16x256xf32> to vector<16xf32>
    %32 = vector.shape_cast %31 : vector<16xf32> to vector<16x1xf32>
    %cst_44 = arith.constant 2.560000e+02 : f32
    %33 = vector.broadcast %cst_44 : f32 to vector<16x1xf32>
    %34 = arith.divf %32, %33 : vector<16x1xf32>
    %cst_45 = arith.constant 9.99999974E-6 : f32
    %35 = vector.broadcast %cst_45 : f32 to vector<16x1xf32>
    %36 = arith.addf %34, %35 : vector<16x1xf32>
    %37 = math.rsqrt %36 : vector<16x1xf32>
    %38 = vector.broadcast %37 : vector<16x1xf32> to vector<16x256xf32>
    %39 = arith.mulf %29, %38 : vector<16x256xf32>
    %40 = arith.truncf %39 : vector<16x256xf32> to vector<16x256xbf16>
    %41 = arith.truncf %3 : vector<1x256xf32> to vector<1x256xbf16>
    %42 = vector.broadcast %41 : vector<1x256xbf16> to vector<16x256xbf16>
    %43 = arith.mulf %40, %42 : vector<16x256xbf16>
    %44 = arith.truncf %4 : vector<1x256xf32> to vector<1x256xbf16>
    %45 = vector.broadcast %44 : vector<1x256xbf16> to vector<16x256xbf16>
    %46 = arith.addf %43, %45 : vector<16x256xbf16>
    %47 = arith.mulf %46, %46 : vector<16x256xbf16>
    %48 = arith.mulf %46, %47 : vector<16x256xbf16>
    %cst_46 = arith.constant 4.467770e-02 : bf16
    %49 = vector.broadcast %cst_46 : bf16 to vector<16x256xbf16>
    %50 = arith.mulf %49, %48 : vector<16x256xbf16>
    %51 = arith.addf %46, %50 : vector<16x256xbf16>
    %cst_47 = arith.constant 7.968750e-01 : bf16
    %52 = vector.broadcast %cst_47 : bf16 to vector<16x256xbf16>
    %53 = arith.mulf %52, %51 : vector<16x256xbf16>
    %54 = math.tanh %53 : vector<16x256xbf16>
    %cst_48 = arith.constant 1.000000e+00 : bf16
    %55 = vector.broadcast %cst_48 : bf16 to vector<16x256xbf16>
    %56 = arith.addf %55, %54 : vector<16x256xbf16>
    %cst_49 = arith.constant 5.000000e-01 : bf16
    %57 = vector.broadcast %cst_49 : bf16 to vector<16x256xbf16>
    %58 = arith.mulf %57, %56 : vector<16x256xbf16>
    %59 = arith.mulf %46, %58 : vector<16x256xbf16>
    %cst_50 = arith.constant dense<0.000000e+00> : vector<16x256xf32>
    %60 = tpu.matmul %59, %5, %cst_50 {dimension_numbers = #tpu.dot_dimension_numbers<[1], [0], [0], [1], [0, 0, 1, 1], [], []>} : vector<16x256xbf16>, vector<256x256xbf16>, vector<16x256xf32> -> vector<16x256xf32>
    %61 = arith.addf %23, %60 : vector<16x256xf32>
    %62 = vector.broadcast %6 : vector<1x256xf32> to vector<16x256xf32>
    %63 = arith.addf %61, %62 : vector<16x256xf32>
    %cst_51 = arith.constant dense<0.000000e+00> : vector<16xf32>
    %64 = vector.multi_reduction <add>, %63, %cst_51 [1] : vector<16x256xf32> to vector<16xf32>
    %65 = vector.shape_cast %64 : vector<16xf32> to vector<16x1xf32>
    %cst_52 = arith.constant 2.560000e+02 : f32
    %66 = vector.broadcast %cst_52 : f32 to vector<16x1xf32>
    %67 = arith.divf %65, %66 : vector<16x1xf32>
    %68 = vector.broadcast %67 : vector<16x1xf32> to vector<16x256xf32>
    %69 = arith.subf %63, %68 : vector<16x256xf32>
    %70 = arith.mulf %69, %69 : vector<16x256xf32>
    %cst_53 = arith.constant dense<0.000000e+00> : vector<16xf32>
    %71 = vector.multi_reduction <add>, %70, %cst_53 [1] : vector<16x256xf32> to vector<16xf32>
    %72 = vector.shape_cast %71 : vector<16xf32> to vector<16x1xf32>
    %cst_54 = arith.constant 2.560000e+02 : f32
    %73 = vector.broadcast %cst_54 : f32 to vector<16x1xf32>
    %74 = arith.divf %72, %73 : vector<16x1xf32>
    %cst_55 = arith.constant 9.99999974E-6 : f32
    %75 = vector.broadcast %cst_55 : f32 to vector<16x1xf32>
    %76 = arith.addf %74, %75 : vector<16x1xf32>
    %77 = math.rsqrt %76 : vector<16x1xf32>
    %78 = vector.broadcast %77 : vector<16x1xf32> to vector<16x256xf32>
    %79 = arith.mulf %69, %78 : vector<16x256xf32>
    %80 = arith.truncf %79 : vector<16x256xf32> to vector<16x256xbf16>
    %81 = arith.truncf %7 : vector<1x256xf32> to vector<1x256xbf16>
    %82 = vector.broadcast %81 : vector<1x256xbf16> to vector<16x256xbf16>
    %83 = arith.mulf %80, %82 : vector<16x256xbf16>
    %84 = arith.truncf %8 : vector<1x256xf32> to vector<1x256xbf16>
    %85 = vector.broadcast %84 : vector<1x256xbf16> to vector<16x256xbf16>
    %86 = arith.addf %83, %85 : vector<16x256xbf16>
    %87 = arith.mulf %86, %86 : vector<16x256xbf16>
    %88 = arith.mulf %86, %87 : vector<16x256xbf16>
    %cst_56 = arith.constant 4.467770e-02 : bf16
    %89 = vector.broadcast %cst_56 : bf16 to vector<16x256xbf16>
    %90 = arith.mulf %89, %88 : vector<16x256xbf16>
    %91 = arith.addf %86, %90 : vector<16x256xbf16>
    %cst_57 = arith.constant 7.968750e-01 : bf16
    %92 = vector.broadcast %cst_57 : bf16 to vector<16x256xbf16>
    %93 = arith.mulf %92, %91 : vector<16x256xbf16>
    %94 = math.tanh %93 : vector<16x256xbf16>
    %cst_58 = arith.constant 1.000000e+00 : bf16
    %95 = vector.broadcast %cst_58 : bf16 to vector<16x256xbf16>
    %96 = arith.addf %95, %94 : vector<16x256xbf16>
    %cst_59 = arith.constant 5.000000e-01 : bf16
    %97 = vector.broadcast %cst_59 : bf16 to vector<16x256xbf16>
    %98 = arith.mulf %97, %96 : vector<16x256xbf16>
    %99 = arith.mulf %86, %98 : vector<16x256xbf16>
    %cst_60 = arith.constant dense<0.000000e+00> : vector<16x256xf32>
    %100 = tpu.matmul %99, %9, %cst_60 {dimension_numbers = #tpu.dot_dimension_numbers<[1], [0], [0], [1], [0, 0, 1, 1], [], []>} : vector<16x256xbf16>, vector<256x256xbf16>, vector<16x256xf32> -> vector<16x256xf32>
    %101 = arith.addf %63, %100 : vector<16x256xf32>
    %102 = vector.broadcast %10 : vector<1x256xf32> to vector<16x256xf32>
    %103 = arith.addf %101, %102 : vector<16x256xf32>
    %cst_61 = arith.constant dense<0.000000e+00> : vector<16xf32>
    %104 = vector.multi_reduction <add>, %103, %cst_61 [1] : vector<16x256xf32> to vector<16xf32>
    %105 = vector.shape_cast %104 : vector<16xf32> to vector<16x1xf32>
    %cst_62 = arith.constant 2.560000e+02 : f32
    %106 = vector.broadcast %cst_62 : f32 to vector<16x1xf32>
    %107 = arith.divf %105, %106 : vector<16x1xf32>
    %108 = vector.broadcast %107 : vector<16x1xf32> to vector<16x256xf32>
    %109 = arith.subf %103, %108 : vector<16x256xf32>
    %110 = arith.mulf %109, %109 : vector<16x256xf32>
    %cst_63 = arith.constant dense<0.000000e+00> : vector<16xf32>
    %111 = vector.multi_reduction <add>, %110, %cst_63 [1] : vector<16x256xf32> to vector<16xf32>
    %112 = vector.shape_cast %111 : vector<16xf32> to vector<16x1xf32>
    %cst_64 = arith.constant 2.560000e+02 : f32
    %113 = vector.broadcast %cst_64 : f32 to vector<16x1xf32>
    %114 = arith.divf %112, %113 : vector<16x1xf32>
    %cst_65 = arith.constant 9.99999974E-6 : f32
    %115 = vector.broadcast %cst_65 : f32 to vector<16x1xf32>
    %116 = arith.addf %114, %115 : vector<16x1xf32>
    %117 = math.rsqrt %116 : vector<16x1xf32>
    %118 = vector.broadcast %117 : vector<16x1xf32> to vector<16x256xf32>
    %119 = arith.mulf %109, %118 : vector<16x256xf32>
    %120 = arith.truncf %119 : vector<16x256xf32> to vector<16x256xbf16>
    %121 = arith.truncf %11 : vector<1x256xf32> to vector<1x256xbf16>
    %122 = vector.broadcast %121 : vector<1x256xbf16> to vector<16x256xbf16>
    %123 = arith.mulf %120, %122 : vector<16x256xbf16>
    %124 = arith.truncf %12 : vector<1x256xf32> to vector<1x256xbf16>
    %125 = vector.broadcast %124 : vector<1x256xbf16> to vector<16x256xbf16>
    %126 = arith.addf %123, %125 : vector<16x256xbf16>
    %127 = arith.mulf %126, %126 : vector<16x256xbf16>
    %128 = arith.mulf %126, %127 : vector<16x256xbf16>
    %cst_66 = arith.constant 4.467770e-02 : bf16
    %129 = vector.broadcast %cst_66 : bf16 to vector<16x256xbf16>
    %130 = arith.mulf %129, %128 : vector<16x256xbf16>
    %131 = arith.addf %126, %130 : vector<16x256xbf16>
    %cst_67 = arith.constant 7.968750e-01 : bf16
    %132 = vector.broadcast %cst_67 : bf16 to vector<16x256xbf16>
    %133 = arith.mulf %132, %131 : vector<16x256xbf16>
    %134 = math.tanh %133 : vector<16x256xbf16>
    %cst_68 = arith.constant 1.000000e+00 : bf16
    %135 = vector.broadcast %cst_68 : bf16 to vector<16x256xbf16>
    %136 = arith.addf %135, %134 : vector<16x256xbf16>
    %cst_69 = arith.constant 5.000000e-01 : bf16
    %137 = vector.broadcast %cst_69 : bf16 to vector<16x256xbf16>
    %138 = arith.mulf %137, %136 : vector<16x256xbf16>
    %139 = arith.mulf %126, %138 : vector<16x256xbf16>
    %cst_70 = arith.constant dense<0.000000e+00> : vector<16x128xf32>
    %140 = tpu.matmul %139, %13, %cst_70 {dimension_numbers = #tpu.dot_dimension_numbers<[1], [0], [0], [1], [0, 0, 1, 1], [], []>} : vector<16x256xbf16>, vector<256x128xbf16>, vector<16x128xf32> -> vector<16x128xf32>
    %141 = vector.broadcast %14 : vector<1x128xf32> to vector<16x128xf32>
    %142 = arith.addf %140, %141 : vector<16x128xf32>
    %cst_71 = arith.constant dense<0.000000e+00> : vector<16xf32>
    %143 = vector.multi_reduction <add>, %142, %cst_71 [1] : vector<16x128xf32> to vector<16xf32>
    %144 = vector.shape_cast %143 : vector<16xf32> to vector<16x1xf32>
    %cst_72 = arith.constant 1.280000e+02 : f32
    %145 = vector.broadcast %cst_72 : f32 to vector<16x1xf32>
    %146 = arith.divf %144, %145 : vector<16x1xf32>
    %147 = vector.broadcast %146 : vector<16x1xf32> to vector<16x128xf32>
    %148 = arith.subf %142, %147 : vector<16x128xf32>
    %149 = arith.mulf %148, %148 : vector<16x128xf32>
    %cst_73 = arith.constant dense<0.000000e+00> : vector<16xf32>
    %150 = vector.multi_reduction <add>, %149, %cst_73 [1] : vector<16x128xf32> to vector<16xf32>
    %151 = vector.shape_cast %150 : vector<16xf32> to vector<16x1xf32>
    %cst_74 = arith.constant 1.280000e+02 : f32
    %152 = vector.broadcast %cst_74 : f32 to vector<16x1xf32>
    %153 = arith.divf %151, %152 : vector<16x1xf32>
    %cst_75 = arith.constant 9.99999974E-6 : f32
    %154 = vector.broadcast %cst_75 : f32 to vector<16x1xf32>
    %155 = arith.addf %153, %154 : vector<16x1xf32>
    %156 = math.rsqrt %155 : vector<16x1xf32>
    %157 = vector.broadcast %156 : vector<16x1xf32> to vector<16x128xf32>
    %158 = arith.mulf %148, %157 : vector<16x128xf32>
    %159 = arith.truncf %158 : vector<16x128xf32> to vector<16x128xbf16>
    %160 = arith.truncf %15 : vector<1x128xf32> to vector<1x128xbf16>
    %161 = vector.broadcast %160 : vector<1x128xbf16> to vector<16x128xbf16>
    %162 = arith.mulf %159, %161 : vector<16x128xbf16>
    %163 = arith.truncf %16 : vector<1x128xf32> to vector<1x128xbf16>
    %164 = vector.broadcast %163 : vector<1x128xbf16> to vector<16x128xbf16>
    %165 = arith.addf %162, %164 : vector<16x128xbf16>
    %166 = arith.mulf %165, %165 : vector<16x128xbf16>
    %167 = arith.mulf %165, %166 : vector<16x128xbf16>
    %cst_76 = arith.constant 4.467770e-02 : bf16
    %168 = vector.broadcast %cst_76 : bf16 to vector<16x128xbf16>
    %169 = arith.mulf %168, %167 : vector<16x128xbf16>
    %170 = arith.addf %165, %169 : vector<16x128xbf16>
    %cst_77 = arith.constant 7.968750e-01 : bf16
    %171 = vector.broadcast %cst_77 : bf16 to vector<16x128xbf16>
    %172 = arith.mulf %171, %170 : vector<16x128xbf16>
    %173 = math.tanh %172 : vector<16x128xbf16>
    %cst_78 = arith.constant 1.000000e+00 : bf16
    %174 = vector.broadcast %cst_78 : bf16 to vector<16x128xbf16>
    %175 = arith.addf %174, %173 : vector<16x128xbf16>
    %cst_79 = arith.constant 5.000000e-01 : bf16
    %176 = vector.broadcast %cst_79 : bf16 to vector<16x128xbf16>
    %177 = arith.mulf %176, %175 : vector<16x128xbf16>
    %178 = arith.mulf %165, %177 : vector<16x128xbf16>
    %cst_80 = arith.constant dense<0.000000e+00> : vector<16x128xf32>
    %179 = tpu.matmul %178, %17, %cst_80 {dimension_numbers = #tpu.dot_dimension_numbers<[1], [0], [0], [1], [0, 0, 1, 1], [], []>} : vector<16x128xbf16>, vector<128x128xbf16>, vector<16x128xf32> -> vector<16x128xf32>
    %180 = arith.addf %142, %179 : vector<16x128xf32>
    %181 = vector.broadcast %18 : vector<1x128xf32> to vector<16x128xf32>
    %182 = arith.addf %180, %181 : vector<16x128xf32>
    %cst_81 = arith.constant dense<0.000000e+00> : vector<16xf32>
    %183 = vector.multi_reduction <add>, %182, %cst_81 [1] : vector<16x128xf32> to vector<16xf32>
    %184 = vector.shape_cast %183 : vector<16xf32> to vector<16x1xf32>
    %cst_82 = arith.constant 1.280000e+02 : f32
    %185 = vector.broadcast %cst_82 : f32 to vector<16x1xf32>
    %186 = arith.divf %184, %185 : vector<16x1xf32>
    %187 = vector.broadcast %186 : vector<16x1xf32> to vector<16x128xf32>
    %188 = arith.subf %182, %187 : vector<16x128xf32>
    %189 = arith.mulf %188, %188 : vector<16x128xf32>
    %cst_83 = arith.constant dense<0.000000e+00> : vector<16xf32>
    %190 = vector.multi_reduction <add>, %189, %cst_83 [1] : vector<16x128xf32> to vector<16xf32>
    %191 = vector.shape_cast %190 : vector<16xf32> to vector<16x1xf32>
    %cst_84 = arith.constant 1.280000e+02 : f32
    %192 = vector.broadcast %cst_84 : f32 to vector<16x1xf32>
    %193 = arith.divf %191, %192 : vector<16x1xf32>
    %cst_85 = arith.constant 9.99999974E-6 : f32
    %194 = vector.broadcast %cst_85 : f32 to vector<16x1xf32>
    %195 = arith.addf %193, %194 : vector<16x1xf32>
    %196 = math.rsqrt %195 : vector<16x1xf32>
    %197 = vector.broadcast %196 : vector<16x1xf32> to vector<16x128xf32>
    %198 = arith.mulf %188, %197 : vector<16x128xf32>
    %199 = vector.broadcast %19 : vector<1x128xf32> to vector<16x128xf32>
    %200 = arith.mulf %198, %199 : vector<16x128xf32>
    %201 = vector.broadcast %20 : vector<1x128xf32> to vector<16x128xf32>
    %202 = arith.addf %200, %201 : vector<16x128xf32>
    %c0_86 = arith.constant 0 : index
    %c0_87 = arith.constant 0 : index
    %203 = vector.load %arg22[%c0_86, %c0_87] : memref<16x128xf32, #tpu.memory_space<vmem>>, vector<16x128xf32>
    tpu.vector_store %arg22[%c0_86, %c0_87], %202 {strides = array<i32>} : memref<16x128xf32, #tpu.memory_space<vmem>>, vector<16x128xf32>,
    return
  }
  func.func @transform_0(%arg0: i32) -> (i32, i32) {
    %c0_i32 = arith.constant 0 : i32
    %c0_i32_0 = arith.constant 0 : i32
    return %arg0, %c0_i32 : i32, i32
  }
  func.func @transform_1(%arg0: i32) -> (i32, i32) {
    %c0_i32 = arith.constant 0 : i32
    %c0_i32_0 = arith.constant 0 : i32
    %c0_i32_1 = arith.constant 0 : i32
    return %c0_i32, %c0_i32_0 : i32, i32
  }
  func.func @transform_2(%arg0: i32) -> (i32, i32) {
    %c0_i32 = arith.constant 0 : i32
    %c0_i32_0 = arith.constant 0 : i32
    %c0_i32_1 = arith.constant 0 : i32
    return %c0_i32, %c0_i32_0 : i32, i32
  }
  func.func @transform_3(%arg0: i32) -> (i32, i32) {
    %c0_i32 = arith.constant 0 : i32
    %c0_i32_0 = arith.constant 0 : i32
    %c0_i32_1 = arith.constant 0 : i32
    return %c0_i32, %c0_i32_0 : i32, i32
  }
  func.func @transform_4(%arg0: i32) -> (i32, i32) {
    %c0_i32 = arith.constant 0 : i32
    %c0_i32_0 = arith.constant 0 : i32
    %c0_i32_1 = arith.constant 0 : i32
    return %c0_i32, %c0_i32_0 : i32, i32
  }
  func.func @transform_5(%arg0: i32) -> (i32, i32) {
    %c0_i32 = arith.constant 0 : i32
    %c0_i32_0 = arith.constant 0 : i32
    %c0_i32_1 = arith.constant 0 : i32
    return %c0_i32, %c0_i32_0 : i32, i32
  }
  func.func @transform_6(%arg0: i32) -> (i32, i32) {
    %c0_i32 = arith.constant 0 : i32
    %c0_i32_0 = arith.constant 0 : i32
    %c0_i32_1 = arith.constant 0 : i32
    return %c0_i32, %c0_i32_0 : i32, i32
  }
  func.func @transform_7(%arg0: i32) -> (i32, i32) {
    %c0_i32 = arith.constant 0 : i32
    %c0_i32_0 = arith.constant 0 : i32
    %c0_i32_1 = arith.constant 0 : i32
    return %c0_i32, %c0_i32_0 : i32, i32
  }
  func.func @transform_8(%arg0: i32) -> (i32, i32) {
    %c0_i32 = arith.constant 0 : i32
    %c0_i32_0 = arith.constant 0 : i32
    %c0_i32_1 = arith.constant 0 : i32
    return %c0_i32, %c0_i32_0 : i32, i32
  }
  func.func @transform_9(%arg0: i32) -> (i32, i32) {
    %c0_i32 = arith.constant 0 : i32
    %c0_i32_0 = arith.constant 0 : i32
    %c0_i32_1 = arith.constant 0 : i32
    return %c0_i32, %c0_i32_0 : i32, i32
  }
  func.func @transform_10(%arg0: i32) -> (i32, i32) {
    %c0_i32 = arith.constant 0 : i32
    %c0_i32_0 = arith.constant 0 : i32
    %c0_i32_1 = arith.constant 0 : i32
    return %c0_i32, %c0_i32_0 : i32, i32
  }
  func.func @transform_11(%arg0: i32) -> (i32, i32) {
    %c0_i32 = arith.constant 0 : i32
    %c0_i32_0 = arith.constant 0 : i32
    %c0_i32_1 = arith.constant 0 : i32
    return %c0_i32, %c0_i32_0 : i32, i32
  }
  func.func @transform_12(%arg0: i32) -> (i32, i32) {
    %c0_i32 = arith.constant 0 : i32
    %c0_i32_0 = arith.constant 0 : i32
    %c0_i32_1 = arith.constant 0 : i32
    return %c0_i32, %c0_i32_0 : i32, i32
  }
  func.func @transform_13(%arg0: i32) -> (i32, i32) {
    %c0_i32 = arith.constant 0 : i32
    %c0_i32_0 = arith.constant 0 : i32
    %c0_i32_1 = arith.constant 0 : i32
    return %c0_i32, %c0_i32_0 : i32, i32
  }
  func.func @transform_14(%arg0: i32) -> (i32, i32) {
    %c0_i32 = arith.constant 0 : i32
    %c0_i32_0 = arith.constant 0 : i32
    %c0_i32_1 = arith.constant 0 : i32
    return %c0_i32, %c0_i32_0 : i32, i32
  }
  func.func @transform_15(%arg0: i32) -> (i32, i32) {
    %c0_i32 = arith.constant 0 : i32
    %c0_i32_0 = arith.constant 0 : i32
    %c0_i32_1 = arith.constant 0 : i32
    return %c0_i32, %c0_i32_0 : i32, i32
  }
  func.func @transform_16(%arg0: i32) -> (i32, i32) {
    %c0_i32 = arith.constant 0 : i32
    %c0_i32_0 = arith.constant 0 : i32
    %c0_i32_1 = arith.constant 0 : i32
    return %c0_i32, %c0_i32_0 : i32, i32
  }
  func.func @transform_17(%arg0: i32) -> (i32, i32) {
    %c0_i32 = arith.constant 0 : i32
    %c0_i32_0 = arith.constant 0 : i32
    %c0_i32_1 = arith.constant 0 : i32
    return %c0_i32, %c0_i32_0 : i32, i32
  }
  func.func @transform_18(%arg0: i32) -> (i32, i32) {
    %c0_i32 = arith.constant 0 : i32
    %c0_i32_0 = arith.constant 0 : i32
    %c0_i32_1 = arith.constant 0 : i32
    return %c0_i32, %c0_i32_0 : i32, i32
  }
  func.func @transform_19(%arg0: i32) -> (i32, i32) {
    %c0_i32 = arith.constant 0 : i32
    %c0_i32_0 = arith.constant 0 : i32
    %c0_i32_1 = arith.constant 0 : i32
    return %c0_i32, %c0_i32_0 : i32, i32
  }
  func.func @transform_20(%arg0: i32) -> (i32, i32) {
    %c0_i32 = arith.constant 0 : i32
    %c0_i32_0 = arith.constant 0 : i32
    %c0_i32_1 = arith.constant 0 : i32
    return %c0_i32, %c0_i32_0 : i32, i32
  }
  func.func @transform_21(%arg0: i32) -> (i32, i32) {
    %c0_i32 = arith.constant 0 : i32
    %c0_i32_0 = arith.constant 0 : i32
    return %arg0, %c0_i32 : i32, i32
  }
}

</mosaic_0001>

<llo_original>
// kernel: tpu_custom_call.1
$region0: #{tpu_custom_call.1}
  #allocation0 [shape = 'u32[]', space=smem, size = 0x4, offset = 0x4, fixed_abs, tag = 'smem constant byte address 0x4 - core index']
  #allocation1 [shape = 'u32[144,128]{1,0:T(1,128)}', space=vmem, size = 0x12000, scoped, tag = 'internal scratch']
  %s0 = inlined_call_operand.hbm [shape: bf16[16,128], index: 0, kind: input, shape index: {}]
  %s1 = inlined_call_operand.hbm [shape: bf16[128,256], index: 1, kind: input, shape index: {}]
  %s2 = inlined_call_operand.hbm [shape: f32[1,256], index: 2, kind: input, shape index: {}]
  %s3 = inlined_call_operand.hbm [shape: f32[1,256], index: 3, kind: input, shape index: {}]
  %s4 = inlined_call_operand.hbm [shape: f32[1,256], index: 4, kind: input, shape index: {}]
  %s5 = inlined_call_operand.hbm [shape: bf16[256,256], index: 5, kind: input, shape index: {}]
  %s6 = inlined_call_operand.hbm [shape: f32[1,256], index: 6, kind: input, shape index: {}]
  %s7 = inlined_call_operand.hbm [shape: f32[1,256], index: 7, kind: input, shape index: {}]
  %s8 = inlined_call_operand.hbm [shape: f32[1,256], index: 8, kind: input, shape index: {}]
  %s9 = inlined_call_operand.hbm [shape: bf16[256,256], index: 9, kind: input, shape index: {}]
  %s10 = inlined_call_operand.hbm [shape: f32[1,256], index: 10, kind: input, shape index: {}]
  %s11 = inlined_call_operand.hbm [shape: f32[1,256], index: 11, kind: input, shape index: {}]
  %s12 = inlined_call_operand.hbm [shape: f32[1,256], index: 12, kind: input, shape index: {}]
  %s13 = inlined_call_operand.hbm [shape: bf16[256,128], index: 13, kind: input, shape index: {}]
  %s14 = inlined_call_operand.hbm [shape: f32[1,128], index: 14, kind: input, shape index: {}]
  %s15 = inlined_call_operand.hbm [shape: f32[1,128], index: 15, kind: input, shape index: {}]
  %s16 = inlined_call_operand.hbm [shape: f32[1,128], index: 16, kind: input, shape index: {}]
  %s17 = inlined_call_operand.vmem [shape: bf16[128,128], index: 17, kind: input, shape index: {}]
  %s18 = inlined_call_operand.vmem [shape: f32[1,128], index: 18, kind: input, shape index: {}]
  %s19 = inlined_call_operand.vmem [shape: f32[1,128], index: 19, kind: input, shape index: {}]
  %s20 = inlined_call_operand.vmem [shape: f32[1,128], index: 20, kind: input, shape index: {}]
  %s21 = inlined_call_operand.hbm [shape: f32[16,128], index: 21, kind: output, shape index: {}]
  %s22 = sld [smem:[#allocation0]]
  $region162: #{tpu_custom_call.1} parent=0
    _
  %s24 = ssub.s32 1, %s22
  %s25 = scalar_select 0, %s24, %s22
  $region1: #{tpu_custom_call.1} parent=0
    #allocation2 [shape = 'u8[4096]{0}', space=vmem, size = 0x1000, scoped, tag = 'input window, operand 0, single buffered']
    #allocation3 [shape = 's32[1]{0}', space=sflag, size = 0x4, scoped, tag = 'scoped memory for tpu_custom_call.1']
    #allocation4 [shape = 's32[1]{0}', space=sflag, size = 0x4, scoped, tag = 'scoped memory for tpu_custom_call.1']
    #allocation5 [shape = 'u8[65536]{0}', space=vmem, size = 0x10000, scoped, tag = 'input window, operand 1, single buffered']
    #allocation6 [shape = 's32[1]{0}', space=sflag, size = 0x4, scoped, tag = 'scoped memory for tpu_custom_call.1']
    #allocation7 [shape = 'u8[1024]{0}', space=vmem, size = 0x400, scoped, tag = 'input window, operand 2, single buffered']
    #allocation8 [shape = 'u8[1024]{0}', space=vmem, size = 0x400, scoped, tag = 'input window, operand 3, single buffered']
    #allocation9 [shape = 's32[1]{0}', space=sflag, size = 0x4, scoped, tag = 'scoped memory for tpu_custom_call.1']
    #allocation10 [shape = 'u8[1024]{0}', space=vmem, size = 0x400, scoped, tag = 'input window, operand 4, single buffered']
    #allocation11 [shape = 'u8[131072]{0}', space=vmem, size = 0x20000, scoped, tag = 'input window, operand 5, single buffered']
    #allocation12 [shape = 's32[1]{0}', space=sflag, size = 0x4, scoped, tag = 'scoped memory for tpu_custom_call.1']
    #allocation13 [shape = 'u8[1024]{0}', space=vmem, size = 0x400, scoped, tag = 'input window, operand 6, single buffered']
    #allocation14 [shape = 'u8[1024]{0}', space=vmem, size = 0x400, scoped, tag = 'input window, operand 7, single buffered']
    #allocation15 [shape = 's32[1]{0}', space=sflag, size = 0x4, scoped, tag = 'scoped memory for tpu_custom_call.1']
    #allocation16 [shape = 'u8[1024]{0}', space=vmem, size = 0x400, scoped, tag = 'input window, operand 8, single buffered']
    #allocation17 [shape = 'u8[131072]{0}', space=vmem, size = 0x20000, scoped, tag = 'input window, operand 9, single buffered']
    #allocation18 [shape = 's32[1]{0}', space=sflag, size = 0x4, scoped, tag = 'scoped memory for tpu_custom_call.1']
    #allocation19 [shape = 'u8[1024]{0}', space=vmem, size = 0x400, scoped, tag = 'input window, operand 10, single buffered']
    #allocation20 [shape = 'u8[1024]{0}', space=vmem, size = 0x400, scoped, tag = 'input window, operand 11, single buffered']
    #allocation21 [shape = 's32[1]{0}', space=sflag, size = 0x4, scoped, tag = 'scoped memory for tpu_custom_call.1']
    #allocation22 [shape = 'u8[1024]{0}', space=vmem, size = 0x400, scoped, tag = 'input window, operand 12, single buffered']
    #allocation23 [shape = 'u8[65536]{0}', space=vmem, size = 0x10000, scoped, tag = 'input window, operand 13, single buffered']
    #allocation24 [shape = 's32[1]{0}', space=sflag, size = 0x4, scoped, tag = 'scoped memory for tpu_custom_call.1']
    #allocation25 [shape = 'u8[512]{0}', space=vmem, size = 0x400, scoped, tag = 'input window, operand 14, single buffered']
    #allocation26 [shape = 'u8[512]{0}', space=vmem, size = 0x400, scoped, tag = 'input window, operand 15, single buffered']
    #allocation27 [shape = 's32[1]{0}', space=sflag, size = 0x4, scoped, tag = 'scoped memory for tpu_custom_call.1']
    #allocation28 [shape = 'u8[512]{0}', space=vmem, size = 0x400, scoped, tag = 'input window, operand 16, single buffered']
    #allocation29 [shape = 'u8[8192]{0}', space=vmem, size = 0x2000, scoped, tag = 'output window, operand 0, single buffered']
    %26 = vsyncpa [#allocation3], 0
    %27 = vsyncpa [#allocation6], 0
    %28 = vsyncpa [#allocation9], 0
    %29 = vsyncpa [#allocation12], 0
    %30 = vsyncpa [#allocation15], 0
    %31 = vsyncpa [#allocation18], 0
    %32 = vsyncpa [#allocation21], 0
    %33 = vsyncpa [#allocation24], 0
    %34 = vsyncpa [#allocation27], 0
    %35 = vsyncpa [#allocation4], 0
    // Predicated region
    $region2: #{tpu_custom_call.1} parent=1 // pred_check
      _
    $region3: #{tpu_custom_call.1} parent=1 // pred_check_branch
      %37 = sbr.rel (0) target = $region5
    $region4: #{tpu_custom_call.1} parent=1 // pred_region
      %s39 = ssub.s32 128, 128
      %40 = vsyncadd [#allocation3], %s39
      %s41 = sshll.u32 [#allocation2], 4
      %s42 = int_to_ptr.vmem [resolvable:$true] %s41
      %47 = dma.hbm_to_vmem [thread:$0]  %s0, 128, %s42, [#allocation3], 64, 64, 4
    $region5: #{tpu_custom_call.1} parent=1 // pred_fallthru
      _
    // Predicated region
    $region6: #{tpu_custom_call.1} parent=1 // pred_check
      _
    $region7: #{tpu_custom_call.1} parent=1 // pred_check_branch
      %49 = sbr.rel (0) target = $region9
    $region8: #{tpu_custom_call.1} parent=1 // pred_region
      %s51 = ssub.s32 2048, 2048
      %52 = vsyncadd [#allocation6], %s51
      %s53 = sshll.u32 [#allocation5], 4
      %s54 = int_to_ptr.vmem [resolvable:$true] %s53
      %59 = dma.hbm_to_vmem [thread:$0]  %s1, 2048, %s54, [#allocation6], 128, 128, 8
    $region9: #{tpu_custom_call.1} parent=1 // pred_fallthru
      _
    // Predicated region
    $region10: #{tpu_custom_call.1} parent=1 // pred_check
      _
    $region11: #{tpu_custom_call.1} parent=1 // pred_check_branch
      %61 = sbr.rel (0) target = $region13
    $region12: #{tpu_custom_call.1} parent=1 // pred_region
      %s63 = ssub.s32 32, 32
      %64 = vsyncadd [#allocation6], %s63
      %s66 = sshll.u32 [#allocation7], 4
      %s67 = int_to_ptr.vmem [resolvable:$true] %s66
      %69 = dma.hbm_to_vmem [thread:$0]  %s2, 32, %s67, [#allocation6]
    $region13: #{tpu_custom_call.1} parent=1 // pred_fallthru
      _
    // Predicated region
    $region14: #{tpu_custom_call.1} parent=1 // pred_check
      _
    $region15: #{tpu_custom_call.1} parent=1 // pred_check_branch
      %71 = sbr.rel (0) target = $region17
    $region16: #{tpu_custom_call.1} parent=1 // pred_region
      %s73 = ssub.s32 32, 32
      %74 = vsyncadd [#allocation9], %s73
      %s76 = sshll.u32 [#allocation8], 4
      %s77 = int_to_ptr.vmem [resolvable:$true] %s76
      %79 = dma.hbm_to_vmem [thread:$0]  %s3, 32, %s77, [#allocation9]
    $region17: #{tpu_custom_call.1} parent=1 // pred_fallthru
      _
    // Predicated region
    $region18: #{tpu_custom_call.1} parent=1 // pred_check
      _
    $region19: #{tpu_custom_call.1} parent=1 // pred_check_branch
      %81 = sbr.rel (0) target = $region21
    $region20: #{tpu_custom_call.1} parent=1 // pred_region
      %s83 = ssub.s32 32, 32
      %84 = vsyncadd [#allocation9], %s83
      %s86 = sshll.u32 [#allocation10], 4
      %s87 = int_to_ptr.vmem [resolvable:$true] %s86
      %89 = dma.hbm_to_vmem [thread:$0]  %s4, 32, %s87, [#allocation9]
    $region21: #{tpu_custom_call.1} parent=1 // pred_fallthru
      _
    // Predicated region
    $region22: #{tpu_custom_call.1} parent=1 // pred_check
      _
    $region23: #{tpu_custom_call.1} parent=1 // pred_check_branch
      %91 = sbr.rel (0) target = $region25
    $region24: #{tpu_custom_call.1} parent=1 // pred_region
      %s93 = ssub.s32 4096, 4096
      %94 = vsyncadd [#allocation12], %s93
      %s95 = sshll.u32 [#allocation11], 4
      %s96 = int_to_ptr.vmem [resolvable:$true] %s95
      %101 = dma.hbm_to_vmem [thread:$0]  %s5, 4096, %s96, [#allocation12], 128, 128, 8
    $region25: #{tpu_custom_call.1} parent=1 // pred_fallthru
      _
    // Predicated region
    $region26: #{tpu_custom_call.1} parent=1 // pred_check
      _
    $region27: #{tpu_custom_call.1} parent=1 // pred_check_branch
      %103 = sbr.rel (0) target = $region29
    $region28: #{tpu_custom_call.1} parent=1 // pred_region
      %s105 = ssub.s32 32, 32
      %106 = vsyncadd [#allocation12], %s105
      %s108 = sshll.u32 [#allocation13], 4
      %s109 = int_to_ptr.vmem [resolvable:$true] %s108
      %111 = dma.hbm_to_vmem [thread:$0]  %s6, 32, %s109, [#allocation12]
    $region29: #{tpu_custom_call.1} parent=1 // pred_fallthru
      _
    // Predicated region
    $region30: #{tpu_custom_call.1} parent=1 // pred_check
      _
    $region31: #{tpu_custom_call.1} parent=1 // pred_check_branch
      %113 = sbr.rel (0) target = $region33
    $region32: #{tpu_custom_call.1} parent=1 // pred_region
      %s115 = ssub.s32 32, 32
      %116 = vsyncadd [#allocation15], %s115
      %s118 = sshll.u32 [#allocation14], 4
      %s119 = int_to_ptr.vmem [resolvable:$true] %s118
      %121 = dma.hbm_to_vmem [thread:$0]  %s7, 32, %s119, [#allocation15]
    $region33: #{tpu_custom_call.1} parent=1 // pred_fallthru
      _
    // Predicated region
    $region34: #{tpu_custom_call.1} parent=1 // pred_check
      _
    $region35: #{tpu_custom_call.1} parent=1 // pred_check_branch
      %123 = sbr.rel (0) target = $region37
    $region36: #{tpu_custom_call.1} parent=1 // pred_region
      %s125 = ssub.s32 32, 32
      %126 = vsyncadd [#allocation15], %s125
      %s128 = sshll.u32 [#allocation16], 4
      %s129 = int_to_ptr.vmem [resolvable:$true] %s128
      %131 = dma.hbm_to_vmem [thread:$0]  %s8, 32, %s129, [#allocation15]
    $region37: #{tpu_custom_call.1} parent=1 // pred_fallthru
      _
    // Predicated region
    $region38: #{tpu_custom_call.1} parent=1 // pred_check
      _
    $region39: #{tpu_custom_call.1} parent=1 // pred_check_branch
      %133 = sbr.rel (0) target = $region41
    $region40: #{tpu_custom_call.1} parent=1 // pred_region
      %s135 = ssub.s32 4096, 4096
      %136 = vsyncadd [#allocation18], %s135
      %s137 = sshll.u32 [#allocation17], 4
      %s138 = int_to_ptr.vmem [resolvable:$true] %s137
      %143 = dma.hbm_to_vmem [thread:$0]  %s9, 4096, %s138, [#allocation18], 128, 128, 8
    $region41: #{tpu_custom_call.1} parent=1 // pred_fallthru
      _
    // Predicated region
    $region42: #{tpu_custom_call.1} parent=1 // pred_check
      _
    $region43: #{tpu_custom_call.1} parent=1 // pred_check_branch
      %145 = sbr.rel (0) target = $region45
    $region44: #{tpu_custom_call.1} parent=1 // pred_region
      %s147 = ssub.s32 32, 32
      %148 = vsyncadd [#allocation18], %s147
      %s150 = sshll.u32 [#allocation19], 4
      %s151 = int_to_ptr.vmem [resolvable:$true] %s150
      %153 = dma.hbm_to_vmem [thread:$0]  %s10, 32, %s151, [#allocation18]
    $region45: #{tpu_custom_call.1} parent=1 // pred_fallthru
      _
    // Predicated region
    $region46: #{tpu_custom_call.1} parent=1 // pred_check
      _
    $region47: #{tpu_custom_call.1} parent=1 // pred_check_branch
      %155 = sbr.rel (0) target = $region49
    $region48: #{tpu_custom_call.1} parent=1 // pred_region
      %s157 = ssub.s32 32, 32
      %158 = vsyncadd [#allocation21], %s157
      %s160 = sshll.u32 [#allocation20], 4
      %s161 = int_to_ptr.vmem [resolvable:$true] %s160
      %163 = dma.hbm_to_vmem [thread:$0]  %s11, 32, %s161, [#allocation21]
    $region49: #{tpu_custom_call.1} parent=1 // pred_fallthru
      _
    // Predicated region
    $region50: #{tpu_custom_call.1} parent=1 // pred_check
      _
    $region51: #{tpu_custom_call.1} parent=1 // pred_check_branch
      %165 = sbr.rel (0) target = $region53
    $region52: #{tpu_custom_call.1} parent=1 // pred_region
      %s167 = ssub.s32 32, 32
      %168 = vsyncadd [#allocation21], %s167
      %s170 = sshll.u32 [#allocation22], 4
      %s171 = int_to_ptr.vmem [resolvable:$true] %s170
      %173 = dma.hbm_to_vmem [thread:$0]  %s12, 32, %s171, [#allocation21]
    $region53: #{tpu_custom_call.1} parent=1 // pred_fallthru
      _
    // Predicated region
    $region54: #{tpu_custom_call.1} parent=1 // pred_check
      _
    $region55: #{tpu_custom_call.1} parent=1 // pred_check_branch
      %175 = sbr.rel (0) target = $region57
    $region56: #{tpu_custom_call.1} parent=1 // pred_region
      %s177 = ssub.s32 2048, 2048
      %178 = vsyncadd [#allocation24], %s177
      %s179 = sshll.u32 [#allocation23], 4
      %s180 = int_to_ptr.vmem [resolvable:$true] %s179
      %185 = dma.hbm_to_vmem [thread:$0]  %s13, 2048, %s180, [#allocation24], 64, 64, 4
    $region57: #{tpu_custom_call.1} parent=1 // pred_fallthru
      _
    // Predicated region
    $region58: #{tpu_custom_call.1} parent=1 // pred_check
      _
    $region59: #{tpu_custom_call.1} parent=1 // pred_check_branch
      %187 = sbr.rel (0) target = $region61
    $region60: #{tpu_custom_call.1} parent=1 // pred_region
      %s189 = ssub.s32 16, 16
      %190 = vsyncadd [#allocation24], %s189
      %s192 = sshll.u32 [#allocation25], 4
      %s193 = int_to_ptr.vmem [resolvable:$true] %s192
      %195 = dma.hbm_to_vmem [thread:$0]  %s14, 16, %s193, [#allocation24]
    $region61: #{tpu_custom_call.1} parent=1 // pred_fallthru
      _
    // Predicated region
    $region62: #{tpu_custom_call.1} parent=1 // pred_check
      _
    $region63: #{tpu_custom_call.1} parent=1 // pred_check_branch
      %197 = sbr.rel (0) target = $region65
    $region64: #{tpu_custom_call.1} parent=1 // pred_region
      %s199 = ssub.s32 16, 16
      %200 = vsyncadd [#allocation27], %s199
      %s202 = sshll.u32 [#allocation26], 4
      %s203 = int_to_ptr.vmem [resolvable:$true] %s202
      %205 = dma.hbm_to_vmem [thread:$0]  %s15, 16, %s203, [#allocation27]
    $region65: #{tpu_custom_call.1} parent=1 // pred_fallthru
      _
    // Predicated region
    $region66: #{tpu_custom_call.1} parent=1 // pred_check
      _
    $region67: #{tpu_custom_call.1} parent=1 // pred_check_branch
      %207 = sbr.rel (0) target = $region69
    $region68: #{tpu_custom_call.1} parent=1 // pred_region
      %s209 = ssub.s32 16, 16
      %210 = vsyncadd [#allocation27], %s209
      %s212 = sshll.u32 [#allocation28], 4
      %s213 = int_to_ptr.vmem [resolvable:$true] %s212
      %215 = dma.hbm_to_vmem [thread:$0]  %s16, 16, %s213, [#allocation27]
    $region69: #{tpu_custom_call.1} parent=1 // pred_fallthru
      _
    // Predicated region
    $region70: #{tpu_custom_call.1} parent=1 // pred_check
      _
    $region71: #{tpu_custom_call.1} parent=1 // pred_check_branch
      %217 = sbr.rel (0) target = $region73
    $region72: #{tpu_custom_call.1} parent=1 // pred_region
      _
    $region73: #{tpu_custom_call.1} parent=1 // pred_fallthru
      _
    // Predicated region
    $region74: #{tpu_custom_call.1} parent=1 // pred_check
      _
    $region75: #{tpu_custom_call.1} parent=1 // pred_check_branch
      %219 = sbr.rel (0) target = $region77
    $region76: #{tpu_custom_call.1} parent=1 // pred_region
      _
    $region77: #{tpu_custom_call.1} parent=1 // pred_fallthru
      _
    // Predicated region
    $region78: #{tpu_custom_call.1} parent=1 // pred_check
      _
    $region79: #{tpu_custom_call.1} parent=1 // pred_check_branch
      %221 = sbr.rel (0) target = $region81
    $region80: #{tpu_custom_call.1} parent=1 // pred_region
      _
    $region81: #{tpu_custom_call.1} parent=1 // pred_fallthru
      _
    // Predicated region
    $region82: #{tpu_custom_call.1} parent=1 // pred_check
      _
    $region83: #{tpu_custom_call.1} parent=1 // pred_check_branch
      %223 = sbr.rel (0) target = $region85
    $region84: #{tpu_custom_call.1} parent=1 // pred_region
      _
    $region85: #{tpu_custom_call.1} parent=1 // pred_fallthru
      _
    // Predicated region
    $region86: #{tpu_custom_call.1} parent=1 // pred_check
      _
    $region87: #{tpu_custom_call.1} parent=1 // pred_check_branch
      %225 = sbr.rel (0) target = $region89
    $region88: #{tpu_custom_call.1} parent=1 // pred_region
      %226 = dma.done [#allocation3], 128
    $region89: #{tpu_custom_call.1} parent=1 // pred_fallthru
      _
    // Predicated region
    $region90: #{tpu_custom_call.1} parent=1 // pred_check
      _
    $region91: #{tpu_custom_call.1} parent=1 // pred_check_branch
      %228 = sbr.rel (0) target = $region93
    $region92: #{tpu_custom_call.1} parent=1 // pred_region
      %229 = dma.done [#allocation6], 2048
    $region93: #{tpu_custom_call.1} parent=1 // pred_fallthru
      _
    // Predicated region
    $region94: #{tpu_custom_call.1} parent=1 // pred_check
      _
    $region95: #{tpu_custom_call.1} parent=1 // pred_check_branch
      %231 = sbr.rel (0) target = $region97
    $region96: #{tpu_custom_call.1} parent=1 // pred_region
      %232 = dma.done [#allocation6], 32
    $region97: #{tpu_custom_call.1} parent=1 // pred_fallthru
      _
    // Predicated region
    $region98: #{tpu_custom_call.1} parent=1 // pred_check
      _
    $region99: #{tpu_custom_call.1} parent=1 // pred_check_branch
      %234 = sbr.rel (0) target = $region101
    $region100: #{tpu_custom_call.1} parent=1 // pred_region
      %235 = dma.done [#allocation9], 32
    $region101: #{tpu_custom_call.1} parent=1 // pred_fallthru
      _
    // Predicated region
    $region102: #{tpu_custom_call.1} parent=1 // pred_check
      _
    $region103: #{tpu_custom_call.1} parent=1 // pred_check_branch
      %237 = sbr.rel (0) target = $region105
    $region104: #{tpu_custom_call.1} parent=1 // pred_region
      %238 = dma.done [#allocation9], 32
    $region105: #{tpu_custom_call.1} parent=1 // pred_fallthru
      _
    // Predicated region
    $region106: #{tpu_custom_call.1} parent=1 // pred_check
      _
    $region107: #{tpu_custom_call.1} parent=1 // pred_check_branch
      %240 = sbr.rel (0) target = $region109
    $region108: #{tpu_custom_call.1} parent=1 // pred_region
      %241 = dma.done [#allocation12], 4096
    $region109: #{tpu_custom_call.1} parent=1 // pred_fallthru
      _
    // Predicated region
    $region110: #{tpu_custom_call.1} parent=1 // pred_check
      _
    $region111: #{tpu_custom_call.1} parent=1 // pred_check_branch
      %243 = sbr.rel (0) target = $region113
    $region112: #{tpu_custom_call.1} parent=1 // pred_region
      %244 = dma.done [#allocation12], 32
    $region113: #{tpu_custom_call.1} parent=1 // pred_fallthru
      _
    // Predicated region
    $region114: #{tpu_custom_call.1} parent=1 // pred_check
      _
    $region115: #{tpu_custom_call.1} parent=1 // pred_check_branch
      %246 = sbr.rel (0) target = $region117
    $region116: #{tpu_custom_call.1} parent=1 // pred_region
      %247 = dma.done [#allocation15], 32
    $region117: #{tpu_custom_call.1} parent=1 // pred_fallthru
      _
    // Predicated region
    $region118: #{tpu_custom_call.1} parent=1 // pred_check
      _
    $region119: #{tpu_custom_call.1} parent=1 // pred_check_branch
      %249 = sbr.rel (0) target = $region121
    $region120: #{tpu_custom_call.1} parent=1 // pred_region
      %250 = dma.done [#allocation15], 32
    $region121: #{tpu_custom_call.1} parent=1 // pred_fallthru
      _
    // Predicated region
    $region122: #{tpu_custom_call.1} parent=1 // pred_check
      _
    $region123: #{tpu_custom_call.1} parent=1 // pred_check_branch
      %252 = sbr.rel (0) target = $region125
    $region124: #{tpu_custom_call.1} parent=1 // pred_region
      %253 = dma.done [#allocation18], 4096
    $region125: #{tpu_custom_call.1} parent=1 // pred_fallthru
      _
    // Predicated region
    $region126: #{tpu_custom_call.1} parent=1 // pred_check
      _
    $region127: #{tpu_custom_call.1} parent=1 // pred_check_branch
      %255 = sbr.rel (0) target = $region129
    $region128: #{tpu_custom_call.1} parent=1 // pred_region
      %256 = dma.done [#allocation18], 32
    $region129: #{tpu_custom_call.1} parent=1 // pred_fallthru
      _
    // Predicated region
    $region130: #{tpu_custom_call.1} parent=1 // pred_check
      _
    $region131: #{tpu_custom_call.1} parent=1 // pred_check_branch
      %258 = sbr.rel (0) target = $region133
    $region132: #{tpu_custom_call.1} parent=1 // pred_region
      %259 = dma.done [#allocation21], 32
    $region133: #{tpu_custom_call.1} parent=1 // pred_fallthru
      _
    // Predicated region
    $region134: #{tpu_custom_call.1} parent=1 // pred_check
      _
    $region135: #{tpu_custom_call.1} parent=1 // pred_check_branch
      %261 = sbr.rel (0) target = $region137
    $region136: #{tpu_custom_call.1} parent=1 // pred_region
      %262 = dma.done [#allocation21], 32
    $region137: #{tpu_custom_call.1} parent=1 // pred_fallthru
      _
    // Predicated region
    $region138: #{tpu_custom_call.1} parent=1 // pred_check
      _
    $region139: #{tpu_custom_call.1} parent=1 // pred_check_branch
      %264 = sbr.rel (0) target = $region141
    $region140: #{tpu_custom_call.1} parent=1 // pred_region
      %265 = dma.done [#allocation24], 2048
    $region141: #{tpu_custom_call.1} parent=1 // pred_fallthru
      _
    // Predicated region
    $region142: #{tpu_custom_call.1} parent=1 // pred_check
      _
    $region143: #{tpu_custom_call.1} parent=1 // pred_check_branch
      %267 = sbr.rel (0) target = $region145
    $region144: #{tpu_custom_call.1} parent=1 // pred_region
      %268 = dma.done [#allocation24], 16
    $region145: #{tpu_custom_call.1} parent=1 // pred_fallthru
      _
    // Predicated region
    $region146: #{tpu_custom_call.1} parent=1 // pred_check
      _
    $region147: #{tpu_custom_call.1} parent=1 // pred_check_branch
      %270 = sbr.rel (0) target = $region149
    $region148: #{tpu_custom_call.1} parent=1 // pred_region
      %271 = dma.done [#allocation27], 16
    $region149: #{tpu_custom_call.1} parent=1 // pred_fallthru
      _
    // Predicated region
    $region150: #{tpu_custom_call.1} parent=1 // pred_check
      _
    $region151: #{tpu_custom_call.1} parent=1 // pred_check_branch
      %273 = sbr.rel (0) target = $region153
    $region152: #{tpu_custom_call.1} parent=1 // pred_region
      %274 = dma.done [#allocation27], 16
    $region153: #{tpu_custom_call.1} parent=1 // pred_fallthru
      _
    %v280 = vld [vmem:[#allocation2] sm:$0xf]
    %v281 = vld [vmem:[#allocation2 + $0x4] sm:$0xf]
    %v282 = vld [vmem:[#allocation5] sm:$0xff]
    %v283 = vld [vmem:[#allocation5 + $0x8] sm:$0xff]
    %v284 = vld [vmem:[#allocation5 + $0x10] sm:$0xff]
    %v285 = vld [vmem:[#allocation5 + $0x18] sm:$0xff]
    %v286 = vld [vmem:[#allocation5 + $0x20] sm:$0xff]
    %v287 = vld [vmem:[#allocation5 + $0x28] sm:$0xff]
    %v288 = vld [vmem:[#allocation5 + $0x30] sm:$0xff]
    %v289 = vld [vmem:[#allocation5 + $0x38] sm:$0xff]
    %v290 = vld [vmem:[#allocation5 + $0x40] sm:$0xff]
    %v291 = vld [vmem:[#allocation5 + $0x48] sm:$0xff]
    %v292 = vld [vmem:[#allocation5 + $0x50] sm:$0xff]
    %v293 = vld [vmem:[#allocation5 + $0x58] sm:$0xff]
    %v294 = vld [vmem:[#allocation5 + $0x60] sm:$0xff]
    %v295 = vld [vmem:[#allocation5 + $0x68] sm:$0xff]
    %v296 = vld [vmem:[#allocation5 + $0x70] sm:$0xff]
    %v297 = vld [vmem:[#allocation5 + $0x78] sm:$0xff]
    %v298 = vld [vmem:[#allocation7] sm:$0x3]
    %v299 = vld [vmem:[#allocation8] sm:$0x3]
    %v300 = vld [vmem:[#allocation10] sm:$0x3]
    %v301 = vld [vmem:[#allocation11] sm:$0xff]
    %v302 = vld [vmem:[#allocation11 + $0x8] sm:$0xff]
    %v303 = vld [vmem:[#allocation11 + $0x10] sm:$0xff]
    %v304 = vld [vmem:[#allocation11 + $0x18] sm:$0xff]
    %v305 = vld [vmem:[#allocation11 + $0x20] sm:$0xff]
    %v306 = vld [vmem:[#allocation11 + $0x28] sm:$0xff]
    %v307 = vld [vmem:[#allocation11 + $0x30] sm:$0xff]
    %v308 = vld [vmem:[#allocation11 + $0x38] sm:$0xff]
    %v309 = vld [vmem:[#allocation11 + $0x40] sm:$0xff]
    %v310 = vld [vmem:[#allocation11 + $0x48] sm:$0xff]
    %v311 = vld [vmem:[#allocation11 + $0x50] sm:$0xff]
    %v312 = vld [vmem:[#allocation11 + $0x58] sm:$0xff]
    %v313 = vld [vmem:[#allocation11 + $0x60] sm:$0xff]
    %v314 = vld [vmem:[#allocation11 + $0x68] sm:$0xff]
    %v315 = vld [vmem:[#allocation11 + $0x70] sm:$0xff]
    %v316 = vld [vmem:[#allocation11 + $0x78] sm:$0xff]
    %v317 = vld [vmem:[#allocation11 + $0x80] sm:$0xff]
    %v318 = vld [vmem:[#allocation11 + $0x88] sm:$0xff]
    %v319 = vld [vmem:[#allocation11 + $0x90] sm:$0xff]
    %v320 = vld [vmem:[#allocation11 + $0x98] sm:$0xff]
    %v321 = vld [vmem:[#allocation11 + $0xa0] sm:$0xff]
    %v322 = vld [vmem:[#allocation11 + $0xa8] sm:$0xff]
    %v323 = vld [vmem:[#allocation11 + $0xb0] sm:$0xff]
    %v324 = vld [vmem:[#allocation11 + $0xb8] sm:$0xff]
    %v325 = vld [vmem:[#allocation11 + $0xc0] sm:$0xff]
    %v326 = vld [vmem:[#allocation11 + $0xc8] sm:$0xff]
    %v327 = vld [vmem:[#allocation11 + $0xd0] sm:$0xff]
    %v328 = vld [vmem:[#allocation11 + $0xd8] sm:$0xff]
    %v329 = vld [vmem:[#allocation11 + $0xe0] sm:$0xff]
    %v330 = vld [vmem:[#allocation11 + $0xe8] sm:$0xff]
    %v331 = vld [vmem:[#allocation11 + $0xf0] sm:$0xff]
    %v332 = vld [vmem:[#allocation11 + $0xf8] sm:$0xff]
    %v333 = vld [vmem:[#allocation13] sm:$0x3]
    %v334 = vld [vmem:[#allocation14] sm:$0x3]
    %v335 = vld [vmem:[#allocation16] sm:$0x3]
    %v336 = vld [vmem:[#allocation17] sm:$0xff]
    %v337 = vld [vmem:[#allocation17 + $0x8] sm:$0xff]
    %v338 = vld [vmem:[#allocation17 + $0x10] sm:$0xff]
    %v339 = vld [vmem:[#allocation17 + $0x18] sm:$0xff]
    %v340 = vld [vmem:[#allocation17 + $0x20] sm:$0xff]
    %v341 = vld [vmem:[#allocation17 + $0x28] sm:$0xff]
    %v342 = vld [vmem:[#allocation17 + $0x30] sm:$0xff]
    %v343 = vld [vmem:[#allocation17 + $0x38] sm:$0xff]
    %v344 = vld [vmem:[#allocation17 + $0x40] sm:$0xff]
    %v345 = vld [vmem:[#allocation17 + $0x48] sm:$0xff]
    %v346 = vld [vmem:[#allocation17 + $0x50] sm:$0xff]
    %v347 = vld [vmem:[#allocation17 + $0x58] sm:$0xff]
    %v348 = vld [vmem:[#allocation17 + $0x60] sm:$0xff]
    %v349 = vld [vmem:[#allocation17 + $0x68] sm:$0xff]
    %v350 = vld [vmem:[#allocation17 + $0x70] sm:$0xff]
    %v351 = vld [vmem:[#allocation17 + $0x78] sm:$0xff]
    %v352 = vld [vmem:[#allocation17 + $0x80] sm:$0xff]
    %v353 = vld [vmem:[#allocation17 + $0x88] sm:$0xff]
    %v354 = vld [vmem:[#allocation17 + $0x90] sm:$0xff]
    %v355 = vld [vmem:[#allocation17 + $0x98] sm:$0xff]
    %v356 = vld [vmem:[#allocation17 + $0xa0] sm:$0xff]
    %v357 = vld [vmem:[#allocation17 + $0xa8] sm:$0xff]
    %v358 = vld [vmem:[#allocation17 + $0xb0] sm:$0xff]
    %v359 = vld [vmem:[#allocation17 + $0xb8] sm:$0xff]
    %v360 = vld [vmem:[#allocation17 + $0xc0] sm:$0xff]
    %v361 = vld [vmem:[#allocation17 + $0xc8] sm:$0xff]
    %v362 = vld [vmem:[#allocation17 + $0xd0] sm:$0xff]
    %v363 = vld [vmem:[#allocation17 + $0xd8] sm:$0xff]
    %v364 = vld [vmem:[#allocation17 + $0xe0] sm:$0xff]
    %v365 = vld [vmem:[#allocation17 + $0xe8] sm:$0xff]
    %v366 = vld [vmem:[#allocation17 + $0xf0] sm:$0xff]
    %v367 = vld [vmem:[#allocation17 + $0xf8] sm:$0xff]
    %v368 = vld [vmem:[#allocation19] sm:$0x3]
    %v369 = vld [vmem:[#allocation20] sm:$0x3]
    %v370 = vld [vmem:[#allocation22] sm:$0x3]
    %v371 = vld [vmem:[#allocation23] sm:$0xf]
    %v372 = vld [vmem:[#allocation23 + $0x4] sm:$0xf]
    %v373 = vld [vmem:[#allocation23 + $0x8] sm:$0xf]
    %v374 = vld [vmem:[#allocation23 + $0xc] sm:$0xf]
    %v375 = vld [vmem:[#allocation23 + $0x10] sm:$0xf]
    %v376 = vld [vmem:[#allocation23 + $0x14] sm:$0xf]
    %v377 = vld [vmem:[#allocation23 + $0x18] sm:$0xf]
    %v378 = vld [vmem:[#allocation23 + $0x1c] sm:$0xf]
    %v379 = vld [vmem:[#allocation23 + $0x20] sm:$0xf]
    %v380 = vld [vmem:[#allocation23 + $0x24] sm:$0xf]
    %v381 = vld [vmem:[#allocation23 + $0x28] sm:$0xf]
    %v382 = vld [vmem:[#allocation23 + $0x2c] sm:$0xf]
    %v383 = vld [vmem:[#allocation23 + $0x30] sm:$0xf]
    %v384 = vld [vmem:[#allocation23 + $0x34] sm:$0xf]
    %v385 = vld [vmem:[#allocation23 + $0x38] sm:$0xf]
    %v386 = vld [vmem:[#allocation23 + $0x3c] sm:$0xf]
    %v387 = vld [vmem:[#allocation23 + $0x40] sm:$0xf]
    %v388 = vld [vmem:[#allocation23 + $0x44] sm:$0xf]
    %v389 = vld [vmem:[#allocation23 + $0x48] sm:$0xf]
    %v390 = vld [vmem:[#allocation23 + $0x4c] sm:$0xf]
    %v391 = vld [vmem:[#allocation23 + $0x50] sm:$0xf]
    %v392 = vld [vmem:[#allocation23 + $0x54] sm:$0xf]
    %v393 = vld [vmem:[#allocation23 + $0x58] sm:$0xf]
    %v394 = vld [vmem:[#allocation23 + $0x5c] sm:$0xf]
    %v395 = vld [vmem:[#allocation23 + $0x60] sm:$0xf]
    %v396 = vld [vmem:[#allocation23 + $0x64] sm:$0xf]
    %v397 = vld [vmem:[#allocation23 + $0x68] sm:$0xf]
    %v398 = vld [vmem:[#allocation23 + $0x6c] sm:$0xf]
    %v399 = vld [vmem:[#allocation23 + $0x70] sm:$0xf]
    %v400 = vld [vmem:[#allocation23 + $0x74] sm:$0xf]
    %v401 = vld [vmem:[#allocation23 + $0x78] sm:$0xf]
    %v402 = vld [vmem:[#allocation23 + $0x7c] sm:$0xf]
    %v403 = vld [vmem:[#allocation25] sm:$0x1]
    %v404 = vld [vmem:[#allocation26] sm:$0x1]
    %v405 = vld [vmem:[#allocation28] sm:$0x1]
    %v406 = vld [vmem:[%s17] sm:$0xf]
    %v407 = vld [vmem:[%s17 + $0x4] sm:$0xf]
    %v408 = vld [vmem:[%s17 + $0x8] sm:$0xf]
    %v409 = vld [vmem:[%s17 + $0xc] sm:$0xf]
    %v410 = vld [vmem:[%s17 + $0x10] sm:$0xf]
    %v411 = vld [vmem:[%s17 + $0x14] sm:$0xf]
    %v412 = vld [vmem:[%s17 + $0x18] sm:$0xf]
    %v413 = vld [vmem:[%s17 + $0x1c] sm:$0xf]
    %v414 = vld [vmem:[%s17 + $0x20] sm:$0xf]
    %v415 = vld [vmem:[%s17 + $0x24] sm:$0xf]
    %v416 = vld [vmem:[%s17 + $0x28] sm:$0xf]
    %v417 = vld [vmem:[%s17 + $0x2c] sm:$0xf]
    %v418 = vld [vmem:[%s17 + $0x30] sm:$0xf]
    %v419 = vld [vmem:[%s17 + $0x34] sm:$0xf]
    %v420 = vld [vmem:[%s17 + $0x38] sm:$0xf]
    %v421 = vld [vmem:[%s17 + $0x3c] sm:$0xf]
    %v422 = vld [vmem:[%s18] sm:$0x1]
    %v423 = vld [vmem:[%s19] sm:$0x1]
    %v424 = vld [vmem:[%s20] sm:$0x1]
    %v426 = vlaneseq
    %v427 = vshrl.u32 %v426, 7
    %v428 = vsub.s32 0, %v427
    %v429 = vrot.slane %v298, %v428
    %v430 = vlaneseq
    %v431 = vshrl.u32 %v430, 7
    %v432 = vsub.s32 1, %v431
    %v433 = vrot.slane %v298, %v432
    %v438 = vunpack.c.l.b16 %v280
    %v439 = vunpack.c.l.b16 %v281
    %v440 = vpack.c.b16 %v439, %v438
    %v458 = vunpack.c.l.b16 %v282
    %v459 = vunpack.c.h.b16 %v282
    %v460 = vunpack.c.l.b16 %v283
    %v461 = vunpack.c.h.b16 %v283
    %v462 = vunpack.c.l.b16 %v284
    %v463 = vunpack.c.h.b16 %v284
    %v464 = vunpack.c.l.b16 %v285
    %v465 = vunpack.c.h.b16 %v285
    %v466 = vunpack.c.l.b16 %v286
    %v467 = vunpack.c.h.b16 %v286
    %v468 = vunpack.c.l.b16 %v287
    %v469 = vunpack.c.h.b16 %v287
    %v470 = vunpack.c.l.b16 %v288
    %v471 = vunpack.c.h.b16 %v288
    %v472 = vunpack.c.l.b16 %v289
    %v473 = vunpack.c.h.b16 %v289
    %v474 = vunpack.c.l.b16 %v290
    %v475 = vunpack.c.h.b16 %v290
    %v476 = vunpack.c.l.b16 %v291
    %v477 = vunpack.c.h.b16 %v291
    %v478 = vunpack.c.l.b16 %v292
    %v479 = vunpack.c.h.b16 %v292
    %v480 = vunpack.c.l.b16 %v293
    %v481 = vunpack.c.h.b16 %v293
    %v482 = vunpack.c.l.b16 %v294
    %v483 = vunpack.c.h.b16 %v294
    %v484 = vunpack.c.l.b16 %v295
    %v485 = vunpack.c.h.b16 %v295
    %v486 = vunpack.c.l.b16 %v296
    %v487 = vunpack.c.h.b16 %v296
    %v488 = vunpack.c.l.b16 %v297
    %v489 = vunpack.c.h.b16 %v297
    %v490 = vpack.c.b16 %v460, %v458
    %v491 = vpack.c.b16 %v461, %v459
    %v492 = vpack.c.b16 %v464, %v462
    %v493 = vpack.c.b16 %v465, %v463
    %v494 = vpack.c.b16 %v468, %v466
    %v495 = vpack.c.b16 %v469, %v467
    %v496 = vpack.c.b16 %v472, %v470
    %v497 = vpack.c.b16 %v473, %v471
    %v498 = vpack.c.b16 %v476, %v474
    %v499 = vpack.c.b16 %v477, %v475
    %v500 = vpack.c.b16 %v480, %v478
    %v501 = vpack.c.b16 %v481, %v479
    %v502 = vpack.c.b16 %v484, %v482
    %v503 = vpack.c.b16 %v485, %v483
    %v504 = vpack.c.b16 %v488, %v486
    %v505 = vpack.c.b16 %v489, %v487
    %522 = vmatprep.subr.bf16.mxu0 %v491
    %523 = vmatpush1.bf16.msra.mxu0 %v490
    %524 = vmatprep.subr.bf16.mxu0 %v493
    %525 = vmatpush1.bf16.msra.mxu0 %v492
    %526 = vmatprep.subr.bf16.mxu0 %v495
    %527 = vmatpush1.bf16.msra.mxu0 %v494
    %528 = vmatprep.subr.bf16.mxu0 %v497
    %529 = vmatpush1.bf16.msra.mxu0 %v496
    %530 = vmatprep.subr.bf16.mxu0 %v499
    %531 = vmatpush1.bf16.msra.mxu0 %v498
    %532 = vmatprep.subr.bf16.mxu0 %v501
    %533 = vmatpush1.bf16.msra.mxu0 %v500
    %534 = vmatprep.subr.bf16.mxu0 %v503
    %535 = vmatpush1.bf16.msra.mxu0 %v502
    %536 = vmatprep.subr.bf16.mxu0 %v505
    %537 = vmatpush1.bf16.msra.mxu0 %v504
    %538 = vmatprep.subr.bf16.mxu0 0
    %539 = vmatpush1.bf16.msra.mxu0 0
    %540 = vmatprep.subr.bf16.mxu0 0
    %541 = vmatpush1.bf16.msra.mxu0 0
    %542 = vmatprep.subr.bf16.mxu0 0
    %543 = vmatpush1.bf16.msra.mxu0 0
    %544 = vmatprep.subr.bf16.mxu0 0
    %545 = vmatpush1.bf16.msra.mxu0 0
    %546 = vmatprep.subr.bf16.mxu0 0
    %547 = vmatpush1.bf16.msra.mxu0 0
    %548 = vmatprep.subr.bf16.mxu0 0
    %549 = vmatpush1.bf16.msra.mxu0 0
    %550 = vmatprep.subr.bf16.mxu0 0
    %551 = vmatpush1.bf16.msra.mxu0 0
    %552 = vmatprep.subr.bf16.mxu0 0
    %553 = vmatpush1.bf16.msra.mxu0 0
    %554 = vmatprep.mubr.bf16.mxu0 0
    %555 = vmatmul.mubr.bf16.gmra.mrb[0].mxu0 %v440
    %v556 = vpop.f32.mrb[0].mxu0
    %v557 = vadd.f32 %v429, %v556
    %v558 = vpop.f32.mrb[0].mxu0
    %v559 = vadd.f32 %v433, %v558
    %v560 = vpop.f32.mrb[0].mxu0
    %v561 = vadd.f32 %v429, %v560
    %v562 = vpop.f32.mrb[0].mxu0
    %v563 = vadd.f32 %v433, %v562
    %564 = vdwg.mxu0
    %v565 = vadd.f32 %v557, %v559
    %566 = vadd.xlane.f32.xlu0 %v565
    %v567 = vpop.xlane.xlu0 %566
    %v568 = vadd.f32 %v561, %v563
    %569 = vadd.xlane.f32.xlu0 %v568
    %v570 = vpop.xlane.xlu0 %569
    %v571 = vrcp.pop 256.0
    %v572 = vmul.f32 %v567, %v571
    %v573 = vmul.f32 %v570, %v571
    %v574 = vsub.f32 %v557, %v572
    %v575 = vsub.f32 %v559, %v572
    %v576 = vsub.f32 %v561, %v573
    %v577 = vsub.f32 %v563, %v573
    %v578 = vmul.f32 %v574, %v574
    %v579 = vmul.f32 %v575, %v575
    %v580 = vmul.f32 %v576, %v576
    %v581 = vmul.f32 %v577, %v577
    %v582 = vadd.f32 %v578, %v579
    %583 = vadd.xlane.f32.xlu0 %v582
    %v584 = vpop.xlane.xlu0 %583
    %v585 = vadd.f32 %v580, %v581
    %586 = vadd.xlane.f32.xlu0 %v585
    %v587 = vpop.xlane.xlu0 %586
    %v588 = vmul.f32 %v584, %v571
    %v589 = vmul.f32 %v587, %v571
    %v590 = vadd.f32 %v588, 1e-05
    %v591 = vadd.f32 %v589, 1e-05
    %v592 = vrsqrt.pop %v590
    %v593 = vrsqrt.pop %v591
    %v594 = vmul.f32 %v574, %v592
    %v595 = vmul.f32 %v575, %v592
    %v596 = vmul.f32 %v576, %v593
    %v597 = vmul.f32 %v577, %v593
    %v598 = vpack.c.bf16 %v596, %v594
    %v599 = vpack.c.bf16 %v597, %v595
    %v601 = vlaneseq
    %v602 = vshrl.u32 %v601, 7
    %v603 = vsub.s32 0, %v602
    %v604 = vrot.slane %v299, %v603
    %v605 = vlaneseq
    %v606 = vshrl.u32 %v605, 7
    %v607 = vsub.s32 1, %v606
    %v608 = vrot.slane %v299, %v607
    %v611 = vpack.c.bf16 %v604, %v604
    %v612 = vpack.c.bf16 %v608, %v608
    %v614 = vpack.i.b16 %v611, %v611
    %v616 = vlaneseq
    %v617 = vshrl.u32 %v616, 7
    %v618 = vsub.s32 0, %v617
    %v619 = vrot.slane %v614, %v618
    %v621 = vpack.i.b16 %v612, %v612
    %v623 = vlaneseq
    %v624 = vshrl.u32 %v623, 7
    %v625 = vsub.s32 0, %v624
    %v626 = vrot.slane %v621, %v625
    %v627 = vmul.bf16 %v598, %v619
    %v628 = vmul.bf16 %v599, %v626
    %v630 = vlaneseq
    %v631 = vshrl.u32 %v630, 7
    %v632 = vsub.s32 0, %v631
    %v633 = vrot.slane %v300, %v632
    %v634 = vlaneseq
    %v635 = vshrl.u32 %v634, 7
    %v636 = vsub.s32 1, %v635
    %v637 = vrot.slane %v300, %v636
    %v640 = vpack.c.bf16 %v633, %v633
    %v641 = vpack.c.bf16 %v637, %v637
    %v643 = vpack.i.b16 %v640, %v640
    %v645 = vlaneseq
    %v646 = vshrl.u32 %v645, 7
    %v647 = vsub.s32 0, %v646
    %v648 = vrot.slane %v643, %v647
    %v650 = vpack.i.b16 %v641, %v641
    %v652 = vlaneseq
    %v653 = vshrl.u32 %v652, 7
    %v654 = vsub.s32 0, %v653
    %v655 = vrot.slane %v650, %v654
    %v656 = vadd.bf16 %v627, %v648
    %v657 = vadd.bf16 %v628, %v655
    %v658 = vmul.bf16 %v656, %v656
    %v659 = vmul.bf16 %v657, %v657
    %v660 = vmul.bf16 %v656, %v658
    %v661 = vmul.bf16 %v657, %v659
    %v662 = vmul.bf16 %v660, 1027030327
    %v663 = vmul.bf16 %v661, 1027030327
    %v664 = vadd.bf16 %v656, %v662
    %v665 = vadd.bf16 %v657, %v663
    %v666 = vmul.bf16 %v664, 1061961548
    %v667 = vmul.bf16 %v665, 1061961548
    %v668 = vtanh.bf16.pop %v666
    %v669 = vtanh.bf16.pop %v667
    %v670 = vadd.bf16 %v668, 1065369472
    %v671 = vadd.bf16 %v669, 1065369472
    %v672 = vmul.bf16 %v670, 1056980736
    %v673 = vmul.bf16 %v671, 1056980736
    %v674 = vmul.bf16 %v656, %v672
    %v675 = vmul.bf16 %v657, %v673
    %v708 = vunpack.c.l.b16 %v301
    %v709 = vunpack.c.h.b16 %v301
    %v710 = vunpack.c.l.b16 %v302
    %v711 = vunpack.c.h.b16 %v302
    %v712 = vunpack.c.l.b16 %v303
    %v713 = vunpack.c.h.b16 %v303
    %v714 = vunpack.c.l.b16 %v304
    %v715 = vunpack.c.h.b16 %v304
    %v716 = vunpack.c.l.b16 %v305
    %v717 = vunpack.c.h.b16 %v305
    %v718 = vunpack.c.l.b16 %v306
    %v719 = vunpack.c.h.b16 %v306
    %v720 = vunpack.c.l.b16 %v307
    %v721 = vunpack.c.h.b16 %v307
    %v722 = vunpack.c.l.b16 %v308
    %v723 = vunpack.c.h.b16 %v308
    %v724 = vunpack.c.l.b16 %v309
    %v725 = vunpack.c.h.b16 %v309
    %v726 = vunpack.c.l.b16 %v310
    %v727 = vunpack.c.h.b16 %v310
    %v728 = vunpack.c.l.b16 %v311
    %v729 = vunpack.c.h.b16 %v311
    %v730 = vunpack.c.l.b16 %v312
    %v731 = vunpack.c.h.b16 %v312
    %v732 = vunpack.c.l.b16 %v313
    %v733 = vunpack.c.h.b16 %v313
    %v734 = vunpack.c.l.b16 %v314
    %v735 = vunpack.c.h.b16 %v314
    %v736 = vunpack.c.l.b16 %v315
    %v737 = vunpack.c.h.b16 %v315
    %v738 = vunpack.c.l.b16 %v316
    %v739 = vunpack.c.h.b16 %v316
    %v740 = vunpack.c.l.b16 %v317
    %v741 = vunpack.c.h.b16 %v317
    %v742 = vunpack.c.l.b16 %v318
    %v743 = vunpack.c.h.b16 %v318
    %v744 = vunpack.c.l.b16 %v319
    %v745 = vunpack.c.h.b16 %v319
    %v746 = vunpack.c.l.b16 %v320
    %v747 = vunpack.c.h.b16 %v320
    %v748 = vunpack.c.l.b16 %v321
    %v749 = vunpack.c.h.b16 %v321
    %v750 = vunpack.c.l.b16 %v322
    %v751 = vunpack.c.h.b16 %v322
    %v752 = vunpack.c.l.b16 %v323
    %v753 = vunpack.c.h.b16 %v323
    %v754 = vunpack.c.l.b16 %v324
    %v755 = vunpack.c.h.b16 %v324
    %v756 = vunpack.c.l.b16 %v325
    %v757 = vunpack.c.h.b16 %v325
    %v758 = vunpack.c.l.b16 %v326
    %v759 = vunpack.c.h.b16 %v326
    %v760 = vunpack.c.l.b16 %v327
    %v761 = vunpack.c.h.b16 %v327
    %v762 = vunpack.c.l.b16 %v328
    %v763 = vunpack.c.h.b16 %v328
    %v764 = vunpack.c.l.b16 %v329
    %v765 = vunpack.c.h.b16 %v329
    %v766 = vunpack.c.l.b16 %v330
    %v767 = vunpack.c.h.b16 %v330
    %v768 = vunpack.c.l.b16 %v331
    %v769 = vunpack.c.h.b16 %v331
    %v770 = vunpack.c.l.b16 %v332
    %v771 = vunpack.c.h.b16 %v332
    %v772 = vpack.c.b16 %v710, %v708
    %v773 = vpack.c.b16 %v711, %v709
    %v774 = vpack.c.b16 %v714, %v712
    %v775 = vpack.c.b16 %v715, %v713
    %v776 = vpack.c.b16 %v718, %v716
    %v777 = vpack.c.b16 %v719, %v717
    %v778 = vpack.c.b16 %v722, %v720
    %v779 = vpack.c.b16 %v723, %v721
    %v780 = vpack.c.b16 %v726, %v724
    %v781 = vpack.c.b16 %v727, %v725
    %v782 = vpack.c.b16 %v730, %v728
    %v783 = vpack.c.b16 %v731, %v729
    %v784 = vpack.c.b16 %v734, %v732
    %v785 = vpack.c.b16 %v735, %v733
    %v786 = vpack.c.b16 %v738, %v736
    %v787 = vpack.c.b16 %v739, %v737
    %v788 = vpack.c.b16 %v742, %v740
    %v789 = vpack.c.b16 %v743, %v741
    %v790 = vpack.c.b16 %v746, %v744
    %v791 = vpack.c.b16 %v747, %v745
    %v792 = vpack.c.b16 %v750, %v748
    %v793 = vpack.c.b16 %v751, %v749
    %v794 = vpack.c.b16 %v754, %v752
    %v795 = vpack.c.b16 %v755, %v753
    %v796 = vpack.c.b16 %v758, %v756
    %v797 = vpack.c.b16 %v759, %v757
    %v798 = vpack.c.b16 %v762, %v760
    %v799 = vpack.c.b16 %v763, %v761
    %v800 = vpack.c.b16 %v766, %v764
    %v801 = vpack.c.b16 %v767, %v765
    %v802 = vpack.c.b16 %v770, %v768
    %v803 = vpack.c.b16 %v771, %v769
    %836 = vmatprep.subr.bf16.mxu0 %v773
    %837 = vmatpush1.bf16.msra.mxu0 %v772
    %838 = vmatprep.subr.bf16.mxu0 %v775
    %839 = vmatpush1.bf16.msra.mxu0 %v774
    %840 = vmatprep.subr.bf16.mxu0 %v777
    %841 = vmatpush1.bf16.msra.mxu0 %v776
    %842 = vmatprep.subr.bf16.mxu0 %v779
    %843 = vmatpush1.bf16.msra.mxu0 %v778
    %844 = vmatprep.subr.bf16.mxu0 %v781
    %845 = vmatpush1.bf16.msra.mxu0 %v780
    %846 = vmatprep.subr.bf16.mxu0 %v783
    %847 = vmatpush1.bf16.msra.mxu0 %v782
    %848 = vmatprep.subr.bf16.mxu0 %v785
    %849 = vmatpush1.bf16.msra.mxu0 %v784
    %850 = vmatprep.subr.bf16.mxu0 %v787
    %851 = vmatpush1.bf16.msra.mxu0 %v786
    %852 = vmatprep.subr.bf16.mxu0 %v789
    %853 = vmatpush1.bf16.msra.mxu0 %v788
    %854 = vmatprep.subr.bf16.mxu0 %v791
    %855 = vmatpush1.bf16.msra.mxu0 %v790
    %856 = vmatprep.subr.bf16.mxu0 %v793
    %857 = vmatpush1.bf16.msra.mxu0 %v792
    %858 = vmatprep.subr.bf16.mxu0 %v795
    %859 = vmatpush1.bf16.msra.mxu0 %v794
    %860 = vmatprep.subr.bf16.mxu0 %v797
    %861 = vmatpush1.bf16.msra.mxu0 %v796
    %862 = vmatprep.subr.bf16.mxu0 %v799
    %863 = vmatpush1.bf16.msra.mxu0 %v798
    %864 = vmatprep.subr.bf16.mxu0 %v801
    %865 = vmatpush1.bf16.msra.mxu0 %v800
    %866 = vmatprep.subr.bf16.mxu0 %v803
    %867 = vmatpush1.bf16.msra.mxu0 %v802
    %868 = vmatprep.mubr.bf16.mxu0 %v675
    %869 = vmatmul.mubr.bf16.gmra.mrb[0].mxu0 %v674
    %v870 = vpop.f32.mrb[0].mxu0
    %v871 = vadd.f32 0.0, %v870
    %v872 = vpop.f32.mrb[0].mxu0
    %v873 = vadd.f32 0.0, %v872
    %v874 = vpop.f32.mrb[0].mxu0
    %v875 = vadd.f32 0.0, %v874
    %v876 = vpop.f32.mrb[0].mxu0
    %v877 = vadd.f32 0.0, %v876
    %878 = vdwg.mxu0
    %v879 = vadd.f32 %v557, %v871
    %v880 = vadd.f32 %v559, %v873
    %v881 = vadd.f32 %v561, %v875
    %v882 = vadd.f32 %v563, %v877
    %v884 = vlaneseq
    %v885 = vshrl.u32 %v884, 7
    %v886 = vsub.s32 0, %v885
    %v887 = vrot.slane %v333, %v886
    %v888 = vlaneseq
    %v889 = vshrl.u32 %v888, 7
    %v890 = vsub.s32 1, %v889
    %v891 = vrot.slane %v333, %v890
    %v894 = vadd.f32 %v879, %v887
    %v895 = vadd.f32 %v880, %v891
    %v896 = vadd.f32 %v881, %v887
    %v897 = vadd.f32 %v882, %v891
    %v898 = vadd.f32 %v894, %v895
    %899 = vadd.xlane.f32.xlu0 %v898
    %v900 = vpop.xlane.xlu0 %899
    %v901 = vadd.f32 %v896, %v897
    %902 = vadd.xlane.f32.xlu0 %v901
    %v903 = vpop.xlane.xlu0 %902
    %v904 = vmul.f32 %v900, %v571
    %v905 = vmul.f32 %v903, %v571
    %v906 = vsub.f32 %v894, %v904
    %v907 = vsub.f32 %v895, %v904
    %v908 = vsub.f32 %v896, %v905
    %v909 = vsub.f32 %v897, %v905
    %v910 = vmul.f32 %v906, %v906
    %v911 = vmul.f32 %v907, %v907
    %v912 = vmul.f32 %v908, %v908
    %v913 = vmul.f32 %v909, %v909
    %v914 = vadd.f32 %v910, %v911
    %915 = vadd.xlane.f32.xlu0 %v914
    %v916 = vpop.xlane.xlu0 %915
    %v917 = vadd.f32 %v912, %v913
    %918 = vadd.xlane.f32.xlu0 %v917
    %v919 = vpop.xlane.xlu0 %918
    %v920 = vmul.f32 %v916, %v571
    %v921 = vmul.f32 %v919, %v571
    %v922 = vadd.f32 %v920, 1e-05
    %v923 = vadd.f32 %v921, 1e-05
    %v924 = vrsqrt.pop %v922
    %v925 = vrsqrt.pop %v923
    %v926 = vmul.f32 %v906, %v924
    %v927 = vmul.f32 %v907, %v924
    %v928 = vmul.f32 %v908, %v925
    %v929 = vmul.f32 %v909, %v925
    %v930 = vpack.c.bf16 %v928, %v926
    %v931 = vpack.c.bf16 %v929, %v927
    %v933 = vlaneseq
    %v934 = vshrl.u32 %v933, 7
    %v935 = vsub.s32 0, %v934
    %v936 = vrot.slane %v334, %v935
    %v937 = vlaneseq
    %v938 = vshrl.u32 %v937, 7
    %v939 = vsub.s32 1, %v938
    %v940 = vrot.slane %v334, %v939
    %v943 = vpack.c.bf16 %v936, %v936
    %v944 = vpack.c.bf16 %v940, %v940
    %v946 = vpack.i.b16 %v943, %v943
    %v948 = vlaneseq
    %v949 = vshrl.u32 %v948, 7
    %v950 = vsub.s32 0, %v949
    %v951 = vrot.slane %v946, %v950
    %v953 = vpack.i.b16 %v944, %v944
    %v955 = vlaneseq
    %v956 = vshrl.u32 %v955, 7
    %v957 = vsub.s32 0, %v956
    %v958 = vrot.slane %v953, %v957
    %v959 = vmul.bf16 %v930, %v951
    %v960 = vmul.bf16 %v931, %v958
    %v962 = vlaneseq
    %v963 = vshrl.u32 %v962, 7
    %v964 = vsub.s32 0, %v963
    %v965 = vrot.slane %v335, %v964
    %v966 = vlaneseq
    %v967 = vshrl.u32 %v966, 7
    %v968 = vsub.s32 1, %v967
    %v969 = vrot.slane %v335, %v968
    %v972 = vpack.c.bf16 %v965, %v965
    %v973 = vpack.c.bf16 %v969, %v969
    %v975 = vpack.i.b16 %v972, %v972
    %v977 = vlaneseq
    %v978 = vshrl.u32 %v977, 7
    %v979 = vsub.s32 0, %v978
    %v980 = vrot.slane %v975, %v979
    %v982 = vpack.i.b16 %v973, %v973
    %v984 = vlaneseq
    %v985 = vshrl.u32 %v984, 7
    %v986 = vsub.s32 0, %v985
    %v987 = vrot.slane %v982, %v986
    %v988 = vadd.bf16 %v959, %v980
    %v989 = vadd.bf16 %v960, %v987
    %v990 = vmul.bf16 %v988, %v988
    %v991 = vmul.bf16 %v989, %v989
    %v992 = vmul.bf16 %v988, %v990
    %v993 = vmul.bf16 %v989, %v991
    %v994 = vmul.bf16 %v992, 1027030327
    %v995 = vmul.bf16 %v993, 1027030327
    %v996 = vadd.bf16 %v988, %v994
    %v997 = vadd.bf16 %v989, %v995
    %v998 = vmul.bf16 %v996, 1061961548
    %v999 = vmul.bf16 %v997, 1061961548
    %v1000 = vtanh.bf16.pop %v998
    %v1001 = vtanh.bf16.pop %v999
    %v1002 = vadd.bf16 %v1000, 1065369472
    %v1003 = vadd.bf16 %v1001, 1065369472
    %v1004 = vmul.bf16 %v1002, 1056980736
    %v1005 = vmul.bf16 %v1003, 1056980736
    %v1006 = vmul.bf16 %v988, %v1004
    %v1007 = vmul.bf16 %v989, %v1005
    %v1040 = vunpack.c.l.b16 %v336
    %v1041 = vunpack.c.h.b16 %v336
    %v1042 = vunpack.c.l.b16 %v337
    %v1043 = vunpack.c.h.b16 %v337
    %v1044 = vunpack.c.l.b16 %v338
    %v1045 = vunpack.c.h.b16 %v338
    %v1046 = vunpack.c.l.b16 %v339
    %v1047 = vunpack.c.h.b16 %v339
    %v1048 = vunpack.c.l.b16 %v340
    %v1049 = vunpack.c.h.b16 %v340
    %v1050 = vunpack.c.l.b16 %v341
    %v1051 = vunpack.c.h.b16 %v341
    %v1052 = vunpack.c.l.b16 %v342
    %v1053 = vunpack.c.h.b16 %v342
    %v1054 = vunpack.c.l.b16 %v343
    %v1055 = vunpack.c.h.b16 %v343
    %v1056 = vunpack.c.l.b16 %v344
    %v1057 = vunpack.c.h.b16 %v344
    %v1058 = vunpack.c.l.b16 %v345
    %v1059 = vunpack.c.h.b16 %v345
    %v1060 = vunpack.c.l.b16 %v346
    %v1061 = vunpack.c.h.b16 %v346
    %v1062 = vunpack.c.l.b16 %v347
    %v1063 = vunpack.c.h.b16 %v347
    %v1064 = vunpack.c.l.b16 %v348
    %v1065 = vunpack.c.h.b16 %v348
    %v1066 = vunpack.c.l.b16 %v349
    %v1067 = vunpack.c.h.b16 %v349
    %v1068 = vunpack.c.l.b16 %v350
    %v1069 = vunpack.c.h.b16 %v350
    %v1070 = vunpack.c.l.b16 %v351
    %v1071 = vunpack.c.h.b16 %v351
    %v1072 = vunpack.c.l.b16 %v352
    %v1073 = vunpack.c.h.b16 %v352
    %v1074 = vunpack.c.l.b16 %v353
    %v1075 = vunpack.c.h.b16 %v353
    %v1076 = vunpack.c.l.b16 %v354
    %v1077 = vunpack.c.h.b16 %v354
    %v1078 = vunpack.c.l.b16 %v355
    %v1079 = vunpack.c.h.b16 %v355
    %v1080 = vunpack.c.l.b16 %v356
    %v1081 = vunpack.c.h.b16 %v356
    %v1082 = vunpack.c.l.b16 %v357
    %v1083 = vunpack.c.h.b16 %v357
    %v1084 = vunpack.c.l.b16 %v358
    %v1085 = vunpack.c.h.b16 %v358
    %v1086 = vunpack.c.l.b16 %v359
    %v1087 = vunpack.c.h.b16 %v359
    %v1088 = vunpack.c.l.b16 %v360
    %v1089 = vunpack.c.h.b16 %v360
    %v1090 = vunpack.c.l.b16 %v361
    %v1091 = vunpack.c.h.b16 %v361
    %v1092 = vunpack.c.l.b16 %v362
    %v1093 = vunpack.c.h.b16 %v362
    %v1094 = vunpack.c.l.b16 %v363
    %v1095 = vunpack.c.h.b16 %v363
    %v1096 = vunpack.c.l.b16 %v364
    %v1097 = vunpack.c.h.b16 %v364
    %v1098 = vunpack.c.l.b16 %v365
    %v1099 = vunpack.c.h.b16 %v365
    %v1100 = vunpack.c.l.b16 %v366
    %v1101 = vunpack.c.h.b16 %v366
    %v1102 = vunpack.c.l.b16 %v367
    %v1103 = vunpack.c.h.b16 %v367
    %v1104 = vpack.c.b16 %v1042, %v1040
    %v1105 = vpack.c.b16 %v1043, %v1041
    %v1106 = vpack.c.b16 %v1046, %v1044
    %v1107 = vpack.c.b16 %v1047, %v1045
    %v1108 = vpack.c.b16 %v1050, %v1048
    %v1109 = vpack.c.b16 %v1051, %v1049
    %v1110 = vpack.c.b16 %v1054, %v1052
    %v1111 = vpack.c.b16 %v1055, %v1053
    %v1112 = vpack.c.b16 %v1058, %v1056
    %v1113 = vpack.c.b16 %v1059, %v1057
    %v1114 = vpack.c.b16 %v1062, %v1060
    %v1115 = vpack.c.b16 %v1063, %v1061
    %v1116 = vpack.c.b16 %v1066, %v1064
    %v1117 = vpack.c.b16 %v1067, %v1065
    %v1118 = vpack.c.b16 %v1070, %v1068
    %v1119 = vpack.c.b16 %v1071, %v1069
    %v1120 = vpack.c.b16 %v1074, %v1072
    %v1121 = vpack.c.b16 %v1075, %v1073
    %v1122 = vpack.c.b16 %v1078, %v1076
    %v1123 = vpack.c.b16 %v1079, %v1077
    %v1124 = vpack.c.b16 %v1082, %v1080
    %v1125 = vpack.c.b16 %v1083, %v1081
    %v1126 = vpack.c.b16 %v1086, %v1084
    %v1127 = vpack.c.b16 %v1087, %v1085
    %v1128 = vpack.c.b16 %v1090, %v1088
    %v1129 = vpack.c.b16 %v1091, %v1089
    %v1130 = vpack.c.b16 %v1094, %v1092
    %v1131 = vpack.c.b16 %v1095, %v1093
    %v1132 = vpack.c.b16 %v1098, %v1096
    %v1133 = vpack.c.b16 %v1099, %v1097
    %v1134 = vpack.c.b16 %v1102, %v1100
    %v1135 = vpack.c.b16 %v1103, %v1101
    %1168 = vmatprep.subr.bf16.mxu0 %v1105
    %1169 = vmatpush1.bf16.msra.mxu0 %v1104
    %1170 = vmatprep.subr.bf16.mxu0 %v1107
    %1171 = vmatpush1.bf16.msra.mxu0 %v1106
    %1172 = vmatprep.subr.bf16.mxu0 %v1109
    %1173 = vmatpush1.bf16.msra.mxu0 %v1108
    %1174 = vmatprep.subr.bf16.mxu0 %v1111
    %1175 = vmatpush1.bf16.msra.mxu0 %v1110
    %1176 = vmatprep.subr.bf16.mxu0 %v1113
    %1177 = vmatpush1.bf16.msra.mxu0 %v1112
    %1178 = vmatprep.subr.bf16.mxu0 %v1115
    %1179 = vmatpush1.bf16.msra.mxu0 %v1114
    %1180 = vmatprep.subr.bf16.mxu0 %v1117
    %1181 = vmatpush1.bf16.msra.mxu0 %v1116
    %1182 = vmatprep.subr.bf16.mxu0 %v1119
    %1183 = vmatpush1.bf16.msra.mxu0 %v1118
    %1184 = vmatprep.subr.bf16.mxu0 %v1121
    %1185 = vmatpush1.bf16.msra.mxu0 %v1120
    %1186 = vmatprep.subr.bf16.mxu0 %v1123
    %1187 = vmatpush1.bf16.msra.mxu0 %v1122
    %1188 = vmatprep.subr.bf16.mxu0 %v1125
    %1189 = vmatpush1.bf16.msra.mxu0 %v1124
    %1190 = vmatprep.subr.bf16.mxu0 %v1127
    %1191 = vmatpush1.bf16.msra.mxu0 %v1126
    %1192 = vmatprep.subr.bf16.mxu0 %v1129
    %1193 = vmatpush1.bf16.msra.mxu0 %v1128
    %1194 = vmatprep.subr.bf16.mxu0 %v1131
    %1195 = vmatpush1.bf16.msra.mxu0 %v1130
    %1196 = vmatprep.subr.bf16.mxu0 %v1133
    %1197 = vmatpush1.bf16.msra.mxu0 %v1132
    %1198 = vmatprep.subr.bf16.mxu0 %v1135
    %1199 = vmatpush1.bf16.msra.mxu0 %v1134
    %1200 = vmatprep.mubr.bf16.mxu0 %v1007
    %1201 = vmatmul.mubr.bf16.gmra.mrb[0].mxu0 %v1006
    %v1202 = vpop.f32.mrb[0].mxu0
    %v1203 = vadd.f32 0.0, %v1202
    %v1204 = vpop.f32.mrb[0].mxu0
    %v1205 = vadd.f32 0.0, %v1204
    %v1206 = vpop.f32.mrb[0].mxu0
    %v1207 = vadd.f32 0.0, %v1206
    %v1208 = vpop.f32.mrb[0].mxu0
    %v1209 = vadd.f32 0.0, %v1208
    %1210 = vdwg.mxu0
    %v1211 = vadd.f32 %v894, %v1203
    %v1212 = vadd.f32 %v895, %v1205
    %v1213 = vadd.f32 %v896, %v1207
    %v1214 = vadd.f32 %v897, %v1209
    %v1216 = vlaneseq
    %v1217 = vshrl.u32 %v1216, 7
    %v1218 = vsub.s32 0, %v1217
    %v1219 = vrot.slane %v368, %v1218
    %v1220 = vlaneseq
    %v1221 = vshrl.u32 %v1220, 7
    %v1222 = vsub.s32 1, %v1221
    %v1223 = vrot.slane %v368, %v1222
    %v1226 = vadd.f32 %v1211, %v1219
    %v1227 = vadd.f32 %v1212, %v1223
    %v1228 = vadd.f32 %v1213, %v1219
    %v1229 = vadd.f32 %v1214, %v1223
    %v1230 = vadd.f32 %v1226, %v1227
    %1231 = vadd.xlane.f32.xlu0 %v1230
    %v1232 = vpop.xlane.xlu0 %1231
    %v1233 = vadd.f32 %v1228, %v1229
    %1234 = vadd.xlane.f32.xlu0 %v1233
    %v1235 = vpop.xlane.xlu0 %1234
    %v1236 = vmul.f32 %v1232, %v571
    %v1237 = vmul.f32 %v1235, %v571
    %v1238 = vsub.f32 %v1226, %v1236
    %v1239 = vsub.f32 %v1227, %v1236
    %v1240 = vsub.f32 %v1228, %v1237
    %v1241 = vsub.f32 %v1229, %v1237
    %v1242 = vmul.f32 %v1238, %v1238
    %v1243 = vmul.f32 %v1239, %v1239
    %v1244 = vmul.f32 %v1240, %v1240
    %v1245 = vmul.f32 %v1241, %v1241
    %v1246 = vadd.f32 %v1242, %v1243
    %1247 = vadd.xlane.f32.xlu0 %v1246
    %v1248 = vpop.xlane.xlu0 %1247
    %v1249 = vadd.f32 %v1244, %v1245
    %1250 = vadd.xlane.f32.xlu0 %v1249
    %v1251 = vpop.xlane.xlu0 %1250
    %v1252 = vmul.f32 %v1248, %v571
    %v1253 = vmul.f32 %v1251, %v571
    %v1254 = vadd.f32 %v1252, 1e-05
    %v1255 = vadd.f32 %v1253, 1e-05
    %v1256 = vrsqrt.pop %v1254
    %v1257 = vrsqrt.pop %v1255
    %v1258 = vmul.f32 %v1238, %v1256
    %v1259 = vmul.f32 %v1239, %v1256
    %v1260 = vmul.f32 %v1240, %v1257
    %v1261 = vmul.f32 %v1241, %v1257
    %v1262 = vpack.c.bf16 %v1260, %v1258
    %v1263 = vpack.c.bf16 %v1261, %v1259
    %v1265 = vlaneseq
    %v1266 = vshrl.u32 %v1265, 7
    %v1267 = vsub.s32 0, %v1266
    %v1268 = vrot.slane %v369, %v1267
    %v1269 = vlaneseq
    %v1270 = vshrl.u32 %v1269, 7
    %v1271 = vsub.s32 1, %v1270
    %v1272 = vrot.slane %v369, %v1271
    %v1275 = vpack.c.bf16 %v1268, %v1268
    %v1276 = vpack.c.bf16 %v1272, %v1272
    %v1278 = vpack.i.b16 %v1275, %v1275
    %v1280 = vlaneseq
    %v1281 = vshrl.u32 %v1280, 7
    %v1282 = vsub.s32 0, %v1281
    %v1283 = vrot.slane %v1278, %v1282
    %v1285 = vpack.i.b16 %v1276, %v1276
    %v1287 = vlaneseq
    %v1288 = vshrl.u32 %v1287, 7
    %v1289 = vsub.s32 0, %v1288
    %v1290 = vrot.slane %v1285, %v1289
    %v1291 = vmul.bf16 %v1262, %v1283
    %v1292 = vmul.bf16 %v1263, %v1290
    %v1294 = vlaneseq
    %v1295 = vshrl.u32 %v1294, 7
    %v1296 = vsub.s32 0, %v1295
    %v1297 = vrot.slane %v370, %v1296
    %v1298 = vlaneseq
    %v1299 = vshrl.u32 %v1298, 7
    %v1300 = vsub.s32 1, %v1299
    %v1301 = vrot.slane %v370, %v1300
    %v1304 = vpack.c.bf16 %v1297, %v1297
    %v1305 = vpack.c.bf16 %v1301, %v1301
    %v1307 = vpack.i.b16 %v1304, %v1304
    %v1309 = vlaneseq
    %v1310 = vshrl.u32 %v1309, 7
    %v1311 = vsub.s32 0, %v1310
    %v1312 = vrot.slane %v1307, %v1311
    %v1314 = vpack.i.b16 %v1305, %v1305
    %v1316 = vlaneseq
    %v1317 = vshrl.u32 %v1316, 7
    %v1318 = vsub.s32 0, %v1317
    %v1319 = vrot.slane %v1314, %v1318
    %v1320 = vadd.bf16 %v1291, %v1312
    %v1321 = vadd.bf16 %v1292, %v1319
    %v1322 = vmul.bf16 %v1320, %v1320
    %v1323 = vmul.bf16 %v1321, %v1321
    %v1324 = vmul.bf16 %v1320, %v1322
    %v1325 = vmul.bf16 %v1321, %v1323
    %v1326 = vmul.bf16 %v1324, 1027030327
    %v1327 = vmul.bf16 %v1325, 1027030327
    %v1328 = vadd.bf16 %v1320, %v1326
    %v1329 = vadd.bf16 %v1321, %v1327
    %v1330 = vmul.bf16 %v1328, 1061961548
    %v1331 = vmul.bf16 %v1329, 1061961548
    %v1332 = vtanh.bf16.pop %v1330
    %v1333 = vtanh.bf16.pop %v1331
    %v1334 = vadd.bf16 %v1332, 1065369472
    %v1335 = vadd.bf16 %v1333, 1065369472
    %v1336 = vmul.bf16 %v1334, 1056980736
    %v1337 = vmul.bf16 %v1335, 1056980736
    %v1338 = vmul.bf16 %v1320, %v1336
    %v1339 = vmul.bf16 %v1321, %v1337
    %v1341 = vlaneseq
    %v1342 = vshrl.u32 %v1341, 7
    %v1343 = vsub.s32 0, %v1342
    %v1344 = vrot.slane %v403, %v1343
    %v1378 = vunpack.c.l.b16 %v371
    %v1379 = vunpack.c.l.b16 %v372
    %v1380 = vunpack.c.l.b16 %v373
    %v1381 = vunpack.c.l.b16 %v374
    %v1382 = vunpack.c.l.b16 %v375
    %v1383 = vunpack.c.l.b16 %v376
    %v1384 = vunpack.c.l.b16 %v377
    %v1385 = vunpack.c.l.b16 %v378
    %v1386 = vunpack.c.l.b16 %v379
    %v1387 = vunpack.c.l.b16 %v380
    %v1388 = vunpack.c.l.b16 %v381
    %v1389 = vunpack.c.l.b16 %v382
    %v1390 = vunpack.c.l.b16 %v383
    %v1391 = vunpack.c.l.b16 %v384
    %v1392 = vunpack.c.l.b16 %v385
    %v1393 = vunpack.c.l.b16 %v386
    %v1394 = vunpack.c.l.b16 %v387
    %v1395 = vunpack.c.l.b16 %v388
    %v1396 = vunpack.c.l.b16 %v389
    %v1397 = vunpack.c.l.b16 %v390
    %v1398 = vunpack.c.l.b16 %v391
    %v1399 = vunpack.c.l.b16 %v392
    %v1400 = vunpack.c.l.b16 %v393
    %v1401 = vunpack.c.l.b16 %v394
    %v1402 = vunpack.c.l.b16 %v395
    %v1403 = vunpack.c.l.b16 %v396
    %v1404 = vunpack.c.l.b16 %v397
    %v1405 = vunpack.c.l.b16 %v398
    %v1406 = vunpack.c.l.b16 %v399
    %v1407 = vunpack.c.l.b16 %v400
    %v1408 = vunpack.c.l.b16 %v401
    %v1409 = vunpack.c.l.b16 %v402
    %v1410 = vpack.c.b16 %v1379, %v1378
    %v1411 = vpack.c.b16 %v1381, %v1380
    %v1412 = vpack.c.b16 %v1383, %v1382
    %v1413 = vpack.c.b16 %v1385, %v1384
    %v1414 = vpack.c.b16 %v1387, %v1386
    %v1415 = vpack.c.b16 %v1389, %v1388
    %v1416 = vpack.c.b16 %v1391, %v1390
    %v1417 = vpack.c.b16 %v1393, %v1392
    %v1418 = vpack.c.b16 %v1395, %v1394
    %v1419 = vpack.c.b16 %v1397, %v1396
    %v1420 = vpack.c.b16 %v1399, %v1398
    %v1421 = vpack.c.b16 %v1401, %v1400
    %v1422 = vpack.c.b16 %v1403, %v1402
    %v1423 = vpack.c.b16 %v1405, %v1404
    %v1424 = vpack.c.b16 %v1407, %v1406
    %v1425 = vpack.c.b16 %v1409, %v1408
    %1442 = vmatprep.subr.bf16.mxu0 0
    %1443 = vmatpush1.bf16.msra.mxu0 %v1410
    %1444 = vmatprep.subr.bf16.mxu0 0
    %1445 = vmatpush1.bf16.msra.mxu0 %v1411
    %1446 = vmatprep.subr.bf16.mxu0 0
    %1447 = vmatpush1.bf16.msra.mxu0 %v1412
    %1448 = vmatprep.subr.bf16.mxu0 0
    %1449 = vmatpush1.bf16.msra.mxu0 %v1413
    %1450 = vmatprep.subr.bf16.mxu0 0
    %1451 = vmatpush1.bf16.msra.mxu0 %v1414
    %1452 = vmatprep.subr.bf16.mxu0 0
    %1453 = vmatpush1.bf16.msra.mxu0 %v1415
    %1454 = vmatprep.subr.bf16.mxu0 0
    %1455 = vmatpush1.bf16.msra.mxu0 %v1416
    %1456 = vmatprep.subr.bf16.mxu0 0
    %1457 = vmatpush1.bf16.msra.mxu0 %v1417
    %1458 = vmatprep.subr.bf16.mxu0 0
    %1459 = vmatpush1.bf16.msra.mxu0 %v1418
    %1460 = vmatprep.subr.bf16.mxu0 0
    %1461 = vmatpush1.bf16.msra.mxu0 %v1419
    %1462 = vmatprep.subr.bf16.mxu0 0
    %1463 = vmatpush1.bf16.msra.mxu0 %v1420
    %1464 = vmatprep.subr.bf16.mxu0 0
    %1465 = vmatpush1.bf16.msra.mxu0 %v1421
    %1466 = vmatprep.subr.bf16.mxu0 0
    %1467 = vmatpush1.bf16.msra.mxu0 %v1422
    %1468 = vmatprep.subr.bf16.mxu0 0
    %1469 = vmatpush1.bf16.msra.mxu0 %v1423
    %1470 = vmatprep.subr.bf16.mxu0 0
    %1471 = vmatpush1.bf16.msra.mxu0 %v1424
    %1472 = vmatprep.subr.bf16.mxu0 0
    %1473 = vmatpush1.bf16.msra.mxu0 %v1425
    %1474 = vmatprep.mubr.bf16.mxu0 %v1339
    %1475 = vmatmul.mubr.bf16.gmra.mrb[0].mxu0 %v1338
    %v1476 = vpop.f32.mrb[0].mxu0
    %v1477 = vadd.f32 %v1344, %v1476
    %v1478 = vpop.f32.mrb[0].mxu0
    %v1479 = vpop.f32.mrb[0].mxu0
    %v1480 = vadd.f32 %v1344, %v1479
    %v1481 = vpop.f32.mrb[0].mxu0
    %1482 = vdwg.mxu0
    %1483 = vadd.xlane.f32.xlu0 %v1477
    %v1484 = vpop.xlane.xlu0 %1483
    %1485 = vadd.xlane.f32.xlu0 %v1480
    %v1486 = vpop.xlane.xlu0 %1485
    %v1487 = vrcp.pop 128.0
    %v1488 = vmul.f32 %v1484, %v1487
    %v1489 = vmul.f32 %v1486, %v1487
    %v1490 = vsub.f32 %v1477, %v1488
    %v1491 = vsub.f32 %v1480, %v1489
    %v1492 = vmul.f32 %v1490, %v1490
    %v1493 = vmul.f32 %v1491, %v1491
    %1494 = vadd.xlane.f32.xlu0 %v1492
    %v1495 = vpop.xlane.xlu0 %1494
    %1496 = vadd.xlane.f32.xlu0 %v1493
    %v1497 = vpop.xlane.xlu0 %1496
    %v1498 = vmul.f32 %v1495, %v1487
    %v1499 = vmul.f32 %v1497, %v1487
    %v1500 = vadd.f32 %v1498, 1e-05
    %v1501 = vadd.f32 %v1499, 1e-05
    %v1502 = vrsqrt.pop %v1500
    %v1503 = vrsqrt.pop %v1501
    %v1504 = vmul.f32 %v1490, %v1502
    %v1505 = vmul.f32 %v1491, %v1503
    %v1506 = vpack.c.bf16 %v1505, %v1504
    %v1507 = vpack.c.bf16 %v404, %v404
    %v1509 = vpack.i.b16 %v1507, %v1507
    %v1511 = vlaneseq
    %v1512 = vshrl.u32 %v1511, 7
    %v1513 = vsub.s32 0, %v1512
    %v1514 = vrot.slane %v1509, %v1513
    %v1515 = vmul.bf16 %v1506, %v1514
    %v1516 = vpack.c.bf16 %v405, %v405
    %v1518 = vpack.i.b16 %v1516, %v1516
    %v1520 = vlaneseq
    %v1521 = vshrl.u32 %v1520, 7
    %v1522 = vsub.s32 0, %v1521
    %v1523 = vrot.slane %v1518, %v1522
    %v1524 = vadd.bf16 %v1515, %v1523
    %v1525 = vmul.bf16 %v1524, %v1524
    %v1526 = vmul.bf16 %v1524, %v1525
    %v1527 = vmul.bf16 %v1526, 1027030327
    %v1528 = vadd.bf16 %v1524, %v1527
    %v1529 = vmul.bf16 %v1528, 1061961548
    %v1530 = vtanh.bf16.pop %v1529
    %v1531 = vadd.bf16 %v1530, 1065369472
    %v1532 = vmul.bf16 %v1531, 1056980736
    %v1533 = vmul.bf16 %v1524, %v1532
    %v1550 = vunpack.c.l.b16 %v406
    %v1551 = vunpack.c.l.b16 %v407
    %v1552 = vunpack.c.l.b16 %v408
    %v1553 = vunpack.c.l.b16 %v409
    %v1554 = vunpack.c.l.b16 %v410
    %v1555 = vunpack.c.l.b16 %v411
    %v1556 = vunpack.c.l.b16 %v412
    %v1557 = vunpack.c.l.b16 %v413
    %v1558 = vunpack.c.l.b16 %v414
    %v1559 = vunpack.c.l.b16 %v415
    %v1560 = vunpack.c.l.b16 %v416
    %v1561 = vunpack.c.l.b16 %v417
    %v1562 = vunpack.c.l.b16 %v418
    %v1563 = vunpack.c.l.b16 %v419
    %v1564 = vunpack.c.l.b16 %v420
    %v1565 = vunpack.c.l.b16 %v421
    %v1566 = vpack.c.b16 %v1551, %v1550
    %v1567 = vpack.c.b16 %v1553, %v1552
    %v1568 = vpack.c.b16 %v1555, %v1554
    %v1569 = vpack.c.b16 %v1557, %v1556
    %v1570 = vpack.c.b16 %v1559, %v1558
    %v1571 = vpack.c.b16 %v1561, %v1560
    %v1572 = vpack.c.b16 %v1563, %v1562
    %v1573 = vpack.c.b16 %v1565, %v1564
    %1582 = vmatprep.subr.bf16.mxu0 0
    %1583 = vmatpush1.bf16.msra.mxu0 %v1566
    %1584 = vmatprep.subr.bf16.mxu0 0
    %1585 = vmatpush1.bf16.msra.mxu0 %v1567
    %1586 = vmatprep.subr.bf16.mxu0 0
    %1587 = vmatpush1.bf16.msra.mxu0 %v1568
    %1588 = vmatprep.subr.bf16.mxu0 0
    %1589 = vmatpush1.bf16.msra.mxu0 %v1569
    %1590 = vmatprep.subr.bf16.mxu0 0
    %1591 = vmatpush1.bf16.msra.mxu0 %v1570
    %1592 = vmatprep.subr.bf16.mxu0 0
    %1593 = vmatpush1.bf16.msra.mxu0 %v1571
    %1594 = vmatprep.subr.bf16.mxu0 0
    %1595 = vmatpush1.bf16.msra.mxu0 %v1572
    %1596 = vmatprep.subr.bf16.mxu0 0
    %1597 = vmatpush1.bf16.msra.mxu0 %v1573
    %1598 = vmatprep.subr.bf16.mxu0 0
    %1599 = vmatpush1.bf16.msra.mxu0 0
    %1600 = vmatprep.subr.bf16.mxu0 0
    %1601 = vmatpush1.bf16.msra.mxu0 0
    %1602 = vmatprep.subr.bf16.mxu0 0
    %1603 = vmatpush1.bf16.msra.mxu0 0
    %1604 = vmatprep.subr.bf16.mxu0 0
    %1605 = vmatpush1.bf16.msra.mxu0 0
    %1606 = vmatprep.subr.bf16.mxu0 0
    %1607 = vmatpush1.bf16.msra.mxu0 0
    %1608 = vmatprep.subr.bf16.mxu0 0
    %1609 = vmatpush1.bf16.msra.mxu0 0
    %1610 = vmatprep.subr.bf16.mxu0 0
    %1611 = vmatpush1.bf16.msra.mxu0 0
    %1612 = vmatprep.subr.bf16.mxu0 0
    %1613 = vmatpush1.bf16.msra.mxu0 0
    %1614 = vmatprep.mubr.bf16.mxu0 0
    %1615 = vmatmul.mubr.bf16.gmra.mrb[0].mxu0 %v1533
    %v1616 = vpop.f32.mrb[0].mxu0
    %v1617 = vadd.f32 0.0, %v1616
    %v1618 = vpop.f32.mrb[0].mxu0
    %v1619 = vpop.f32.mrb[0].mxu0
    %v1620 = vadd.f32 0.0, %v1619
    %v1621 = vpop.f32.mrb[0].mxu0
    %1622 = vdwg.mxu0
    %v1623 = vadd.f32 %v1477, %v1617
    %v1624 = vadd.f32 %v1480, %v1620
    %v1626 = vlaneseq
    %v1627 = vshrl.u32 %v1626, 7
    %v1628 = vsub.s32 0, %v1627
    %v1629 = vrot.slane %v422, %v1628
    %v1631 = vadd.f32 %v1623, %v1629
    %v1632 = vadd.f32 %v1624, %v1629
    %1633 = vadd.xlane.f32.xlu0 %v1631
    %v1634 = vpop.xlane.xlu0 %1633
    %1635 = vadd.xlane.f32.xlu0 %v1632
    %v1636 = vpop.xlane.xlu0 %1635
    %v1637 = vmul.f32 %v1634, %v1487
    %v1638 = vmul.f32 %v1636, %v1487
    %v1639 = vsub.f32 %v1631, %v1637
    %v1640 = vsub.f32 %v1632, %v1638
    %v1641 = vmul.f32 %v1639, %v1639
    %v1642 = vmul.f32 %v1640, %v1640
    %1643 = vadd.xlane.f32.xlu0 %v1641
    %v1644 = vpop.xlane.xlu0 %1643
    %1645 = vadd.xlane.f32.xlu0 %v1642
    %v1646 = vpop.xlane.xlu0 %1645
    %v1647 = vmul.f32 %v1644, %v1487
    %v1648 = vmul.f32 %v1646, %v1487
    %v1649 = vadd.f32 %v1647, 1e-05
    %v1650 = vadd.f32 %v1648, 1e-05
    %v1651 = vrsqrt.pop %v1649
    %v1652 = vrsqrt.pop %v1650
    %v1653 = vmul.f32 %v1639, %v1651
    %v1654 = vmul.f32 %v1640, %v1652
    %v1656 = vlaneseq
    %v1657 = vshrl.u32 %v1656, 7
    %v1658 = vsub.s32 0, %v1657
    %v1659 = vrot.slane %v423, %v1658
    %v1661 = vmul.f32 %v1653, %v1659
    %v1662 = vmul.f32 %v1654, %v1659
    %v1664 = vlaneseq
    %v1665 = vshrl.u32 %v1664, 7
    %v1666 = vsub.s32 0, %v1665
    %v1667 = vrot.slane %v424, %v1666
    %v1669 = vadd.f32 %v1661, %v1667
    %v1670 = vadd.f32 %v1662, %v1667
    %1671 = vst [vmem:[#allocation29] sm:$0xff] %v1669
    %1672 = vst [vmem:[#allocation29 + $0x8] sm:$0xff] %v1670
    // Predicated region
    $region154: #{tpu_custom_call.1} parent=1 // pred_check
      _
    $region155: #{tpu_custom_call.1} parent=1 // pred_check_branch
      %1674 = sbr.rel (0) target = $region157
    $region156: #{tpu_custom_call.1} parent=1 // pred_region
      %s1676 = ssub.s32 256, 256
      %1677 = vsyncadd [#allocation4], %s1676
      %s1678 = sshll.u32 [#allocation29], 4
      %s1679 = int_to_ptr.vmem [resolvable:$true] %s1678
      %1684 = dma.vmem_to_hbm [thread:$0]  %s1679, 256, %s21, [#allocation4], 128, 128, 8
    $region157: #{tpu_custom_call.1} parent=1 // pred_fallthru
      _
    // Predicated region
    $region158: #{tpu_custom_call.1} parent=1 // pred_check
      _
    $region159: #{tpu_custom_call.1} parent=1 // pred_check_branch
      %1686 = sbr.rel (0) target = $region161
    $region160: #{tpu_custom_call.1} parent=1 // pred_region
      %1687 = dma.done [#allocation4], 256
    $region161: #{tpu_custom_call.1} parent=1 // pred_fallthru
      _
    %1688 = vsyncpa [#allocation3], 1
    %1689 = vsyncpa [#allocation6], 1
    %1690 = vsyncpa [#allocation9], 1
    %1691 = vsyncpa [#allocation12], 1
    %1692 = vsyncpa [#allocation15], 1
    %1693 = vsyncpa [#allocation18], 1
    %1694 = vsyncpa [#allocation21], 1
    %1695 = vsyncpa [#allocation24], 1
    %1696 = vsyncpa [#allocation27], 1
    %1697 = vsyncpa [#allocation4], 1

// kernel: tpu_custom_call.1
$region0: #{tpu_custom_call.1}
  #allocation0 [shape = 'u32[]', space=smem, size = 0x4, offset = 0x4, fixed_abs, tag = 'smem constant byte address 0x4 - core index']
  #allocation1 [shape = 'u32[144,128]{1,0:T(1,128)}', space=vmem, size = 0x12000, scoped, tag = 'internal scratch']
  %s0 = inlined_call_operand.hbm [shape: bf16[16,128], index: 0, kind: input, shape index: {}]
  %s1 = inlined_call_operand.hbm [shape: bf16[128,256], index: 1, kind: input, shape index: {}]
  %s2 = inlined_call_operand.hbm [shape: f32[1,256], index: 2, kind: input, shape index: {}]
  %s3 = inlined_call_operand.hbm [shape: f32[1,256], index: 3, kind: input, shape index: {}]
  %s4 = inlined_call_operand.hbm [shape: f32[1,256], index: 4, kind: input, shape index: {}]
  %s5 = inlined_call_operand.hbm [shape: bf16[256,256], index: 5, kind: input, shape index: {}]
  %s6 = inlined_call_operand.hbm [shape: f32[1,256], index: 6, kind: input, shape index: {}]
  %s7 = inlined_call_operand.hbm [shape: f32[1,256], index: 7, kind: input, shape index: {}]
  %s8 = inlined_call_operand.hbm [shape: f32[1,256], index: 8, kind: input, shape index: {}]
  %s9 = inlined_call_operand.hbm [shape: bf16[256,256], index: 9, kind: input, shape index: {}]
  %s10 = inlined_call_operand.hbm [shape: f32[1,256], index: 10, kind: input, shape index: {}]
  %s11 = inlined_call_operand.hbm [shape: f32[1,256], index: 11, kind: input, shape index: {}]
  %s12 = inlined_call_operand.hbm [shape: f32[1,256], index: 12, kind: input, shape index: {}]
  %s13 = inlined_call_operand.hbm [shape: bf16[256,128], index: 13, kind: input, shape index: {}]
  %s14 = inlined_call_operand.hbm [shape: f32[1,128], index: 14, kind: input, shape index: {}]
  %s15 = inlined_call_operand.hbm [shape: f32[1,128], index: 15, kind: input, shape index: {}]
  %s16 = inlined_call_operand.hbm [shape: f32[1,128], index: 16, kind: input, shape index: {}]
  %s17 = inlined_call_operand.vmem [shape: bf16[128,128], index: 17, kind: input, shape index: {}]
  %s18 = inlined_call_operand.vmem [shape: f32[1,128], index: 18, kind: input, shape index: {}]
  %s19 = inlined_call_operand.vmem [shape: f32[1,128], index: 19, kind: input, shape index: {}]
  %s20 = inlined_call_operand.vmem [shape: f32[1,128], index: 20, kind: input, shape index: {}]
  %s21 = inlined_call_operand.hbm [shape: f32[16,128], index: 21, kind: output, shape index: {}]
  %s22 = sld [smem:[#allocation0]]
  $region162: #{tpu_custom_call.1} parent=0
    _
  %s24 = ssub.s32 1, %s22
  %s25 = scalar_select 0, %s24, %s22
  $region1: #{tpu_custom_call.1} parent=0
    #allocation2 [shape = 'u8[4096]{0}', space=vmem, size = 0x1000, scoped, tag = 'input window, operand 0, single buffered']
    #allocation3 [shape = 's32[1]{0}', space=sflag, size = 0x4, scoped, tag = 'scoped memory for tpu_custom_call.1']
    #allocation4 [shape = 's32[1]{0}', space=sflag, size = 0x4, scoped, tag = 'scoped memory for tpu_custom_call.1']
    #allocation5 [shape = 'u8[65536]{0}', space=vmem, size = 0x10000, scoped, tag = 'input window, operand 1, single buffered']
    #allocation6 [shape = 's32[1]{0}', space=sflag, size = 0x4, scoped, tag = 'scoped memory for tpu_custom_call.1']
    #allocation7 [shape = 'u8[1024]{0}', space=vmem, size = 0x400, scoped, tag = 'input window, operand 2, single buffered']
    #allocation8 [shape = 'u8[1024]{0}', space=vmem, size = 0x400, scoped, tag = 'input window, operand 3, single buffered']
    #allocation9 [shape = 's32[1]{0}', space=sflag, size = 0x4, scoped, tag = 'scoped memory for tpu_custom_call.1']
    #allocation10 [shape = 'u8[1024]{0}', space=vmem, size = 0x400, scoped, tag = 'input window, operand 4, single buffered']
    #allocation11 [shape = 'u8[131072]{0}', space=vmem, size = 0x20000, scoped, tag = 'input window, operand 5, single buffered']
    #allocation12 [shape = 's32[1]{0}', space=sflag, size = 0x4, scoped, tag = 'scoped memory for tpu_custom_call.1']
    #allocation13 [shape = 'u8[1024]{0}', space=vmem, size = 0x400, scoped, tag = 'input window, operand 6, single buffered']
    #allocation14 [shape = 'u8[1024]{0}', space=vmem, size = 0x400, scoped, tag = 'input window, operand 7, single buffered']
    #allocation15 [shape = 's32[1]{0}', space=sflag, size = 0x4, scoped, tag = 'scoped memory for tpu_custom_call.1']
    #allocation16 [shape = 'u8[1024]{0}', space=vmem, size = 0x400, scoped, tag = 'input window, operand 8, single buffered']
    #allocation17 [shape = 'u8[131072]{0}', space=vmem, size = 0x20000, scoped, tag = 'input window, operand 9, single buffered']
    #allocation18 [shape = 's32[1]{0}', space=sflag, size = 0x4, scoped, tag = 'scoped memory for tpu_custom_call.1']
    #allocation19 [shape = 'u8[1024]{0}', space=vmem, size = 0x400, scoped, tag = 'input window, operand 10, single buffered']
    #allocation20 [shape = 'u8[1024]{0}', space=vmem, size = 0x400, scoped, tag = 'input window, operand 11, single buffered']
    #allocation21 [shape = 's32[1]{0}', space=sflag, size = 0x4, scoped, tag = 'scoped memory for tpu_custom_call.1']
    #allocation22 [shape = 'u8[1024]{0}', space=vmem, size = 0x400, scoped, tag = 'input window, operand 12, single buffered']
    #allocation23 [shape = 'u8[65536]{0}', space=vmem, size = 0x10000, scoped, tag = 'input window, operand 13, single buffered']
    #allocation24 [shape = 's32[1]{0}', space=sflag, size = 0x4, scoped, tag = 'scoped memory for tpu_custom_call.1']
    #allocation25 [shape = 'u8[512]{0}', space=vmem, size = 0x400, scoped, tag = 'input window, operand 14, single buffered']
    #allocation26 [shape = 'u8[512]{0}', space=vmem, size = 0x400, scoped, tag = 'input window, operand 15, single buffered']
    #allocation27 [shape = 's32[1]{0}', space=sflag, size = 0x4, scoped, tag = 'scoped memory for tpu_custom_call.1']
    #allocation28 [shape = 'u8[512]{0}', space=vmem, size = 0x400, scoped, tag = 'input window, operand 16, single buffered']
    #allocation29 [shape = 'u8[8192]{0}', space=vmem, size = 0x2000, scoped, tag = 'output window, operand 0, single buffered']
    %26 = vsyncpa [#allocation3], 0
    %27 = vsyncpa [#allocation6], 0
    %28 = vsyncpa [#allocation9], 0
    %29 = vsyncpa [#allocation12], 0
    %30 = vsyncpa [#allocation15], 0
    %31 = vsyncpa [#allocation18], 0
    %32 = vsyncpa [#allocation21], 0
    %33 = vsyncpa [#allocation24], 0
    %34 = vsyncpa [#allocation27], 0
    %35 = vsyncpa [#allocation4], 0
    // Predicated region
    $region2: #{tpu_custom_call.1} parent=1 // pred_check
      _
    $region3: #{tpu_custom_call.1} parent=1 // pred_check_branch
      %37 = sbr.rel (0) target = $region5
    $region4: #{tpu_custom_call.1} parent=1 // pred_region
      %s39 = ssub.s32 128, 128
      %40 = vsyncadd [#allocation3], %s39
      %s41 = sshll.u32 [#allocation2], 4
      %s42 = int_to_ptr.vmem [resolvable:$true] %s41
      %47 = dma.hbm_to_vmem [thread:$0]  %s0, 128, %s42, [#allocation3], 64, 64, 4
    $region5: #{tpu_custom_call.1} parent=1 // pred_fallthru
      _
    // Predicated region
    $region6: #{tpu_custom_call.1} parent=1 // pred_check
      _
    $region7: #{tpu_custom_call.1} parent=1 // pred_check_branch
      %49 = sbr.rel (0) target = $region9
    $region8: #{tpu_custom_call.1} parent=1 // pred_region
      %s51 = ssub.s32 2048, 2048
      %52 = vsyncadd [#allocation6], %s51
      %s53 = sshll.u32 [#allocation5], 4
      %s54 = int_to_ptr.vmem [resolvable:$true] %s53
      %59 = dma.hbm_to_vmem [thread:$0]  %s1, 2048, %s54, [#allocation6], 128, 128, 8
    $region9: #{tpu_custom_call.1} parent=1 // pred_fallthru
      _
    // Predicated region
    $region10: #{tpu_custom_call.1} parent=1 // pred_check
      _
    $region11: #{tpu_custom_call.1} parent=1 // pred_check_branch
      %61 = sbr.rel (0) target = $region13
    $region12: #{tpu_custom_call.1} parent=1 // pred_region
      %s63 = ssub.s32 32, 32
      %64 = vsyncadd [#allocation6], %s63
      %s66 = sshll.u32 [#allocation7], 4
      %s67 = int_to_ptr.vmem [resolvable:$true] %s66
      %69 = dma.hbm_to_vmem [thread:$0]  %s2, 32, %s67, [#allocation6]
    $region13: #{tpu_custom_call.1} parent=1 // pred_fallthru
      _
    // Predicated region
    $region14: #{tpu_custom_call.1} parent=1 // pred_check
      _
    $region15: #{tpu_custom_call.1} parent=1 // pred_check_branch
      %71 = sbr.rel (0) target = $region17
    $region16: #{tpu_custom_call.1} parent=1 // pred_region
      %s73 = ssub.s32 32, 32
      %74 = vsyncadd [#allocation9], %s73
      %s76 = sshll.u32 [#allocation8], 4
      %s77 = int_to_ptr.vmem [resolvable:$true] %s76
      %79 = dma.hbm_to_vmem [thread:$0]  %s3, 32, %s77, [#allocation9]
    $region17: #{tpu_custom_call.1} parent=1 // pred_fallthru
      _
    // Predicated region
    $region18: #{tpu_custom_call.1} parent=1 // pred_check
      _
    $region19: #{tpu_custom_call.1} parent=1 // pred_check_branch
      %81 = sbr.rel (0) target = $region21
    $region20: #{tpu_custom_call.1} parent=1 // pred_region
      %s83 = ssub.s32 32, 32
      %84 = vsyncadd [#allocation9], %s83
      %s86 = sshll.u32 [#allocation10], 4
      %s87 = int_to_ptr.vmem [resolvable:$true] %s86
      %89 = dma.hbm_to_vmem [thread:$0]  %s4, 32, %s87, [#allocation9]
    $region21: #{tpu_custom_call.1} parent=1 // pred_fallthru
      _
    // Predicated region
    $region22: #{tpu_custom_call.1} parent=1 // pred_check
      _
    $region23: #{tpu_custom_call.1} parent=1 // pred_check_branch
      %91 = sbr.rel (0) target = $region25
    $region24: #{tpu_custom_call.1} parent=1 // pred_region
      %s93 = ssub.s32 4096, 4096
      %94 = vsyncadd [#allocation12], %s93
      %s95 = sshll.u32 [#allocation11], 4
      %s96 = int_to_ptr.vmem [resolvable:$true] %s95
      %101 = dma.hbm_to_vmem [thread:$0]  %s5, 4096, %s96, [#allocation12], 128, 128, 8
    $region25: #{tpu_custom_call.1} parent=1 // pred_fallthru
      _
    // Predicated region
    $region26: #{tpu_custom_call.1} parent=1 // pred_check
      _
    $region27: #{tpu_custom_call.1} parent=1 // pred_check_branch
      %103 = sbr.rel (0) target = $region29
    $region28: #{tpu_custom_call.1} parent=1 // pred_region
      %s105 = ssub.s32 32, 32
      %106 = vsyncadd [#allocation12], %s105
      %s108 = sshll.u32 [#allocation13], 4
      %s109 = int_to_ptr.vmem [resolvable:$true] %s108
      %111 = dma.hbm_to_vmem [thread:$0]  %s6, 32, %s109, [#allocation12]
    $region29: #{tpu_custom_call.1} parent=1 // pred_fallthru
      _
    // Predicated region
    $region30: #{tpu_custom_call.1} parent=1 // pred_check
      _
    $region31: #{tpu_custom_call.1} parent=1 // pred_check_branch
      %113 = sbr.rel (0) target = $region33
    $region32: #{tpu_custom_call.1} parent=1 // pred_region
      %s115 = ssub.s32 32, 32
      %116 = vsyncadd [#allocation15], %s115
      %s118 = sshll.u32 [#allocation14], 4
      %s119 = int_to_ptr.vmem [resolvable:$true] %s118
      %121 = dma.hbm_to_vmem [thread:$0]  %s7, 32, %s119, [#allocation15]
    $region33: #{tpu_custom_call.1} parent=1 // pred_fallthru
      _
    // Predicated region
    $region34: #{tpu_custom_call.1} parent=1 // pred_check
      _
    $region35: #{tpu_custom_call.1} parent=1 // pred_check_branch
      %123 = sbr.rel (0) target = $region37
    $region36: #{tpu_custom_call.1} parent=1 // pred_region
      %s125 = ssub.s32 32, 32
      %126 = vsyncadd [#allocation15], %s125
      %s128 = sshll.u32 [#allocation16], 4
      %s129 = int_to_ptr.vmem [resolvable:$true] %s128
      %131 = dma.hbm_to_vmem [thread:$0]  %s8, 32, %s129, [#allocation15]
    $region37: #{tpu_custom_call.1} parent=1 // pred_fallthru
      _
    // Predicated region
    $region38: #{tpu_custom_call.1} parent=1 // pred_check
      _
    $region39: #{tpu_custom_call.1} parent=1 // pred_check_branch
      %133 = sbr.rel (0) target = $region41
    $region40: #{tpu_custom_call.1} parent=1 // pred_region
      %s135 = ssub.s32 4096, 4096
      %136 = vsyncadd [#allocation18], %s135
      %s137 = sshll.u32 [#allocation17], 4
      %s138 = int_to_ptr.vmem [resolvable:$true] %s137
      %143 = dma.hbm_to_vmem [thread:$0]  %s9, 4096, %s138, [#allocation18], 128, 128, 8
    $region41: #{tpu_custom_call.1} parent=1 // pred_fallthru
      _
    // Predicated region
    $region42: #{tpu_custom_call.1} parent=1 // pred_check
      _
    $region43: #{tpu_custom_call.1} parent=1 // pred_check_branch
      %145 = sbr.rel (0) target = $region45
    $region44: #{tpu_custom_call.1} parent=1 // pred_region
      %s147 = ssub.s32 32, 32
      %148 = vsyncadd [#allocation18], %s147
      %s150 = sshll.u32 [#allocation19], 4
      %s151 = int_to_ptr.vmem [resolvable:$true] %s150
      %153 = dma.hbm_to_vmem [thread:$0]  %s10, 32, %s151, [#allocation18]
    $region45: #{tpu_custom_call.1} parent=1 // pred_fallthru
      _
    // Predicated region
    $region46: #{tpu_custom_call.1} parent=1 // pred_check
      _
    $region47: #{tpu_custom_call.1} parent=1 // pred_check_branch
      %155 = sbr.rel (0) target = $region49
    $region48: #{tpu_custom_call.1} parent=1 // pred_region
      %s157 = ssub.s32 32, 32
      %158 = vsyncadd [#allocation21], %s157
      %s160 = sshll.u32 [#allocation20], 4
      %s161 = int_to_ptr.vmem [resolvable:$true] %s160
      %163 = dma.hbm_to_vmem [thread:$0]  %s11, 32, %s161, [#allocation21]
    $region49: #{tpu_custom_call.1} parent=1 // pred_fallthru
      _
    // Predicated region
    $region50: #{tpu_custom_call.1} parent=1 // pred_check
      _
    $region51: #{tpu_custom_call.1} parent=1 // pred_check_branch
      %165 = sbr.rel (0) target = $region53
    $region52: #{tpu_custom_call.1} parent=1 // pred_region
      %s167 = ssub.s32 32, 32
      %168 = vsyncadd [#allocation21], %s167
      %s170 = sshll.u32 [#allocation22], 4
      %s171 = int_to_ptr.vmem [resolvable:$true] %s170
      %173 = dma.hbm_to_vmem [thread:$0]  %s12, 32, %s171, [#allocation21]
    $region53: #{tpu_custom_call.1} parent=1 // pred_fallthru
      _
    // Predicated region
    $region54: #{tpu_custom_call.1} parent=1 // pred_check
      _
    $region55: #{tpu_custom_call.1} parent=1 // pred_check_branch
      %175 = sbr.rel (0) target = $region57
    $region56: #{tpu_custom_call.1} parent=1 // pred_region
      %s177 = ssub.s32 2048, 2048
      %178 = vsyncadd [#allocation24], %s177
      %s179 = sshll.u32 [#allocation23], 4
      %s180 = int_to_ptr.vmem [resolvable:$true] %s179
      %185 = dma.hbm_to_vmem [thread:$0]  %s13, 2048, %s180, [#allocation24], 64, 64, 4
    $region57: #{tpu_custom_call.1} parent=1 // pred_fallthru
      _
    // Predicated region
    $region58: #{tpu_custom_call.1} parent=1 // pred_check
      _
    $region59: #{tpu_custom_call.1} parent=1 // pred_check_branch
      %187 = sbr.rel (0) target = $region61
    $region60: #{tpu_custom_call.1} parent=1 // pred_region
      %s189 = ssub.s32 16, 16
      %190 = vsyncadd [#allocation24], %s189
      %s192 = sshll.u32 [#allocation25], 4
      %s193 = int_to_ptr.vmem [resolvable:$true] %s192
      %195 = dma.hbm_to_vmem [thread:$0]  %s14, 16, %s193, [#allocation24]
    $region61: #{tpu_custom_call.1} parent=1 // pred_fallthru
      _
    // Predicated region
    $region62: #{tpu_custom_call.1} parent=1 // pred_check
      _
    $region63: #{tpu_custom_call.1} parent=1 // pred_check_branch
      %197 = sbr.rel (0) target = $region65
    $region64: #{tpu_custom_call.1} parent=1 // pred_region
      %s199 = ssub.s32 16, 16
      %200 = vsyncadd [#allocation27], %s199
      %s202 = sshll.u32 [#allocation26], 4
      %s203 = int_to_ptr.vmem [resolvable:$true] %s202
      %205 = dma.hbm_to_vmem [thread:$0]  %s15, 16, %s203, [#allocation27]
    $region65: #{tpu_custom_call.1} parent=1 // pred_fallthru
      _
    // Predicated region
    $region66: #{tpu_custom_call.1} parent=1 // pred_check
      _
    $region67: #{tpu_custom_call.1} parent=1 // pred_check_branch
      %207 = sbr.rel (0) target = $region69
    $region68: #{tpu_custom_call.1} parent=1 // pred_region
      %s209 = ssub.s32 16, 16
      %210 = vsyncadd [#allocation27], %s209
      %s212 = sshll.u32 [#allocation28], 4
      %s213 = int_to_ptr.vmem [resolvable:$true] %s212
      %215 = dma.hbm_to_vmem [thread:$0]  %s16, 16, %s213, [#allocation27]
    $region69: #{tpu_custom_call.1} parent=1 // pred_fallthru
      _
    // Predicated region
    $region70: #{tpu_custom_call.1} parent=1 // pred_check
      _
    $region71: #{tpu_custom_call.1} parent=1 // pred_check_branch
      %217 = sbr.rel (0) target = $region73
    $region72: #{tpu_custom_call.1} parent=1 // pred_region
      _
    $region73: #{tpu_custom_call.1} parent=1 // pred_fallthru
      _
    // Predicated region
    $region74: #{tpu_custom_call.1} parent=1 // pred_check
      _
    $region75: #{tpu_custom_call.1} parent=1 // pred_check_branch
      %219 = sbr.rel (0) target = $region77
    $region76: #{tpu_custom_call.1} parent=1 // pred_region
      _
    $region77: #{tpu_custom_call.1} parent=1 // pred_fallthru
      _
    // Predicated region
    $region78: #{tpu_custom_call.1} parent=1 // pred_check
      _
    $region79: #{tpu_custom_call.1} parent=1 // pred_check_branch
      %221 = sbr.rel (0) target = $region81
    $region80: #{tpu_custom_call.1} parent=1 // pred_region
      _
    $region81: #{tpu_custom_call.1} parent=1 // pred_fallthru
      _
    // Predicated region
    $region82: #{tpu_custom_call.1} parent=1 // pred_check
      _
    $region83: #{tpu_custom_call.1} parent=1 // pred_check_branch
      %223 = sbr.rel (0) target = $region85
    $region84: #{tpu_custom_call.1} parent=1 // pred_region
      _
    $region85: #{tpu_custom_call.1} parent=1 // pred_fallthru
      _
    // Predicated region
    $region86: #{tpu_custom_call.1} parent=1 // pred_check
      _
    $region87: #{tpu_custom_call.1} parent=1 // pred_check_branch
      %225 = sbr.rel (0) target = $region89
    $region88: #{tpu_custom_call.1} parent=1 // pred_region
      %226 = dma.done [#allocation3], 128
    $region89: #{tpu_custom_call.1} parent=1 // pred_fallthru
      _
    // Predicated region
    $region90: #{tpu_custom_call.1} parent=1 // pred_check
      _
    $region91: #{tpu_custom_call.1} parent=1 // pred_check_branch
      %228 = sbr.rel (0) target = $region93
    $region92: #{tpu_custom_call.1} parent=1 // pred_region
      %229 = dma.done [#allocation6], 2048
    $region93: #{tpu_custom_call.1} parent=1 // pred_fallthru
      _
    // Predicated region
    $region94: #{tpu_custom_call.1} parent=1 // pred_check
      _
    $region95: #{tpu_custom_call.1} parent=1 // pred_check_branch
      %231 = sbr.rel (0) target = $region97
    $region96: #{tpu_custom_call.1} parent=1 // pred_region
      %232 = dma.done [#allocation6], 32
    $region97: #{tpu_custom_call.1} parent=1 // pred_fallthru
      _
    // Predicated region
    $region98: #{tpu_custom_call.1} parent=1 // pred_check
      _
    $region99: #{tpu_custom_call.1} parent=1 // pred_check_branch
      %234 = sbr.rel (0) target = $region101
    $region100: #{tpu_custom_call.1} parent=1 // pred_region
      %235 = dma.done [#allocation9], 32
    $region101: #{tpu_custom_call.1} parent=1 // pred_fallthru
      _
    // Predicated region
    $region102: #{tpu_custom_call.1} parent=1 // pred_check
      _
    $region103: #{tpu_custom_call.1} parent=1 // pred_check_branch
      %237 = sbr.rel (0) target = $region105
    $region104: #{tpu_custom_call.1} parent=1 // pred_region
      %238 = dma.done [#allocation9], 32
    $region105: #{tpu_custom_call.1} parent=1 // pred_fallthru
      _
    // Predicated region
    $region106: #{tpu_custom_call.1} parent=1 // pred_check
      _
    $region107: #{tpu_custom_call.1} parent=1 // pred_check_branch
      %240 = sbr.rel (0) target = $region109
    $region108: #{tpu_custom_call.1} parent=1 // pred_region
      %241 = dma.done [#allocation12], 4096
    $region109: #{tpu_custom_call.1} parent=1 // pred_fallthru
      _
    // Predicated region
    $region110: #{tpu_custom_call.1} parent=1 // pred_check
      _
    $region111: #{tpu_custom_call.1} parent=1 // pred_check_branch
      %243 = sbr.rel (0) target = $region113
    $region112: #{tpu_custom_call.1} parent=1 // pred_region
      %244 = dma.done [#allocation12], 32
    $region113: #{tpu_custom_call.1} parent=1 // pred_fallthru
      _
    // Predicated region
    $region114: #{tpu_custom_call.1} parent=1 // pred_check
      _
    $region115: #{tpu_custom_call.1} parent=1 // pred_check_branch
      %246 = sbr.rel (0) target = $region117
    $region116: #{tpu_custom_call.1} parent=1 // pred_region
      %247 = dma.done [#allocation15], 32
    $region117: #{tpu_custom_call.1} parent=1 // pred_fallthru
      _
    // Predicated region
    $region118: #{tpu_custom_call.1} parent=1 // pred_check
      _
    $region119: #{tpu_custom_call.1} parent=1 // pred_check_branch
      %249 = sbr.rel (0) target = $region121
    $region120: #{tpu_custom_call.1} parent=1 // pred_region
      %250 = dma.done [#allocation15], 32
    $region121: #{tpu_custom_call.1} parent=1 // pred_fallthru
      _
    // Predicated region
    $region122: #{tpu_custom_call.1} parent=1 // pred_check
      _
    $region123: #{tpu_custom_call.1} parent=1 // pred_check_branch
      %252 = sbr.rel (0) target = $region125
    $region124: #{tpu_custom_call.1} parent=1 // pred_region
      %253 = dma.done [#allocation18], 4096
    $region125: #{tpu_custom_call.1} parent=1 // pred_fallthru
      _
    // Predicated region
    $region126: #{tpu_custom_call.1} parent=1 // pred_check
      _
    $region127: #{tpu_custom_call.1} parent=1 // pred_check_branch
      %255 = sbr.rel (0) target = $region129
    $region128: #{tpu_custom_call.1} parent=1 // pred_region
      %256 = dma.done [#allocation18], 32
    $region129: #{tpu_custom_call.1} parent=1 // pred_fallthru
      _
    // Predicated region
    $region130: #{tpu_custom_call.1} parent=1 // pred_check
      _
    $region131: #{tpu_custom_call.1} parent=1 // pred_check_branch
      %258 = sbr.rel (0) target = $region133
    $region132: #{tpu_custom_call.1} parent=1 // pred_region
      %259 = dma.done [#allocation21], 32
    $region133: #{tpu_custom_call.1} parent=1 // pred_fallthru
      _
    // Predicated region
    $region134: #{tpu_custom_call.1} parent=1 // pred_check
      _
    $region135: #{tpu_custom_call.1} parent=1 // pred_check_branch
      %261 = sbr.rel (0) target = $region137
    $region136: #{tpu_custom_call.1} parent=1 // pred_region
      %262 = dma.done [#allocation21], 32
    $region137: #{tpu_custom_call.1} parent=1 // pred_fallthru
      _
    // Predicated region
    $region138: #{tpu_custom_call.1} parent=1 // pred_check
      _
    $region139: #{tpu_custom_call.1} parent=1 // pred_check_branch
      %264 = sbr.rel (0) target = $region141
    $region140: #{tpu_custom_call.1} parent=1 // pred_region
      %265 = dma.done [#allocation24], 2048
    $region141: #{tpu_custom_call.1} parent=1 // pred_fallthru
      _
    // Predicated region
    $region142: #{tpu_custom_call.1} parent=1 // pred_check
      _
    $region143: #{tpu_custom_call.1} parent=1 // pred_check_branch
      %267 = sbr.rel (0) target = $region145
    $region144: #{tpu_custom_call.1} parent=1 // pred_region
      %268 = dma.done [#allocation24], 16
    $region145: #{tpu_custom_call.1} parent=1 // pred_fallthru
      _
    // Predicated region
    $region146: #{tpu_custom_call.1} parent=1 // pred_check
      _
    $region147: #{tpu_custom_call.1} parent=1 // pred_check_branch
      %270 = sbr.rel (0) target = $region149
    $region148: #{tpu_custom_call.1} parent=1 // pred_region
      %271 = dma.done [#allocation27], 16
    $region149: #{tpu_custom_call.1} parent=1 // pred_fallthru
      _
    // Predicated region
    $region150: #{tpu_custom_call.1} parent=1 // pred_check
      _
    $region151: #{tpu_custom_call.1} parent=1 // pred_check_branch
      %273 = sbr.rel (0) target = $region153
    $region152: #{tpu_custom_call.1} parent=1 // pred_region
      %274 = dma.done [#allocation27], 16
    $region153: #{tpu_custom_call.1} parent=1 // pred_fallthru
      _
    %v280 = vld [vmem:[#allocation2] sm:$0xf]
    %v281 = vld [vmem:[#allocation2 + $0x4] sm:$0xf]
    %v282 = vld [vmem:[#allocation5] sm:$0xff]
    %v283 = vld [vmem:[#allocation5 + $0x8] sm:$0xff]
    %v284 = vld [vmem:[#allocation5 + $0x10] sm:$0xff]
    %v285 = vld [vmem:[#allocation5 + $0x18] sm:$0xff]
    %v286 = vld [vmem:[#allocation5 + $0x20] sm:$0xff]
    %v287 = vld [vmem:[#allocation5 + $0x28] sm:$0xff]
    %v288 = vld [vmem:[#allocation5 + $0x30] sm:$0xff]
    %v289 = vld [vmem:[#allocation5 + $0x38] sm:$0xff]
    %v290 = vld [vmem:[#allocation5 + $0x40] sm:$0xff]
    %v291 = vld [vmem:[#allocation5 + $0x48] sm:$0xff]
    %v292 = vld [vmem:[#allocation5 + $0x50] sm:$0xff]
    %v293 = vld [vmem:[#allocation5 + $0x58] sm:$0xff]
    %v294 = vld [vmem:[#allocation5 + $0x60] sm:$0xff]
    %v295 = vld [vmem:[#allocation5 + $0x68] sm:$0xff]
    %v296 = vld [vmem:[#allocation5 + $0x70] sm:$0xff]
    %v297 = vld [vmem:[#allocation5 + $0x78] sm:$0xff]
    %v298 = vld [vmem:[#allocation7] sm:$0x3]
    %v299 = vld [vmem:[#allocation8] sm:$0x3]
    %v300 = vld [vmem:[#allocation10] sm:$0x3]
    %v301 = vld [vmem:[#allocation11] sm:$0xff]
    %v302 = vld [vmem:[#allocation11 + $0x8] sm:$0xff]
    %v303 = vld [vmem:[#allocation11 + $0x10] sm:$0xff]
    %v304 = vld [vmem:[#allocation11 + $0x18] sm:$0xff]
    %v305 = vld [vmem:[#allocation11 + $0x20] sm:$0xff]
    %v306 = vld [vmem:[#allocation11 + $0x28] sm:$0xff]
    %v307 = vld [vmem:[#allocation11 + $0x30] sm:$0xff]
    %v308 = vld [vmem:[#allocation11 + $0x38] sm:$0xff]
    %v309 = vld [vmem:[#allocation11 + $0x40] sm:$0xff]
    %v310 = vld [vmem:[#allocation11 + $0x48] sm:$0xff]
    %v311 = vld [vmem:[#allocation11 + $0x50] sm:$0xff]
    %v312 = vld [vmem:[#allocation11 + $0x58] sm:$0xff]
    %v313 = vld [vmem:[#allocation11 + $0x60] sm:$0xff]
    %v314 = vld [vmem:[#allocation11 + $0x68] sm:$0xff]
    %v315 = vld [vmem:[#allocation11 + $0x70] sm:$0xff]
    %v316 = vld [vmem:[#allocation11 + $0x78] sm:$0xff]
    %v317 = vld [vmem:[#allocation11 + $0x80] sm:$0xff]
    %v318 = vld [vmem:[#allocation11 + $0x88] sm:$0xff]
    %v319 = vld [vmem:[#allocation11 + $0x90] sm:$0xff]
    %v320 = vld [vmem:[#allocation11 + $0x98] sm:$0xff]
    %v321 = vld [vmem:[#allocation11 + $0xa0] sm:$0xff]
    %v322 = vld [vmem:[#allocation11 + $0xa8] sm:$0xff]
    %v323 = vld [vmem:[#allocation11 + $0xb0] sm:$0xff]
    %v324 = vld [vmem:[#allocation11 + $0xb8] sm:$0xff]
    %v325 = vld [vmem:[#allocation11 + $0xc0] sm:$0xff]
    %v326 = vld [vmem:[#allocation11 + $0xc8] sm:$0xff]
    %v327 = vld [vmem:[#allocation11 + $0xd0] sm:$0xff]
    %v328 = vld [vmem:[#allocation11 + $0xd8] sm:$0xff]
    %v329 = vld [vmem:[#allocation11 + $0xe0] sm:$0xff]
    %v330 = vld [vmem:[#allocation11 + $0xe8] sm:$0xff]
    %v331 = vld [vmem:[#allocation11 + $0xf0] sm:$0xff]
    %v332 = vld [vmem:[#allocation11 + $0xf8] sm:$0xff]
    %v333 = vld [vmem:[#allocation13] sm:$0x3]
    %v334 = vld [vmem:[#allocation14] sm:$0x3]
    %v335 = vld [vmem:[#allocation16] sm:$0x3]
    %v336 = vld [vmem:[#allocation17] sm:$0xff]
    %v337 = vld [vmem:[#allocation17 + $0x8] sm:$0xff]
    %v338 = vld [vmem:[#allocation17 + $0x10] sm:$0xff]
    %v339 = vld [vmem:[#allocation17 + $0x18] sm:$0xff]
    %v340 = vld [vmem:[#allocation17 + $0x20] sm:$0xff]
    %v341 = vld [vmem:[#allocation17 + $0x28] sm:$0xff]
    %v342 = vld [vmem:[#allocation17 + $0x30] sm:$0xff]
    %v343 = vld [vmem:[#allocation17 + $0x38] sm:$0xff]
    %v344 = vld [vmem:[#allocation17 + $0x40] sm:$0xff]
    %v345 = vld [vmem:[#allocation17 + $0x48] sm:$0xff]
    %v346 = vld [vmem:[#allocation17 + $0x50] sm:$0xff]
    %v347 = vld [vmem:[#allocation17 + $0x58] sm:$0xff]
    %v348 = vld [vmem:[#allocation17 + $0x60] sm:$0xff]
    %v349 = vld [vmem:[#allocation17 + $0x68] sm:$0xff]
    %v350 = vld [vmem:[#allocation17 + $0x70] sm:$0xff]
    %v351 = vld [vmem:[#allocation17 + $0x78] sm:$0xff]
    %v352 = vld [vmem:[#allocation17 + $0x80] sm:$0xff]
    %v353 = vld [vmem:[#allocation17 + $0x88] sm:$0xff]
    %v354 = vld [vmem:[#allocation17 + $0x90] sm:$0xff]
    %v355 = vld [vmem:[#allocation17 + $0x98] sm:$0xff]
    %v356 = vld [vmem:[#allocation17 + $0xa0] sm:$0xff]
    %v357 = vld [vmem:[#allocation17 + $0xa8] sm:$0xff]
    %v358 = vld [vmem:[#allocation17 + $0xb0] sm:$0xff]
    %v359 = vld [vmem:[#allocation17 + $0xb8] sm:$0xff]
    %v360 = vld [vmem:[#allocation17 + $0xc0] sm:$0xff]
    %v361 = vld [vmem:[#allocation17 + $0xc8] sm:$0xff]
    %v362 = vld [vmem:[#allocation17 + $0xd0] sm:$0xff]
    %v363 = vld [vmem:[#allocation17 + $0xd8] sm:$0xff]
    %v364 = vld [vmem:[#allocation17 + $0xe0] sm:$0xff]
    %v365 = vld [vmem:[#allocation17 + $0xe8] sm:$0xff]
    %v366 = vld [vmem:[#allocation17 + $0xf0] sm:$0xff]
    %v367 = vld [vmem:[#allocation17 + $0xf8] sm:$0xff]
    %v368 = vld [vmem:[#allocation19] sm:$0x3]
    %v369 = vld [vmem:[#allocation20] sm:$0x3]
    %v370 = vld [vmem:[#allocation22] sm:$0x3]
    %v371 = vld [vmem:[#allocation23] sm:$0xf]
    %v372 = vld [vmem:[#allocation23 + $0x4] sm:$0xf]
    %v373 = vld [vmem:[#allocation23 + $0x8] sm:$0xf]
    %v374 = vld [vmem:[#allocation23 + $0xc] sm:$0xf]
    %v375 = vld [vmem:[#allocation23 + $0x10] sm:$0xf]
    %v376 = vld [vmem:[#allocation23 + $0x14] sm:$0xf]
    %v377 = vld [vmem:[#allocation23 + $0x18] sm:$0xf]
    %v378 = vld [vmem:[#allocation23 + $0x1c] sm:$0xf]
    %v379 = vld [vmem:[#allocation23 + $0x20] sm:$0xf]
    %v380 = vld [vmem:[#allocation23 + $0x24] sm:$0xf]
    %v381 = vld [vmem:[#allocation23 + $0x28] sm:$0xf]
    %v382 = vld [vmem:[#allocation23 + $0x2c] sm:$0xf]
    %v383 = vld [vmem:[#allocation23 + $0x30] sm:$0xf]
    %v384 = vld [vmem:[#allocation23 + $0x34] sm:$0xf]
    %v385 = vld [vmem:[#allocation23 + $0x38] sm:$0xf]
    %v386 = vld [vmem:[#allocation23 + $0x3c] sm:$0xf]
    %v387 = vld [vmem:[#allocation23 + $0x40] sm:$0xf]
    %v388 = vld [vmem:[#allocation23 + $0x44] sm:$0xf]
    %v389 = vld [vmem:[#allocation23 + $0x48] sm:$0xf]
    %v390 = vld [vmem:[#allocation23 + $0x4c] sm:$0xf]
    %v391 = vld [vmem:[#allocation23 + $0x50] sm:$0xf]
    %v392 = vld [vmem:[#allocation23 + $0x54] sm:$0xf]
    %v393 = vld [vmem:[#allocation23 + $0x58] sm:$0xf]
    %v394 = vld [vmem:[#allocation23 + $0x5c] sm:$0xf]
    %v395 = vld [vmem:[#allocation23 + $0x60] sm:$0xf]
    %v396 = vld [vmem:[#allocation23 + $0x64] sm:$0xf]
    %v397 = vld [vmem:[#allocation23 + $0x68] sm:$0xf]
    %v398 = vld [vmem:[#allocation23 + $0x6c] sm:$0xf]
    %v399 = vld [vmem:[#allocation23 + $0x70] sm:$0xf]
    %v400 = vld [vmem:[#allocation23 + $0x74] sm:$0xf]
    %v401 = vld [vmem:[#allocation23 + $0x78] sm:$0xf]
    %v402 = vld [vmem:[#allocation23 + $0x7c] sm:$0xf]
    %v403 = vld [vmem:[#allocation25] sm:$0x1]
    %v404 = vld [vmem:[#allocation26] sm:$0x1]
    %v405 = vld [vmem:[#allocation28] sm:$0x1]
    %v406 = vld [vmem:[%s17] sm:$0xf]
    %v407 = vld [vmem:[%s17 + $0x4] sm:$0xf]
    %v408 = vld [vmem:[%s17 + $0x8] sm:$0xf]
    %v409 = vld [vmem:[%s17 + $0xc] sm:$0xf]
    %v410 = vld [vmem:[%s17 + $0x10] sm:$0xf]
    %v411 = vld [vmem:[%s17 + $0x14] sm:$0xf]
    %v412 = vld [vmem:[%s17 + $0x18] sm:$0xf]
    %v413 = vld [vmem:[%s17 + $0x1c] sm:$0xf]
    %v414 = vld [vmem:[%s17 + $0x20] sm:$0xf]
    %v415 = vld [vmem:[%s17 + $0x24] sm:$0xf]
    %v416 = vld [vmem:[%s17 + $0x28] sm:$0xf]
    %v417 = vld [vmem:[%s17 + $0x2c] sm:$0xf]
    %v418 = vld [vmem:[%s17 + $0x30] sm:$0xf]
    %v419 = vld [vmem:[%s17 + $0x34] sm:$0xf]
    %v420 = vld [vmem:[%s17 + $0x38] sm:$0xf]
    %v421 = vld [vmem:[%s17 + $0x3c] sm:$0xf]
    %v422 = vld [vmem:[%s18] sm:$0x1]
    %v423 = vld [vmem:[%s19] sm:$0x1]
    %v424 = vld [vmem:[%s20] sm:$0x1]
    %v426 = vlaneseq
    %v427 = vshrl.u32 %v426, 7
    %v428 = vsub.s32 0, %v427
    %v429 = vrot.slane %v298, %v428
    %v430 = vlaneseq
    %v431 = vshrl.u32 %v430, 7
    %v432 = vsub.s32 1, %v431
    %v433 = vrot.slane %v298, %v432
    %v438 = vunpack.c.l.b16 %v280
    %v439 = vunpack.c.l.b16 %v281
    %v440 = vpack.c.b16 %v439, %v438
    %v458 = vunpack.c.l.b16 %v282
    %v459 = vunpack.c.h.b16 %v282
    %v460 = vunpack.c.l.b16 %v283
    %v461 = vunpack.c.h.b16 %v283
    %v462 = vunpack.c.l.b16 %v284
    %v463 = vunpack.c.h.b16 %v284
    %v464 = vunpack.c.l.b16 %v285
    %v465 = vunpack.c.h.b16 %v285
    %v466 = vunpack.c.l.b16 %v286
    %v467 = vunpack.c.h.b16 %v286
    %v468 = vunpack.c.l.b16 %v287
    %v469 = vunpack.c.h.b16 %v287
    %v470 = vunpack.c.l.b16 %v288
    %v471 = vunpack.c.h.b16 %v288
    %v472 = vunpack.c.l.b16 %v289
    %v473 = vunpack.c.h.b16 %v289
    %v474 = vunpack.c.l.b16 %v290
    %v475 = vunpack.c.h.b16 %v290
    %v476 = vunpack.c.l.b16 %v291
    %v477 = vunpack.c.h.b16 %v291
    %v478 = vunpack.c.l.b16 %v292
    %v479 = vunpack.c.h.b16 %v292
    %v480 = vunpack.c.l.b16 %v293
    %v481 = vunpack.c.h.b16 %v293
    %v482 = vunpack.c.l.b16 %v294
    %v483 = vunpack.c.h.b16 %v294
    %v484 = vunpack.c.l.b16 %v295
    %v485 = vunpack.c.h.b16 %v295
    %v486 = vunpack.c.l.b16 %v296
    %v487 = vunpack.c.h.b16 %v296
    %v488 = vunpack.c.l.b16 %v297
    %v489 = vunpack.c.h.b16 %v297
    %v490 = vpack.c.b16 %v460, %v458
    %v491 = vpack.c.b16 %v461, %v459
    %v492 = vpack.c.b16 %v464, %v462
    %v493 = vpack.c.b16 %v465, %v463
    %v494 = vpack.c.b16 %v468, %v466
    %v495 = vpack.c.b16 %v469, %v467
    %v496 = vpack.c.b16 %v472, %v470
    %v497 = vpack.c.b16 %v473, %v471
    %v498 = vpack.c.b16 %v476, %v474
    %v499 = vpack.c.b16 %v477, %v475
    %v500 = vpack.c.b16 %v480, %v478
    %v501 = vpack.c.b16 %v481, %v479
    %v502 = vpack.c.b16 %v484, %v482
    %v503 = vpack.c.b16 %v485, %v483
    %v504 = vpack.c.b16 %v488, %v486
    %v505 = vpack.c.b16 %v489, %v487
    %522 = vmatprep.subr.bf16.mxu0 %v491
    %523 = vmatpush1.bf16.msra.mxu0 %v490
    %524 = vmatprep.subr.bf16.mxu0 %v493
    %525 = vmatpush1.bf16.msra.mxu0 %v492
    %526 = vmatprep.subr.bf16.mxu0 %v495
    %527 = vmatpush1.bf16.msra.mxu0 %v494
    %528 = vmatprep.subr.bf16.mxu0 %v497
    %529 = vmatpush1.bf16.msra.mxu0 %v496
    %530 = vmatprep.subr.bf16.mxu0 %v499
    %531 = vmatpush1.bf16.msra.mxu0 %v498
    %532 = vmatprep.subr.bf16.mxu0 %v501
    %533 = vmatpush1.bf16.msra.mxu0 %v500
    %534 = vmatprep.subr.bf16.mxu0 %v503
    %535 = vmatpush1.bf16.msra.mxu0 %v502
    %536 = vmatprep.subr.bf16.mxu0 %v505
    %537 = vmatpush1.bf16.msra.mxu0 %v504
    %538 = vmatprep.subr.bf16.mxu0 0
    %539 = vmatpush1.bf16.msra.mxu0 0
    %540 = vmatprep.subr.bf16.mxu0 0
    %541 = vmatpush1.bf16.msra.mxu0 0
    %542 = vmatprep.subr.bf16.mxu0 0
    %543 = vmatpush1.bf16.msra.mxu0 0
    %544 = vmatprep.subr.bf16.mxu0 0
    %545 = vmatpush1.bf16.msra.mxu0 0
    %546 = vmatprep.subr.bf16.mxu0 0
    %547 = vmatpush1.bf16.msra.mxu0 0
    %548 = vmatprep.subr.bf16.mxu0 0
    %549 = vmatpush1.bf16.msra.mxu0 0
    %550 = vmatprep.subr.bf16.mxu0 0
    %551 = vmatpush1.bf16.msra.mxu0 0
    %552 = vmatprep.subr.bf16.mxu0 0
    %553 = vmatpush1.bf16.msra.mxu0 0
    %554 = vmatprep.mubr.bf16.mxu0 0
    %555 = vmatmul.mubr.bf16.gmra.mrb[0].mxu0 %v440
    %v556 = vpop.f32.mrb[0].mxu0
    %v557 = vadd.f32 %v429, %v556
    %v558 = vpop.f32.mrb[0].mxu0
    %v559 = vadd.f32 %v433, %v558
    %v560 = vpop.f32.mrb[0].mxu0
    %v561 = vadd.f32 %v429, %v560
    %v562 = vpop.f32.mrb[0].mxu0
    %v563 = vadd.f32 %v433, %v562
    %564 = vdwg.mxu0
    %v565 = vadd.f32 %v557, %v559
    %566 = vadd.xlane.f32.xlu0 %v565
    %v567 = vpop.xlane.xlu0 %566
    %v568 = vadd.f32 %v561, %v563
    %569 = vadd.xlane.f32.xlu0 %v568
    %v570 = vpop.xlane.xlu0 %569
    %v571 = vrcp.pop 256.0
    %v572 = vmul.f32 %v567, %v571
    %v573 = vmul.f32 %v570, %v571
    %v574 = vsub.f32 %v557, %v572
    %v575 = vsub.f32 %v559, %v572
    %v576 = vsub.f32 %v561, %v573
    %v577 = vsub.f32 %v563, %v573
    %v578 = vmul.f32 %v574, %v574
    %v579 = vmul.f32 %v575, %v575
    %v580 = vmul.f32 %v576, %v576
    %v581 = vmul.f32 %v577, %v577
    %v582 = vadd.f32 %v578, %v579
    %583 = vadd.xlane.f32.xlu0 %v582
    %v584 = vpop.xlane.xlu0 %583
    %v585 = vadd.f32 %v580, %v581
    %586 = vadd.xlane.f32.xlu0 %v585
    %v587 = vpop.xlane.xlu0 %586
    %v588 = vmul.f32 %v584, %v571
    %v589 = vmul.f32 %v587, %v571
    %v590 = vadd.f32 %v588, 1e-05
    %v591 = vadd.f32 %v589, 1e-05
    %v592 = vrsqrt.pop %v590
    %v593 = vrsqrt.pop %v591
    %v594 = vmul.f32 %v574, %v592
    %v595 = vmul.f32 %v575, %v592
    %v596 = vmul.f32 %v576, %v593
    %v597 = vmul.f32 %v577, %v593
    %v598 = vpack.c.bf16 %v596, %v594
    %v599 = vpack.c.bf16 %v597, %v595
    %v601 = vlaneseq
    %v602 = vshrl.u32 %v601, 7
    %v603 = vsub.s32 0, %v602
    %v604 = vrot.slane %v299, %v603
    %v605 = vlaneseq
    %v606 = vshrl.u32 %v605, 7
    %v607 = vsub.s32 1, %v606
    %v608 = vrot.slane %v299, %v607
    %v611 = vpack.c.bf16 %v604, %v604
    %v612 = vpack.c.bf16 %v608, %v608
    %v614 = vpack.i.b16 %v611, %v611
    %v616 = vlaneseq
    %v617 = vshrl.u32 %v616, 7
    %v618 = vsub.s32 0, %v617
    %v619 = vrot.slane %v614, %v618
    %v621 = vpack.i.b16 %v612, %v612
    %v623 = vlaneseq
    %v624 = vshrl.u32 %v623, 7
    %v625 = vsub.s32 0, %v624
    %v626 = vrot.slane %v621, %v625
    %v627 = vmul.bf16 %v598, %v619
    %v628 = vmul.bf16 %v599, %v626
    %v630 = vlaneseq
    %v631 = vshrl.u32 %v630, 7
    %v632 = vsub.s32 0, %v631
    %v633 = vrot.slane %v300, %v632
    %v634 = vlaneseq
    %v635 = vshrl.u32 %v634, 7
    %v636 = vsub.s32 1, %v635
    %v637 = vrot.slane %v300, %v636
    %v640 = vpack.c.bf16 %v633, %v633
    %v641 = vpack.c.bf16 %v637, %v637
    %v643 = vpack.i.b16 %v640, %v640
    %v645 = vlaneseq
    %v646 = vshrl.u32 %v645, 7
    %v647 = vsub.s32 0, %v646
    %v648 = vrot.slane %v643, %v647
    %v650 = vpack.i.b16 %v641, %v641
    %v652 = vlaneseq
    %v653 = vshrl.u32 %v652, 7
    %v654 = vsub.s32 0, %v653
    %v655 = vrot.slane %v650, %v654
    %v656 = vadd.bf16 %v627, %v648
    %v657 = vadd.bf16 %v628, %v655
    %v658 = vmul.bf16 %v656, %v656
    %v659 = vmul.bf16 %v657, %v657
    %v660 = vmul.bf16 %v656, %v658
    %v661 = vmul.bf16 %v657, %v659
    %v662 = vmul.bf16 %v660, 1027030327
    %v663 = vmul.bf16 %v661, 1027030327
    %v664 = vadd.bf16 %v656, %v662
    %v665 = vadd.bf16 %v657, %v663
    %v666 = vmul.bf16 %v664, 1061961548
    %v667 = vmul.bf16 %v665, 1061961548
    %v668 = vtanh.bf16.pop %v666
    %v669 = vtanh.bf16.pop %v667
    %v670 = vadd.bf16 %v668, 1065369472
    %v671 = vadd.bf16 %v669, 1065369472
    %v672 = vmul.bf16 %v670, 1056980736
    %v673 = vmul.bf16 %v671, 1056980736
    %v674 = vmul.bf16 %v656, %v672
    %v675 = vmul.bf16 %v657, %v673
    %v708 = vunpack.c.l.b16 %v301
    %v709 = vunpack.c.h.b16 %v301
    %v710 = vunpack.c.l.b16 %v302
    %v711 = vunpack.c.h.b16 %v302
    %v712 = vunpack.c.l.b16 %v303
    %v713 = vunpack.c.h.b16 %v303
    %v714 = vunpack.c.l.b16 %v304
    %v715 = vunpack.c.h.b16 %v304
    %v716 = vunpack.c.l.b16 %v305
    %v717 = vunpack.c.h.b16 %v305
    %v718 = vunpack.c.l.b16 %v306
    %v719 = vunpack.c.h.b16 %v306
    %v720 = vunpack.c.l.b16 %v307
    %v721 = vunpack.c.h.b16 %v307
    %v722 = vunpack.c.l.b16 %v308
    %v723 = vunpack.c.h.b16 %v308
    %v724 = vunpack.c.l.b16 %v309
    %v725 = vunpack.c.h.b16 %v309
    %v726 = vunpack.c.l.b16 %v310
    %v727 = vunpack.c.h.b16 %v310
    %v728 = vunpack.c.l.b16 %v311
    %v729 = vunpack.c.h.b16 %v311
    %v730 = vunpack.c.l.b16 %v312
    %v731 = vunpack.c.h.b16 %v312
    %v732 = vunpack.c.l.b16 %v313
    %v733 = vunpack.c.h.b16 %v313
    %v734 = vunpack.c.l.b16 %v314
    %v735 = vunpack.c.h.b16 %v314
    %v736 = vunpack.c.l.b16 %v315
    %v737 = vunpack.c.h.b16 %v315
    %v738 = vunpack.c.l.b16 %v316
    %v739 = vunpack.c.h.b16 %v316
    %v740 = vunpack.c.l.b16 %v317
    %v741 = vunpack.c.h.b16 %v317
    %v742 = vunpack.c.l.b16 %v318
    %v743 = vunpack.c.h.b16 %v318
    %v744 = vunpack.c.l.b16 %v319
    %v745 = vunpack.c.h.b16 %v319
    %v746 = vunpack.c.l.b16 %v320
    %v747 = vunpack.c.h.b16 %v320
    %v748 = vunpack.c.l.b16 %v321
    %v749 = vunpack.c.h.b16 %v321
    %v750 = vunpack.c.l.b16 %v322
    %v751 = vunpack.c.h.b16 %v322
    %v752 = vunpack.c.l.b16 %v323
    %v753 = vunpack.c.h.b16 %v323
    %v754 = vunpack.c.l.b16 %v324
    %v755 = vunpack.c.h.b16 %v324
    %v756 = vunpack.c.l.b16 %v325
    %v757 = vunpack.c.h.b16 %v325
    %v758 = vunpack.c.l.b16 %v326
    %v759 = vunpack.c.h.b16 %v326
    %v760 = vunpack.c.l.b16 %v327
    %v761 = vunpack.c.h.b16 %v327
    %v762 = vunpack.c.l.b16 %v328
    %v763 = vunpack.c.h.b16 %v328
    %v764 = vunpack.c.l.b16 %v329
    %v765 = vunpack.c.h.b16 %v329
    %v766 = vunpack.c.l.b16 %v330
    %v767 = vunpack.c.h.b16 %v330
    %v768 = vunpack.c.l.b16 %v331
    %v769 = vunpack.c.h.b16 %v331
    %v770 = vunpack.c.l.b16 %v332
    %v771 = vunpack.c.h.b16 %v332
    %v772 = vpack.c.b16 %v710, %v708
    %v773 = vpack.c.b16 %v711, %v709
    %v774 = vpack.c.b16 %v714, %v712
    %v775 = vpack.c.b16 %v715, %v713
    %v776 = vpack.c.b16 %v718, %v716
    %v777 = vpack.c.b16 %v719, %v717
    %v778 = vpack.c.b16 %v722, %v720
    %v779 = vpack.c.b16 %v723, %v721
    %v780 = vpack.c.b16 %v726, %v724
    %v781 = vpack.c.b16 %v727, %v725
    %v782 = vpack.c.b16 %v730, %v728
    %v783 = vpack.c.b16 %v731, %v729
    %v784 = vpack.c.b16 %v734, %v732
    %v785 = vpack.c.b16 %v735, %v733
    %v786 = vpack.c.b16 %v738, %v736
    %v787 = vpack.c.b16 %v739, %v737
    %v788 = vpack.c.b16 %v742, %v740
    %v789 = vpack.c.b16 %v743, %v741
    %v790 = vpack.c.b16 %v746, %v744
    %v791 = vpack.c.b16 %v747, %v745
    %v792 = vpack.c.b16 %v750, %v748
    %v793 = vpack.c.b16 %v751, %v749
    %v794 = vpack.c.b16 %v754, %v752
    %v795 = vpack.c.b16 %v755, %v753
    %v796 = vpack.c.b16 %v758, %v756
    %v797 = vpack.c.b16 %v759, %v757
    %v798 = vpack.c.b16 %v762, %v760
    %v799 = vpack.c.b16 %v763, %v761
    %v800 = vpack.c.b16 %v766, %v764
    %v801 = vpack.c.b16 %v767, %v765
    %v802 = vpack.c.b16 %v770, %v768
    %v803 = vpack.c.b16 %v771, %v769
    %836 = vmatprep.subr.bf16.mxu0 %v773
    %837 = vmatpush1.bf16.msra.mxu0 %v772
    %838 = vmatprep.subr.bf16.mxu0 %v775
    %839 = vmatpush1.bf16.msra.mxu0 %v774
    %840 = vmatprep.subr.bf16.mxu0 %v777
    %841 = vmatpush1.bf16.msra.mxu0 %v776
    %842 = vmatprep.subr.bf16.mxu0 %v779
    %843 = vmatpush1.bf16.msra.mxu0 %v778
    %844 = vmatprep.subr.bf16.mxu0 %v781
    %845 = vmatpush1.bf16.msra.mxu0 %v780
    %846 = vmatprep.subr.bf16.mxu0 %v783
    %847 = vmatpush1.bf16.msra.mxu0 %v782
    %848 = vmatprep.subr.bf16.mxu0 %v785
    %849 = vmatpush1.bf16.msra.mxu0 %v784
    %850 = vmatprep.subr.bf16.mxu0 %v787
    %851 = vmatpush1.bf16.msra.mxu0 %v786
    %852 = vmatprep.subr.bf16.mxu0 %v789
    %853 = vmatpush1.bf16.msra.mxu0 %v788
    %854 = vmatprep.subr.bf16.mxu0 %v791
    %855 = vmatpush1.bf16.msra.mxu0 %v790
    %856 = vmatprep.subr.bf16.mxu0 %v793
    %857 = vmatpush1.bf16.msra.mxu0 %v792
    %858 = vmatprep.subr.bf16.mxu0 %v795
    %859 = vmatpush1.bf16.msra.mxu0 %v794
    %860 = vmatprep.subr.bf16.mxu0 %v797
    %861 = vmatpush1.bf16.msra.mxu0 %v796
    %862 = vmatprep.subr.bf16.mxu0 %v799
    %863 = vmatpush1.bf16.msra.mxu0 %v798
    %864 = vmatprep.subr.bf16.mxu0 %v801
    %865 = vmatpush1.bf16.msra.mxu0 %v800
    %866 = vmatprep.subr.bf16.mxu0 %v803
    %867 = vmatpush1.bf16.msra.mxu0 %v802
    %868 = vmatprep.mubr.bf16.mxu0 %v675
    %869 = vmatmul.mubr.bf16.gmra.mrb[0].mxu0 %v674
    %v870 = vpop.f32.mrb[0].mxu0
    %v871 = vadd.f32 0.0, %v870
    %v872 = vpop.f32.mrb[0].mxu0
    %v873 = vadd.f32 0.0, %v872
    %v874 = vpop.f32.mrb[0].mxu0
    %v875 = vadd.f32 0.0, %v874
    %v876 = vpop.f32.mrb[0].mxu0
    %v877 = vadd.f32 0.0, %v876
    %878 = vdwg.mxu0
    %v879 = vadd.f32 %v557, %v871
    %v880 = vadd.f32 %v559, %v873
    %v881 = vadd.f32 %v561, %v875
    %v882 = vadd.f32 %v563, %v877
    %v884 = vlaneseq
    %v885 = vshrl.u32 %v884, 7
    %v886 = vsub.s32 0, %v885
    %v887 = vrot.slane %v333, %v886
    %v888 = vlaneseq
    %v889 = vshrl.u32 %v888, 7
    %v890 = vsub.s32 1, %v889
    %v891 = vrot.slane %v333, %v890
    %v894 = vadd.f32 %v879, %v887
    %v895 = vadd.f32 %v880, %v891
    %v896 = vadd.f32 %v881, %v887
    %v897 = vadd.f32 %v882, %v891
    %v898 = vadd.f32 %v894, %v895
    %899 = vadd.xlane.f32.xlu0 %v898
    %v900 = vpop.xlane.xlu0 %899
    %v901 = vadd.f32 %v896, %v897
    %902 = vadd.xlane.f32.xlu0 %v901
    %v903 = vpop.xlane.xlu0 %902
    %v904 = vmul.f32 %v900, %v571
    %v905 = vmul.f32 %v903, %v571
    %v906 = vsub.f32 %v894, %v904
    %v907 = vsub.f32 %v895, %v904
    %v908 = vsub.f32 %v896, %v905
    %v909 = vsub.f32 %v897, %v905
    %v910 = vmul.f32 %v906, %v906
    %v911 = vmul.f32 %v907, %v907
    %v912 = vmul.f32 %v908, %v908
    %v913 = vmul.f32 %v909, %v909
    %v914 = vadd.f32 %v910, %v911
    %915 = vadd.xlane.f32.xlu0 %v914
    %v916 = vpop.xlane.xlu0 %915
    %v917 = vadd.f32 %v912, %v913
    %918 = vadd.xlane.f32.xlu0 %v917
    %v919 = vpop.xlane.xlu0 %918
    %v920 = vmul.f32 %v916, %v571
    %v921 = vmul.f32 %v919, %v571
    %v922 = vadd.f32 %v920, 1e-05
    %v923 = vadd.f32 %v921, 1e-05
    %v924 = vrsqrt.pop %v922
    %v925 = vrsqrt.pop %v923
    %v926 = vmul.f32 %v906, %v924
    %v927 = vmul.f32 %v907, %v924
    %v928 = vmul.f32 %v908, %v925
    %v929 = vmul.f32 %v909, %v925
    %v930 = vpack.c.bf16 %v928, %v926
    %v931 = vpack.c.bf16 %v929, %v927
    %v933 = vlaneseq
    %v934 = vshrl.u32 %v933, 7
    %v935 = vsub.s32 0, %v934
    %v936 = vrot.slane %v334, %v935
    %v937 = vlaneseq
    %v938 = vshrl.u32 %v937, 7
    %v939 = vsub.s32 1, %v938
    %v940 = vrot.slane %v334, %v939
    %v943 = vpack.c.bf16 %v936, %v936
    %v944 = vpack.c.bf16 %v940, %v940
    %v946 = vpack.i.b16 %v943, %v943
    %v948 = vlaneseq
    %v949 = vshrl.u32 %v948, 7
    %v950 = vsub.s32 0, %v949
    %v951 = vrot.slane %v946, %v950
    %v953 = vpack.i.b16 %v944, %v944
    %v955 = vlaneseq
    %v956 = vshrl.u32 %v955, 7
    %v957 = vsub.s32 0, %v956
    %v958 = vrot.slane %v953, %v957
    %v959 = vmul.bf16 %v930, %v951
    %v960 = vmul.bf16 %v931, %v958
    %v962 = vlaneseq
    %v963 = vshrl.u32 %v962, 7
    %v964 = vsub.s32 0, %v963
    %v965 = vrot.slane %v335, %v964
    %v966 = vlaneseq
    %v967 = vshrl.u32 %v966, 7
    %v968 = vsub.s32 1, %v967
    %v969 = vrot.slane %v335, %v968
    %v972 = vpack.c.bf16 %v965, %v965
    %v973 = vpack.c.bf16 %v969, %v969
    %v975 = vpack.i.b16 %v972, %v972
    %v977 = vlaneseq
    %v978 = vshrl.u32 %v977, 7
    %v979 = vsub.s32 0, %v978
    %v980 = vrot.slane %v975, %v979
    %v982 = vpack.i.b16 %v973, %v973
    %v984 = vlaneseq
    %v985 = vshrl.u32 %v984, 7
    %v986 = vsub.s32 0, %v985
    %v987 = vrot.slane %v982, %v986
    %v988 = vadd.bf16 %v959, %v980
    %v989 = vadd.bf16 %v960, %v987
    %v990 = vmul.bf16 %v988, %v988
    %v991 = vmul.bf16 %v989, %v989
    %v992 = vmul.bf16 %v988, %v990
    %v993 = vmul.bf16 %v989, %v991
    %v994 = vmul.bf16 %v992, 1027030327
    %v995 = vmul.bf16 %v993, 1027030327
    %v996 = vadd.bf16 %v988, %v994
    %v997 = vadd.bf16 %v989, %v995
    %v998 = vmul.bf16 %v996, 1061961548
    %v999 = vmul.bf16 %v997, 1061961548
    %v1000 = vtanh.bf16.pop %v998
    %v1001 = vtanh.bf16.pop %v999
    %v1002 = vadd.bf16 %v1000, 1065369472
    %v1003 = vadd.bf16 %v1001, 1065369472
    %v1004 = vmul.bf16 %v1002, 1056980736
    %v1005 = vmul.bf16 %v1003, 1056980736
    %v1006 = vmul.bf16 %v988, %v1004
    %v1007 = vmul.bf16 %v989, %v1005
    %v1040 = vunpack.c.l.b16 %v336
    %v1041 = vunpack.c.h.b16 %v336
    %v1042 = vunpack.c.l.b16 %v337
    %v1043 = vunpack.c.h.b16 %v337
    %v1044 = vunpack.c.l.b16 %v338
    %v1045 = vunpack.c.h.b16 %v338
    %v1046 = vunpack.c.l.b16 %v339
    %v1047 = vunpack.c.h.b16 %v339
    %v1048 = vunpack.c.l.b16 %v340
    %v1049 = vunpack.c.h.b16 %v340
    %v1050 = vunpack.c.l.b16 %v341
    %v1051 = vunpack.c.h.b16 %v341
    %v1052 = vunpack.c.l.b16 %v342
    %v1053 = vunpack.c.h.b16 %v342
    %v1054 = vunpack.c.l.b16 %v343
    %v1055 = vunpack.c.h.b16 %v343
    %v1056 = vunpack.c.l.b16 %v344
    %v1057 = vunpack.c.h.b16 %v344
    %v1058 = vunpack.c.l.b16 %v345
    %v1059 = vunpack.c.h.b16 %v345
    %v1060 = vunpack.c.l.b16 %v346
    %v1061 = vunpack.c.h.b16 %v346
    %v1062 = vunpack.c.l.b16 %v347
    %v1063 = vunpack.c.h.b16 %v347
    %v1064 = vunpack.c.l.b16 %v348
    %v1065 = vunpack.c.h.b16 %v348
    %v1066 = vunpack.c.l.b16 %v349
    %v1067 = vunpack.c.h.b16 %v349
    %v1068 = vunpack.c.l.b16 %v350
    %v1069 = vunpack.c.h.b16 %v350
    %v1070 = vunpack.c.l.b16 %v351
    %v1071 = vunpack.c.h.b16 %v351
    %v1072 = vunpack.c.l.b16 %v352
    %v1073 = vunpack.c.h.b16 %v352
    %v1074 = vunpack.c.l.b16 %v353
    %v1075 = vunpack.c.h.b16 %v353
    %v1076 = vunpack.c.l.b16 %v354
    %v1077 = vunpack.c.h.b16 %v354
    %v1078 = vunpack.c.l.b16 %v355
    %v1079 = vunpack.c.h.b16 %v355
    %v1080 = vunpack.c.l.b16 %v356
    %v1081 = vunpack.c.h.b16 %v356
    %v1082 = vunpack.c.l.b16 %v357
    %v1083 = vunpack.c.h.b16 %v357
    %v1084 = vunpack.c.l.b16 %v358
    %v1085 = vunpack.c.h.b16 %v358
    %v1086 = vunpack.c.l.b16 %v359
    %v1087 = vunpack.c.h.b16 %v359
    %v1088 = vunpack.c.l.b16 %v360
    %v1089 = vunpack.c.h.b16 %v360
    %v1090 = vunpack.c.l.b16 %v361
    %v1091 = vunpack.c.h.b16 %v361
    %v1092 = vunpack.c.l.b16 %v362
    %v1093 = vunpack.c.h.b16 %v362
    %v1094 = vunpack.c.l.b16 %v363
    %v1095 = vunpack.c.h.b16 %v363
    %v1096 = vunpack.c.l.b16 %v364
    %v1097 = vunpack.c.h.b16 %v364
    %v1098 = vunpack.c.l.b16 %v365
    %v1099 = vunpack.c.h.b16 %v365
    %v1100 = vunpack.c.l.b16 %v366
    %v1101 = vunpack.c.h.b16 %v366
    %v1102 = vunpack.c.l.b16 %v367
    %v1103 = vunpack.c.h.b16 %v367
    %v1104 = vpack.c.b16 %v1042, %v1040
    %v1105 = vpack.c.b16 %v1043, %v1041
    %v1106 = vpack.c.b16 %v1046, %v1044
    %v1107 = vpack.c.b16 %v1047, %v1045
    %v1108 = vpack.c.b16 %v1050, %v1048
    %v1109 = vpack.c.b16 %v1051, %v1049
    %v1110 = vpack.c.b16 %v1054, %v1052
    %v1111 = vpack.c.b16 %v1055, %v1053
    %v1112 = vpack.c.b16 %v1058, %v1056
    %v1113 = vpack.c.b16 %v1059, %v1057
    %v1114 = vpack.c.b16 %v1062, %v1060
    %v1115 = vpack.c.b16 %v1063, %v1061
    %v1116 = vpack.c.b16 %v1066, %v1064
    %v1117 = vpack.c.b16 %v1067, %v1065
    %v1118 = vpack.c.b16 %v1070, %v1068
    %v1119 = vpack.c.b16 %v1071, %v1069
    %v1120 = vpack.c.b16 %v1074, %v1072
    %v1121 = vpack.c.b16 %v1075, %v1073
    %v1122 = vpack.c.b16 %v1078, %v1076
    %v1123 = vpack.c.b16 %v1079, %v1077
    %v1124 = vpack.c.b16 %v1082, %v1080
    %v1125 = vpack.c.b16 %v1083, %v1081
    %v1126 = vpack.c.b16 %v1086, %v1084
    %v1127 = vpack.c.b16 %v1087, %v1085
    %v1128 = vpack.c.b16 %v1090, %v1088
    %v1129 = vpack.c.b16 %v1091, %v1089
    %v1130 = vpack.c.b16 %v1094, %v1092
    %v1131 = vpack.c.b16 %v1095, %v1093
    %v1132 = vpack.c.b16 %v1098, %v1096
    %v1133 = vpack.c.b16 %v1099, %v1097
    %v1134 = vpack.c.b16 %v1102, %v1100
    %v1135 = vpack.c.b16 %v1103, %v1101
    %1168 = vmatprep.subr.bf16.mxu0 %v1105
    %1169 = vmatpush1.bf16.msra.mxu0 %v1104
    %1170 = vmatprep.subr.bf16.mxu0 %v1107
    %1171 = vmatpush1.bf16.msra.mxu0 %v1106
    %1172 = vmatprep.subr.bf16.mxu0 %v1109
    %1173 = vmatpush1.bf16.msra.mxu0 %v1108
    %1174 = vmatprep.subr.bf16.mxu0 %v1111
    %1175 = vmatpush1.bf16.msra.mxu0 %v1110
    %1176 = vmatprep.subr.bf16.mxu0 %v1113
    %1177 = vmatpush1.bf16.msra.mxu0 %v1112
    %1178 = vmatprep.subr.bf16.mxu0 %v1115
    %1179 = vmatpush1.bf16.msra.mxu0 %v1114
    %1180 = vmatprep.subr.bf16.mxu0 %v1117
    %1181 = vmatpush1.bf16.msra.mxu0 %v1116
    %1182 = vmatprep.subr.bf16.mxu0 %v1119
    %1183 = vmatpush1.bf16.msra.mxu0 %v1118
    %1184 = vmatprep.subr.bf16.mxu0 %v1121
    %1185 = vmatpush1.bf16.msra.mxu0 %v1120
    %1186 = vmatprep.subr.bf16.mxu0 %v1123
    %1187 = vmatpush1.bf16.msra.mxu0 %v1122
    %1188 = vmatprep.subr.bf16.mxu0 %v1125
    %1189 = vmatpush1.bf16.msra.mxu0 %v1124
    %1190 = vmatprep.subr.bf16.mxu0 %v1127
    %1191 = vmatpush1.bf16.msra.mxu0 %v1126
    %1192 = vmatprep.subr.bf16.mxu0 %v1129
    %1193 = vmatpush1.bf16.msra.mxu0 %v1128
    %1194 = vmatprep.subr.bf16.mxu0 %v1131
    %1195 = vmatpush1.bf16.msra.mxu0 %v1130
    %1196 = vmatprep.subr.bf16.mxu0 %v1133
    %1197 = vmatpush1.bf16.msra.mxu0 %v1132
    %1198 = vmatprep.subr.bf16.mxu0 %v1135
    %1199 = vmatpush1.bf16.msra.mxu0 %v1134
    %1200 = vmatprep.mubr.bf16.mxu0 %v1007
    %1201 = vmatmul.mubr.bf16.gmra.mrb[0].mxu0 %v1006
    %v1202 = vpop.f32.mrb[0].mxu0
    %v1203 = vadd.f32 0.0, %v1202
    %v1204 = vpop.f32.mrb[0].mxu0
    %v1205 = vadd.f32 0.0, %v1204
    %v1206 = vpop.f32.mrb[0].mxu0
    %v1207 = vadd.f32 0.0, %v1206
    %v1208 = vpop.f32.mrb[0].mxu0
    %v1209 = vadd.f32 0.0, %v1208
    %1210 = vdwg.mxu0
    %v1211 = vadd.f32 %v894, %v1203
    %v1212 = vadd.f32 %v895, %v1205
    %v1213 = vadd.f32 %v896, %v1207
    %v1214 = vadd.f32 %v897, %v1209
    %v1216 = vlaneseq
    %v1217 = vshrl.u32 %v1216, 7
    %v1218 = vsub.s32 0, %v1217
    %v1219 = vrot.slane %v368, %v1218
    %v1220 = vlaneseq
    %v1221 = vshrl.u32 %v1220, 7
    %v1222 = vsub.s32 1, %v1221
    %v1223 = vrot.slane %v368, %v1222
    %v1226 = vadd.f32 %v1211, %v1219
    %v1227 = vadd.f32 %v1212, %v1223
    %v1228 = vadd.f32 %v1213, %v1219
    %v1229 = vadd.f32 %v1214, %v1223
    %v1230 = vadd.f32 %v1226, %v1227
    %1231 = vadd.xlane.f32.xlu0 %v1230
    %v1232 = vpop.xlane.xlu0 %1231
    %v1233 = vadd.f32 %v1228, %v1229
    %1234 = vadd.xlane.f32.xlu0 %v1233
    %v1235 = vpop.xlane.xlu0 %1234
    %v1236 = vmul.f32 %v1232, %v571
    %v1237 = vmul.f32 %v1235, %v571
    %v1238 = vsub.f32 %v1226, %v1236
    %v1239 = vsub.f32 %v1227, %v1236
    %v1240 = vsub.f32 %v1228, %v1237
    %v1241 = vsub.f32 %v1229, %v1237
    %v1242 = vmul.f32 %v1238, %v1238
    %v1243 = vmul.f32 %v1239, %v1239
    %v1244 = vmul.f32 %v1240, %v1240
    %v1245 = vmul.f32 %v1241, %v1241
    %v1246 = vadd.f32 %v1242, %v1243
    %1247 = vadd.xlane.f32.xlu0 %v1246
    %v1248 = vpop.xlane.xlu0 %1247
    %v1249 = vadd.f32 %v1244, %v1245
    %1250 = vadd.xlane.f32.xlu0 %v1249
    %v1251 = vpop.xlane.xlu0 %1250
    %v1252 = vmul.f32 %v1248, %v571
    %v1253 = vmul.f32 %v1251, %v571
    %v1254 = vadd.f32 %v1252, 1e-05
    %v1255 = vadd.f32 %v1253, 1e-05
    %v1256 = vrsqrt.pop %v1254
    %v1257 = vrsqrt.pop %v1255
    %v1258 = vmul.f32 %v1238, %v1256
    %v1259 = vmul.f32 %v1239, %v1256
    %v1260 = vmul.f32 %v1240, %v1257
    %v1261 = vmul.f32 %v1241, %v1257
    %v1262 = vpack.c.bf16 %v1260, %v1258
    %v1263 = vpack.c.bf16 %v1261, %v1259
    %v1265 = vlaneseq
    %v1266 = vshrl.u32 %v1265, 7
    %v1267 = vsub.s32 0, %v1266
    %v1268 = vrot.slane %v369, %v1267
    %v1269 = vlaneseq
    %v1270 = vshrl.u32 %v1269, 7
    %v1271 = vsub.s32 1, %v1270
    %v1272 = vrot.slane %v369, %v1271
    %v1275 = vpack.c.bf16 %v1268, %v1268
    %v1276 = vpack.c.bf16 %v1272, %v1272
    %v1278 = vpack.i.b16 %v1275, %v1275
    %v1280 = vlaneseq
    %v1281 = vshrl.u32 %v1280, 7
    %v1282 = vsub.s32 0, %v1281
    %v1283 = vrot.slane %v1278, %v1282
    %v1285 = vpack.i.b16 %v1276, %v1276
    %v1287 = vlaneseq
    %v1288 = vshrl.u32 %v1287, 7
    %v1289 = vsub.s32 0, %v1288
    %v1290 = vrot.slane %v1285, %v1289
    %v1291 = vmul.bf16 %v1262, %v1283
    %v1292 = vmul.bf16 %v1263, %v1290
    %v1294 = vlaneseq
    %v1295 = vshrl.u32 %v1294, 7
    %v1296 = vsub.s32 0, %v1295
    %v1297 = vrot.slane %v370, %v1296
    %v1298 = vlaneseq
    %v1299 = vshrl.u32 %v1298, 7
    %v1300 = vsub.s32 1, %v1299
    %v1301 = vrot.slane %v370, %v1300
    %v1304 = vpack.c.bf16 %v1297, %v1297
    %v1305 = vpack.c.bf16 %v1301, %v1301
    %v1307 = vpack.i.b16 %v1304, %v1304
    %v1309 = vlaneseq
    %v1310 = vshrl.u32 %v1309, 7
    %v1311 = vsub.s32 0, %v1310
    %v1312 = vrot.slane %v1307, %v1311
    %v1314 = vpack.i.b16 %v1305, %v1305
    %v1316 = vlaneseq
    %v1317 = vshrl.u32 %v1316, 7
    %v1318 = vsub.s32 0, %v1317
    %v1319 = vrot.slane %v1314, %v1318
    %v1320 = vadd.bf16 %v1291, %v1312
    %v1321 = vadd.bf16 %v1292, %v1319
    %v1322 = vmul.bf16 %v1320, %v1320
    %v1323 = vmul.bf16 %v1321, %v1321
    %v1324 = vmul.bf16 %v1320, %v1322
    %v1325 = vmul.bf16 %v1321, %v1323
    %v1326 = vmul.bf16 %v1324, 1027030327
    %v1327 = vmul.bf16 %v1325, 1027030327
    %v1328 = vadd.bf16 %v1320, %v1326
    %v1329 = vadd.bf16 %v1321, %v1327
    %v1330 = vmul.bf16 %v1328, 1061961548
    %v1331 = vmul.bf16 %v1329, 1061961548
    %v1332 = vtanh.bf16.pop %v1330
    %v1333 = vtanh.bf16.pop %v1331
    %v1334 = vadd.bf16 %v1332, 1065369472
    %v1335 = vadd.bf16 %v1333, 1065369472
    %v1336 = vmul.bf16 %v1334, 1056980736
    %v1337 = vmul.bf16 %v1335, 1056980736
    %v1338 = vmul.bf16 %v1320, %v1336
    %v1339 = vmul.bf16 %v1321, %v1337
    %v1341 = vlaneseq
    %v1342 = vshrl.u32 %v1341, 7
    %v1343 = vsub.s32 0, %v1342
    %v1344 = vrot.slane %v403, %v1343
    %v1378 = vunpack.c.l.b16 %v371
    %v1379 = vunpack.c.l.b16 %v372
    %v1380 = vunpack.c.l.b16 %v373
    %v1381 = vunpack.c.l.b16 %v374
    %v1382 = vunpack.c.l.b16 %v375
    %v1383 = vunpack.c.l.b16 %v376
    %v1384 = vunpack.c.l.b16 %v377
    %v1385 = vunpack.c.l.b16 %v378
    %v1386 = vunpack.c.l.b16 %v379
    %v1387 = vunpack.c.l.b16 %v380
    %v1388 = vunpack.c.l.b16 %v381
    %v1389 = vunpack.c.l.b16 %v382
    %v1390 = vunpack.c.l.b16 %v383
    %v1391 = vunpack.c.l.b16 %v384
    %v1392 = vunpack.c.l.b16 %v385
    %v1393 = vunpack.c.l.b16 %v386
    %v1394 = vunpack.c.l.b16 %v387
    %v1395 = vunpack.c.l.b16 %v388
    %v1396 = vunpack.c.l.b16 %v389
    %v1397 = vunpack.c.l.b16 %v390
    %v1398 = vunpack.c.l.b16 %v391
    %v1399 = vunpack.c.l.b16 %v392
    %v1400 = vunpack.c.l.b16 %v393
    %v1401 = vunpack.c.l.b16 %v394
    %v1402 = vunpack.c.l.b16 %v395
    %v1403 = vunpack.c.l.b16 %v396
    %v1404 = vunpack.c.l.b16 %v397
    %v1405 = vunpack.c.l.b16 %v398
    %v1406 = vunpack.c.l.b16 %v399
    %v1407 = vunpack.c.l.b16 %v400
    %v1408 = vunpack.c.l.b16 %v401
    %v1409 = vunpack.c.l.b16 %v402
    %v1410 = vpack.c.b16 %v1379, %v1378
    %v1411 = vpack.c.b16 %v1381, %v1380
    %v1412 = vpack.c.b16 %v1383, %v1382
    %v1413 = vpack.c.b16 %v1385, %v1384
    %v1414 = vpack.c.b16 %v1387, %v1386
    %v1415 = vpack.c.b16 %v1389, %v1388
    %v1416 = vpack.c.b16 %v1391, %v1390
    %v1417 = vpack.c.b16 %v1393, %v1392
    %v1418 = vpack.c.b16 %v1395, %v1394
    %v1419 = vpack.c.b16 %v1397, %v1396
    %v1420 = vpack.c.b16 %v1399, %v1398
    %v1421 = vpack.c.b16 %v1401, %v1400
    %v1422 = vpack.c.b16 %v1403, %v1402
    %v1423 = vpack.c.b16 %v1405, %v1404
    %v1424 = vpack.c.b16 %v1407, %v1406
    %v1425 = vpack.c.b16 %v1409, %v1408
    %1442 = vmatprep.subr.bf16.mxu0 0
    %1443 = vmatpush1.bf16.msra.mxu0 %v1410
    %1444 = vmatprep.subr.bf16.mxu0 0
    %1445 = vmatpush1.bf16.msra.mxu0 %v1411
    %1446 = vmatprep.subr.bf16.mxu0 0
    %1447 = vmatpush1.bf16.msra.mxu0 %v1412
    %1448 = vmatprep.subr.bf16.mxu0 0
    %1449 = vmatpush1.bf16.msra.mxu0 %v1413
    %1450 = vmatprep.subr.bf16.mxu0 0
    %1451 = vmatpush1.bf16.msra.mxu0 %v1414
    %1452 = vmatprep.subr.bf16.mxu0 0
    %1453 = vmatpush1.bf16.msra.mxu0 %v1415
    %1454 = vmatprep.subr.bf16.mxu0 0
    %1455 = vmatpush1.bf16.msra.mxu0 %v1416
    %1456 = vmatprep.subr.bf16.mxu0 0
    %1457 = vmatpush1.bf16.msra.mxu0 %v1417
    %1458 = vmatprep.subr.bf16.mxu0 0
    %1459 = vmatpush1.bf16.msra.mxu0 %v1418
    %1460 = vmatprep.subr.bf16.mxu0 0
    %1461 = vmatpush1.bf16.msra.mxu0 %v1419
    %1462 = vmatprep.subr.bf16.mxu0 0
    %1463 = vmatpush1.bf16.msra.mxu0 %v1420
    %1464 = vmatprep.subr.bf16.mxu0 0
    %1465 = vmatpush1.bf16.msra.mxu0 %v1421
    %1466 = vmatprep.subr.bf16.mxu0 0
    %1467 = vmatpush1.bf16.msra.mxu0 %v1422
    %1468 = vmatprep.subr.bf16.mxu0 0
    %1469 = vmatpush1.bf16.msra.mxu0 %v1423
    %1470 = vmatprep.subr.bf16.mxu0 0
    %1471 = vmatpush1.bf16.msra.mxu0 %v1424
    %1472 = vmatprep.subr.bf16.mxu0 0
    %1473 = vmatpush1.bf16.msra.mxu0 %v1425
    %1474 = vmatprep.mubr.bf16.mxu0 %v1339
    %1475 = vmatmul.mubr.bf16.gmra.mrb[0].mxu0 %v1338
    %v1476 = vpop.f32.mrb[0].mxu0
    %v1477 = vadd.f32 %v1344, %v1476
    %v1478 = vpop.f32.mrb[0].mxu0
    %v1479 = vpop.f32.mrb[0].mxu0
    %v1480 = vadd.f32 %v1344, %v1479
    %v1481 = vpop.f32.mrb[0].mxu0
    %1482 = vdwg.mxu0
    %1483 = vadd.xlane.f32.xlu0 %v1477
    %v1484 = vpop.xlane.xlu0 %1483
    %1485 = vadd.xlane.f32.xlu0 %v1480
    %v1486 = vpop.xlane.xlu0 %1485
    %v1487 = vrcp.pop 128.0
    %v1488 = vmul.f32 %v1484, %v1487
    %v1489 = vmul.f32 %v1486, %v1487
    %v1490 = vsub.f32 %v1477, %v1488
    %v1491 = vsub.f32 %v1480, %v1489
    %v1492 = vmul.f32 %v1490, %v1490
    %v1493 = vmul.f32 %v1491, %v1491
    %1494 = vadd.xlane.f32.xlu0 %v1492
    %v1495 = vpop.xlane.xlu0 %1494
    %1496 = vadd.xlane.f32.xlu0 %v1493
    %v1497 = vpop.xlane.xlu0 %1496
    %v1498 = vmul.f32 %v1495, %v1487
    %v1499 = vmul.f32 %v1497, %v1487
    %v1500 = vadd.f32 %v1498, 1e-05
    %v1501 = vadd.f32 %v1499, 1e-05
    %v1502 = vrsqrt.pop %v1500
    %v1503 = vrsqrt.pop %v1501
    %v1504 = vmul.f32 %v1490, %v1502
    %v1505 = vmul.f32 %v1491, %v1503
    %v1506 = vpack.c.bf16 %v1505, %v1504
    %v1507 = vpack.c.bf16 %v404, %v404
    %v1509 = vpack.i.b16 %v1507, %v1507
    %v1511 = vlaneseq
    %v1512 = vshrl.u32 %v1511, 7
    %v1513 = vsub.s32 0, %v1512
    %v1514 = vrot.slane %v1509, %v1513
    %v1515 = vmul.bf16 %v1506, %v1514
    %v1516 = vpack.c.bf16 %v405, %v405
    %v1518 = vpack.i.b16 %v1516, %v1516
    %v1520 = vlaneseq
    %v1521 = vshrl.u32 %v1520, 7
    %v1522 = vsub.s32 0, %v1521
    %v1523 = vrot.slane %v1518, %v1522
    %v1524 = vadd.bf16 %v1515, %v1523
    %v1525 = vmul.bf16 %v1524, %v1524
    %v1526 = vmul.bf16 %v1524, %v1525
    %v1527 = vmul.bf16 %v1526, 1027030327
    %v1528 = vadd.bf16 %v1524, %v1527
    %v1529 = vmul.bf16 %v1528, 1061961548
    %v1530 = vtanh.bf16.pop %v1529
    %v1531 = vadd.bf16 %v1530, 1065369472
    %v1532 = vmul.bf16 %v1531, 1056980736
    %v1533 = vmul.bf16 %v1524, %v1532
    %v1550 = vunpack.c.l.b16 %v406
    %v1551 = vunpack.c.l.b16 %v407
    %v1552 = vunpack.c.l.b16 %v408
    %v1553 = vunpack.c.l.b16 %v409
    %v1554 = vunpack.c.l.b16 %v410
    %v1555 = vunpack.c.l.b16 %v411
    %v1556 = vunpack.c.l.b16 %v412
    %v1557 = vunpack.c.l.b16 %v413
    %v1558 = vunpack.c.l.b16 %v414
    %v1559 = vunpack.c.l.b16 %v415
    %v1560 = vunpack.c.l.b16 %v416
    %v1561 = vunpack.c.l.b16 %v417
    %v1562 = vunpack.c.l.b16 %v418
    %v1563 = vunpack.c.l.b16 %v419
    %v1564 = vunpack.c.l.b16 %v420
    %v1565 = vunpack.c.l.b16 %v421
    %v1566 = vpack.c.b16 %v1551, %v1550
    %v1567 = vpack.c.b16 %v1553, %v1552
    %v1568 = vpack.c.b16 %v1555, %v1554
    %v1569 = vpack.c.b16 %v1557, %v1556
    %v1570 = vpack.c.b16 %v1559, %v1558
    %v1571 = vpack.c.b16 %v1561, %v1560
    %v1572 = vpack.c.b16 %v1563, %v1562
    %v1573 = vpack.c.b16 %v1565, %v1564
    %1582 = vmatprep.subr.bf16.mxu0 0
    %1583 = vmatpush1.bf16.msra.mxu0 %v1566
    %1584 = vmatprep.subr.bf16.mxu0 0
    %1585 = vmatpush1.bf16.msra.mxu0 %v1567
    %1586 = vmatprep.subr.bf16.mxu0 0
    %1587 = vmatpush1.bf16.msra.mxu0 %v1568
    %1588 = vmatprep.subr.bf16.mxu0 0
    %1589 = vmatpush1.bf16.msra.mxu0 %v1569
    %1590 = vmatprep.subr.bf16.mxu0 0
    %1591 = vmatpush1.bf16.msra.mxu0 %v1570
    %1592 = vmatprep.subr.bf16.mxu0 0
    %1593 = vmatpush1.bf16.msra.mxu0 %v1571
    %1594 = vmatprep.subr.bf16.mxu0 0
    %1595 = vmatpush1.bf16.msra.mxu0 %v1572
    %1596 = vmatprep.subr.bf16.mxu0 0
    %1597 = vmatpush1.bf16.msra.mxu0 %v1573
    %1598 = vmatprep.subr.bf16.mxu0 0
    %1599 = vmatpush1.bf16.msra.mxu0 0
    %1600 = vmatprep.subr.bf16.mxu0 0
    %1601 = vmatpush1.bf16.msra.mxu0 0
    %1602 = vmatprep.subr.bf16.mxu0 0
    %1603 = vmatpush1.bf16.msra.mxu0 0
    %1604 = vmatprep.subr.bf16.mxu0 0
    %1605 = vmatpush1.bf16.msra.mxu0 0
    %1606 = vmatprep.subr.bf16.mxu0 0
    %1607 = vmatpush1.bf16.msra.mxu0 0
    %1608 = vmatprep.subr.bf16.mxu0 0
    %1609 = vmatpush1.bf16.msra.mxu0 0
    %1610 = vmatprep.subr.bf16.mxu0 0
    %1611 = vmatpush1.bf16.msra.mxu0 0
    %1612 = vmatprep.subr.bf16.mxu0 0
    %1613 = vmatpush1.bf16.msra.mxu0 0
    %1614 = vmatprep.mubr.bf16.mxu0 0
    %1615 = vmatmul.mubr.bf16.gmra.mrb[0].mxu0 %v1533
    %v1616 = vpop.f32.mrb[0].mxu0
    %v1617 = vadd.f32 0.0, %v1616
    %v1618 = vpop.f32.mrb[0].mxu0
    %v1619 = vpop.f32.mrb[0].mxu0
    %v1620 = vadd.f32 0.0, %v1619
    %v1621 = vpop.f32.mrb[0].mxu0
    %1622 = vdwg.mxu0
    %v1623 = vadd.f32 %v1477, %v1617
    %v1624 = vadd.f32 %v1480, %v1620
    %v1626 = vlaneseq
    %v1627 = vshrl.u32 %v1626, 7
    %v1628 = vsub.s32 0, %v1627
    %v1629 = vrot.slane %v422, %v1628
    %v1631 = vadd.f32 %v1623, %v1629
    %v1632 = vadd.f32 %v1624, %v1629
    %1633 = vadd.xlane.f32.xlu0 %v1631
    %v1634 = vpop.xlane.xlu0 %1633
    %1635 = vadd.xlane.f32.xlu0 %v1632
    %v1636 = vpop.xlane.xlu0 %1635
    %v1637 = vmul.f32 %v1634, %v1487
    %v1638 = vmul.f32 %v1636, %v1487
    %v1639 = vsub.f32 %v1631, %v1637
    %v1640 = vsub.f32 %v1632, %v1638
    %v1641 = vmul.f32 %v1639, %v1639
    %v1642 = vmul.f32 %v1640, %v1640
    %1643 = vadd.xlane.f32.xlu0 %v1641
    %v1644 = vpop.xlane.xlu0 %1643
    %1645 = vadd.xlane.f32.xlu0 %v1642
    %v1646 = vpop.xlane.xlu0 %1645
    %v1647 = vmul.f32 %v1644, %v1487
    %v1648 = vmul.f32 %v1646, %v1487
    %v1649 = vadd.f32 %v1647, 1e-05
    %v1650 = vadd.f32 %v1648, 1e-05
    %v1651 = vrsqrt.pop %v1649
    %v1652 = vrsqrt.pop %v1650
    %v1653 = vmul.f32 %v1639, %v1651
    %v1654 = vmul.f32 %v1640, %v1652
    %v1656 = vlaneseq
    %v1657 = vshrl.u32 %v1656, 7
    %v1658 = vsub.s32 0, %v1657
    %v1659 = vrot.slane %v423, %v1658
    %v1661 = vmul.f32 %v1653, %v1659
    %v1662 = vmul.f32 %v1654, %v1659
    %v1664 = vlaneseq
    %v1665 = vshrl.u32 %v1664, 7
    %v1666 = vsub.s32 0, %v1665
    %v1667 = vrot.slane %v424, %v1666
    %v1669 = vadd.f32 %v1661, %v1667
    %v1670 = vadd.f32 %v1662, %v1667
    %1671 = vst [vmem:[#allocation29] sm:$0xff] %v1669
    %1672 = vst [vmem:[#allocation29 + $0x8] sm:$0xff] %v1670
    // Predicated region
    $region154: #{tpu_custom_call.1} parent=1 // pred_check
      _
    $region155: #{tpu_custom_call.1} parent=1 // pred_check_branch
      %1674 = sbr.rel (0) target = $region157
    $region156: #{tpu_custom_call.1} parent=1 // pred_region
      %s1676 = ssub.s32 256, 256
      %1677 = vsyncadd [#allocation4], %s1676
      %s1678 = sshll.u32 [#allocation29], 4
      %s1679 = int_to_ptr.vmem [resolvable:$true] %s1678
      %1684 = dma.vmem_to_hbm [thread:$0]  %s1679, 256, %s21, [#allocation4], 128, 128, 8
    $region157: #{tpu_custom_call.1} parent=1 // pred_fallthru
      _
    // Predicated region
    $region158: #{tpu_custom_call.1} parent=1 // pred_check
      _
    $region159: #{tpu_custom_call.1} parent=1 // pred_check_branch
      %1686 = sbr.rel (0) target = $region161
    $region160: #{tpu_custom_call.1} parent=1 // pred_region
      %1687 = dma.done [#allocation4], 256
    $region161: #{tpu_custom_call.1} parent=1 // pred_fallthru
      _
    %1688 = vsyncpa [#allocation3], 1
    %1689 = vsyncpa [#allocation6], 1
    %1690 = vsyncpa [#allocation9], 1
    %1691 = vsyncpa [#allocation12], 1
    %1692 = vsyncpa [#allocation15], 1
    %1693 = vsyncpa [#allocation18], 1
    %1694 = vsyncpa [#allocation21], 1
    %1695 = vsyncpa [#allocation24], 1
    %1696 = vsyncpa [#allocation27], 1
    %1697 = vsyncpa [#allocation4], 1

</llo_original>
